<compile_context>
chip_gen: v6e
topology: v6e:2x2x1
jax: 0.10.0
libtpu: 0.0.40
codegen_flags: <defaults>
</compile_context>

<pallas_src>
import functools

import jax
import jax.numpy as jnp
from jax.experimental import pallas as pl
from jax.experimental.pallas import tpu as pltpu

LN_EPS = 1e-5
N_FLOWS = 4          # 2 flow_layers x 2 masked-coupling flows each
N_SCALE = 2          # CondScaling has two scale MLPs
LANE = 128           # TPU lane width; per-flow obs-projection columns padded to it
OUT_W = 128          # fused, lane-dense output slab width

# Row map of the packed f32 parameter table P (width = max(SH, 128)).
ROWS_PER_FLOW = 8
R_CB1, R_G1, R_BT1, R_CB2, R_G2, R_BT2, R_CB3 = 0, 1, 2, 3, 4, 5, 6
_SB = N_FLOWS * ROWS_PER_FLOW                       # = 32: start of CondScaling rows
R_SB1A, R_SB1B, R_SB2A, R_SB2B, R_W3A, R_W3B, R_SB3 = (_SB + j for j in range(7))
P_ROWS = _SB + 8                                    # 40 rows (last row is padding)


def _layernorm(x, gamma, beta):
    # Single-pass LayerNorm: sum(x) and sum(x*x) are independent cross-lane
    # reductions (back-to-back on the XLU).  var clamped >= 0 for safety.
    n = x.shape[-1]
    s1 = jnp.sum(x, axis=-1, keepdims=True)
    s2 = jnp.sum(x * x, axis=-1, keepdims=True)
    mu = s1 * (1.0 / n)
    var = jnp.maximum(s2 * (1.0 / n) - mu * mu, 0.0)
    return (x - mu) * jax.lax.rsqrt(var + LN_EPS) * gamma + beta


def _softplus(x):
    # Stable softplus (kernel-safe, no overflow).
    return jnp.maximum(x, 0.0) + jnp.log(1.0 + jnp.exp(-jnp.abs(x)))


def _forward_packed(obs, act_pad, wobs, wflow, wscale, p, *, act_dim):
    """Fused forward math shared by the Pallas kernel (weight args are Refs) and the
    pure-JAX packed reference (weight args are arrays).  Only static basic slicing
    is used on the weight arguments so both work.

    Returns (tanh(z) padded to (B, H), log_q (B, 1)), both f32.
    """
    f32, bf16 = jnp.float32, jnp.bfloat16
    H = wflow.shape[-1]
    SH = wscale.shape[-1]
    A = act_dim
    off_scale = N_FLOWS * LANE

    obs_b = obs.astype(bf16)
    z = act_pad.astype(f32)          # (B, H): act in lanes [0, A), exact zeros elsewhere

    # Hoisted obs-conditioned work: one (B,S)x(S, 4*128 + 2*SH) matmul feeds
    #  - the obs half of each coupling MLP's first layer (128-lane-aligned slices)
    #  - the first layer of both CondScaling MLPs.
    fused = jnp.dot(obs_b, wobs[...], preferred_element_type=f32)

    # --- 4 x MaskedCondAffineFlow (s = None => log_det contribution is 0) ---
    # b / (1-b) are baked into the packed weights (cW1a rows, cW3 cols, cb3), so the
    # serial chain is matmul -> LN -> ReLU -> matmul -> LN -> ReLU -> matmul -> z += t.
    # TODO(synk): dropout(p=0.1) in the coupling MLPs is modeled in eval mode (identity).
    for i in range(N_FLOWS):
        rw = i * 3 * H
        rp = i * ROWS_PER_FLOW
        h = (jnp.dot(z.astype(bf16), wflow[rw:rw + H, :], preferred_element_type=f32)
             + fused[:, i * LANE:i * LANE + H]
             + p[rp + R_CB1:rp + R_CB1 + 1, :H])
        h = jnp.maximum(_layernorm(h, p[rp + R_G1:rp + R_G1 + 1, :H],
                                   p[rp + R_BT1:rp + R_BT1 + 1, :H]), 0.0)
        h = (jnp.dot(h.astype(bf16), wflow[rw + H:rw + 2 * H, :],
                     preferred_element_type=f32)
             + p[rp + R_CB2:rp + R_CB2 + 1, :H])
        h = jnp.maximum(_layernorm(h, p[rp + R_G2:rp + R_G2 + 1, :H],
                                   p[rp + R_BT2:rp + R_BT2 + 1, :H]), 0.0)
        t = (jnp.dot(h.astype(bf16), wflow[rw + 2 * H:rw + 3 * H, :],
                     preferred_element_type=f32)
             + p[rp + R_CB3:rp + R_CB3 + 1, :H])
        z = z + t                    # == z + (1-b)*t ; padded lanes stay exactly 0

    # --- CondScaling: log_det = scale1(obs) - scale2(obs) ---
    h1a = jnp.maximum(fused[:, off_scale:off_scale + SH]
                      + p[R_SB1A:R_SB1A + 1, :SH], 0.0)
    h1b = jnp.maximum(fused[:, off_scale + SH:off_scale + 2 * SH]
                      + p[R_SB1B:R_SB1B + 1, :SH], 0.0)
    h2a = jnp.maximum(jnp.dot(h1a.astype(bf16), wscale[:SH, :],
                              preferred_element_type=f32)
                      + p[R_SB2A:R_SB2A + 1, :SH], 0.0)
    h2b = jnp.maximum(jnp.dot(h1b.astype(bf16), wscale[SH:2 * SH, :],
                              preferred_element_type=f32)
                      + p[R_SB2B:R_SB2B + 1, :SH], 0.0)
    # Final (SH -> 1) layers as VPU multiply + cross-lane reduce: no (B, 2*SH)
    # concat and no N=1 MXU matmul.
    s_diff = (jnp.sum(h2a * p[R_W3A:R_W3A + 1, :SH], axis=-1, keepdims=True)
              - jnp.sum(h2b * p[R_W3B:R_W3B + 1, :SH], axis=-1, keepdims=True)
              + p[R_SB3:R_SB3 + 1, 0:1])
    # TODO(synk): exact CondScaling log_det sign convention not given in the snippet;
    # the zero-initialized final layers make this contribution exactly 0 at init.
    log_q = -s_diff

    # --- Preprocessing: tanh squashing ---
    z_t = jnp.tanh(z)
    z_a = z[:, :A]
    # TODO(synk): exact Preprocessing eps/clipping not given; numerically stable
    # SAC-style log-det used: log(1 - tanh(z)^2) = 2*(log(2) - z - softplus(-2z)).
    log_det_pre = jnp.sum(2.0 * (jnp.log(2.0) - z_a - _softplus(-2.0 * z_a)),
                          axis=-1, keepdims=True)
    log_q = log_q - log_det_pre
    return z_t, log_q


def _flow_policy_kernel(obs_ref, act_ref, wobs_ref, wflow_ref, wscale_ref, p_ref,
                        out_ref, *, act_dim):
    z_t, log_q = _forward_packed(obs_ref[...], act_ref[...], wobs_ref, wflow_ref,
                                 wscale_ref, p_ref, act_dim=act_dim)
    pad = out_ref.shape[-1] - z_t.shape[-1] - 1
    # Single lane-dense (tb, 128) store: z in cols [0, H), log_q in col H.
    out_ref[...] = jnp.concatenate(
        [z_t, log_q, jnp.zeros((z_t.shape[0], pad), z_t.dtype)],
        axis=-1).astype(out_ref.dtype)


def _plan_batch(batch, max_batch_tile, num_cores):
    """Pick (batch_tile, n_tiles, padded_batch).

    - pads the batch to a multiple of 8 (sublane) so any B works,
    - uses a single big tile unless the batch exceeds max_batch_tile (per-grid-step
      overhead ~0.35us makes tiny tiles overhead-dominated),
    - num_cores > 1 (v7x) forces the grid to split so the second TensorCore is used.
    """
    rup = lambda x, m: ((x + m - 1) // m) * m
    b8 = rup(max(int(batch), 1), 8)
    tile_cap = max(8, rup(int(max_batch_tile), 8))
    n_tiles = max(int(num_cores), pl.cdiv(b8, tile_cap))
    tb = rup(pl.cdiv(b8, n_tiles), 8)
    n_tiles = pl.cdiv(b8, tb)
    return tb, n_tiles, tb * n_tiles


def flow_policy_forward(obs, act, params, *, max_batch_tile=512, num_cores=1):
    """Pallas-call wrapper.  Returns (z, log_q) with torch-matching shapes
    z: (B, action_sizes), log_q: (B,)."""
    B, A = act.shape
    S = obs.shape[1]
    wobs, wflow, wscale, pbuf = (params["W_obs"], params["W_flow"],
                                 params["W_scale"], params["P"])
    H = wflow.shape[-1]
    SH = wscale.shape[-1]
    assert OUT_W >= H + 1 and H <= LANE

    tb, n_tiles, b_pad = _plan_batch(B, max_batch_tile, num_cores)

    # obs pre-cast to bf16 (halves its DMA); act zero-padded to H lanes (the padded
    # z lanes stay exactly 0 through the flow chain) and both padded to b_pad rows.
    obs_in = jnp.pad(obs.astype(jnp.bfloat16), ((0, b_pad - B), (0, 0)))
    act_in = jnp.pad(act.astype(jnp.float32), ((0, b_pad - B), (0, H - A)))

    weights = (wobs, wflow, wscale, pbuf)
    flops = 2 * b_pad * (S * wobs.shape[1] + N_FLOWS * 3 * H * H
                         + N_SCALE * SH * SH + N_SCALE * SH)
    w_bytes = sum(int(w.size * w.dtype.itemsize) for w in weights)
    bytes_accessed = (w_bytes + int(obs_in.size * obs_in.dtype.itemsize)
                      + int(act_in.size * 4) + int(b_pad * OUT_W * 4))
    cost = pl.CostEstimate(flops=int(flops),
                           transcendentals=int(b_pad * (H + A + 2 * N_FLOWS + 2)),
                           bytes_accessed=int(bytes_accessed))
    kernel = functools.partial(_flow_policy_kernel, act_dim=A)

    def make_call(single_buffer_weights):
        def const_spec(shape):
            idx = lambda i, _nd=len(shape): (0,) * _nd
            if single_buffer_weights:
                # Weights have a constant block index: one VMEM buffer is enough.
                return pl.BlockSpec(shape, idx, pipeline_mode=pl.Buffered(1))
            return pl.BlockSpec(shape, idx)

        in_specs = [pl.BlockSpec((tb, S), lambda i: (i, 0)),
                    pl.BlockSpec((tb, H), lambda i: (i, 0))]
        in_specs += [const_spec(w.shape) for w in weights]
        return pl.pallas_call(
            kernel,
            out_shape=jax.ShapeDtypeStruct((b_pad, OUT_W), jnp.float32),
            grid=(n_tiles,),
            in_specs=in_specs,
            out_specs=pl.BlockSpec((tb, OUT_W), lambda i: (i, 0)),
            compiler_params=pltpu.CompilerParams(dimension_semantics=("parallel",)),
            cost_estimate=cost,
        )

    try:
        out = make_call(True)(obs_in, act_in, *weights)
    except Exception:
        # Fallback for JAX versions without BlockSpec(pipeline_mode=pl.Buffered(1)).
        out = make_call(False)(obs_in, act_in, *weights)

    z = out[:B, :A]
    log_q = out[:B, H]
    return z, log_q


def init_raw_params(key, action_sizes, state_sizes, hidden=64, scale_hidden=256):
    """Deterministic synthetic init matching the shapes from initializeFlow."""
    A, S, H, SH = action_sizes, state_sizes, hidden, scale_hidden
    ortho = jax.nn.initializers.orthogonal()
    keys = iter(jax.random.split(key, 16))

    def orth(shape):
        return ortho(next(keys), shape, jnp.float32)

    # Alternating coupling masks: b, 1-b, b, 1-b  (b_i = 1 if i even else 0)
    b = jnp.array([1.0 if i % 2 == 0 else 0.0 for i in range(A)], jnp.float32)
    masks = jnp.stack([b, 1.0 - b, b, 1.0 - b])                            # (4, A)

    return dict(
        masks=masks,
        # 4 coupling MLPs: [A+S, H, H, A], orthogonal init, zero biases,
        # LayerNorm gamma=1 / beta=0 between hidden layers.
        cW1=jnp.stack([orth((A + S, H)) for _ in range(N_FLOWS)]),         # (4, A+S, H)
        cb1=jnp.zeros((N_FLOWS, H), jnp.float32),
        cg1=jnp.ones((N_FLOWS, H), jnp.float32),
        cbt1=jnp.zeros((N_FLOWS, H), jnp.float32),
        cW2=jnp.stack([orth((H, H)) for _ in range(N_FLOWS)]),             # (4, H, H)
        cb2=jnp.zeros((N_FLOWS, H), jnp.float32),
        cg2=jnp.ones((N_FLOWS, H), jnp.float32),
        cbt2=jnp.zeros((N_FLOWS, H), jnp.float32),
        cW3=jnp.stack([orth((H, A)) for _ in range(N_FLOWS)]),             # (4, H, A)
        cb3=jnp.zeros((N_FLOWS, A), jnp.float32),
        # 2 scale MLPs: [S, SH, SH, 1], zero-initialized final layer (init='zero'),
        # no layernorm, ReLU activations.
        sW1=jnp.stack([orth((S, SH)) for _ in range(N_SCALE)]),            # (2, S, SH)
        sb1=jnp.zeros((N_SCALE, SH), jnp.float32),
        sW2=jnp.stack([orth((SH, SH)) for _ in range(N_SCALE)]),           # (2, SH, SH)
        sb2=jnp.zeros((N_SCALE, SH), jnp.float32),
        sW3=jnp.zeros((N_SCALE, SH, 1), jnp.float32),
        sb3=jnp.zeros((N_SCALE, 1), jnp.float32),
    )


def pack_params(raw, weight_dtype=jnp.bfloat16):
    """Repack per-flow (torch-layout) params into the fused kernel layout.

    - W_obs  (S, 4*128 + 2*SH) bf16: obs half of each coupling first layer,
      zero-padded to a 128-lane group per flow (lane-aligned in-loop slices),
      followed by the first layers of both CondScaling MLPs.
    - W_flow (12*H, H) bf16: per flow [cW1a | cW2 | cW3] with the coupling mask b
      baked into cW1a's rows, (1-b) into cW3's columns, and the action dimension
      zero-padded to H so every flow matmul is (H, H).
    - W_scale(2*SH, SH) bf16: the two CondScaling second layers stacked.
    - P      (40, max(SH,128)) f32: biases / LayerNorm affines / final-layer row
      vectors, one per row (see the R_* row map).  Pad columns must stay zero.
    """
    f32, wd = jnp.float32, weight_dtype
    masks = raw["masks"].astype(f32)
    A = masks.shape[1]
    cW1 = raw["cW1"].astype(f32)
    H = cW1.shape[-1]
    SH = raw["sW2"].shape[-1]
    assert A <= H <= LANE and SH >= LANE

    pw = ((max(SH, LANE) + LANE - 1) // LANE) * LANE

    def prow(v):
        v = jnp.asarray(v, f32).reshape(-1)
        return jnp.pad(v, (0, pw - v.shape[0]))[None, :]

    obs_cols, flow_rows, prows = [], [], []
    for i in range(N_FLOWS):
        b = masks[i]
        obs_cols.append(jnp.pad(cW1[i, A:, :], ((0, 0), (0, LANE - H))))          # (S, 128)
        w1 = jnp.pad(cW1[i, :A, :] * b[:, None], ((0, H - A), (0, 0)))            # b baked in
        w3 = jnp.pad(raw["cW3"][i].astype(f32) * (1.0 - b)[None, :],
                     ((0, 0), (0, H - A)))                                        # (1-b) baked in
        flow_rows += [w1, raw["cW2"][i].astype(f32), w3]
        prows += [prow(raw["cb1"][i]), prow(raw["cg1"][i]), prow(raw["cbt1"][i]),
                  prow(raw["cb2"][i]), prow(raw["cg2"][i]), prow(raw["cbt2"][i]),
                  prow(jnp.pad(raw["cb3"][i].astype(f32) * (1.0 - b), (0, H - A))),
                  prow(jnp.zeros((1,), f32))]
    obs_cols += [raw["sW1"][0].astype(f32), raw["sW1"][1].astype(f32)]
    prows += [prow(raw["sb1"][0]), prow(raw["sb1"][1]),
              prow(raw["sb2"][0]), prow(raw["sb2"][1]),
              prow(raw["sW3"][0][:, 0]), prow(raw["sW3"][1][:, 0]),
              prow(raw["sb3"][0] - raw["sb3"][1]),
              prow(jnp.zeros((1,), f32))]

    P = jnp.concatenate(prows, axis=0)
    assert P.shape[0] == P_ROWS
    return dict(
        W_obs=jnp.concatenate(obs_cols, axis=1).astype(wd),
        W_flow=jnp.concatenate(flow_rows, axis=0).astype(wd),
        W_scale=jnp.concatenate([raw["sW2"][0], raw["sW2"][1]], axis=0).astype(wd),
        P=P,
    )


def _reference_forward_raw(obs, act, raw):
    """Pure-JAX f32 reference that follows the torch module structure directly
    (eval mode, unpacked weights, explicit masks).  Used to catch packing errors."""
    f32 = jnp.float32
    obs = obs.astype(f32)
    z = act.astype(f32)
    log_q = jnp.zeros((act.shape[0],), f32)
    masks = raw["masks"]

    def coupling_mlp(x, i):
        h = x @ raw["cW1"][i] + raw["cb1"][i]
        h = jnp.maximum(_layernorm(h, raw["cg1"][i], raw["cbt1"][i]), 0.0)
        h = h @ raw["cW2"][i] + raw["cb2"][i]
        h = jnp.maximum(_layernorm(h, raw["cg2"][i], raw["cbt2"][i]), 0.0)
        return h @ raw["cW3"][i] + raw["cb3"][i]

    for i in range(N_FLOWS):
        b = masks[i]
        zm = b * z
        t = coupling_mlp(jnp.concatenate([zm, obs], axis=-1), i)
        z = zm + (1.0 - b) * (z + t)          # log_det = 0 (s is None)

    def scale_mlp(j):
        h = jnp.maximum(obs @ raw["sW1"][j] + raw["sb1"][j], 0.0)
        h = jnp.maximum(h @ raw["sW2"][j] + raw["sb2"][j], 0.0)
        return h @ raw["sW3"][j] + raw["sb3"][j]

    log_q = log_q - (scale_mlp(0) - scale_mlp(1))[:, 0]
    z_t = jnp.tanh(z)
    log_det_pre = jnp.sum(2.0 * (jnp.log(2.0) - z - _softplus(-2.0 * z)), axis=-1)
    log_q = log_q - log_det_pre
    return z_t, log_q


if __name__ == "__main__":
    action_sizes, state_sizes, batch = 6, 17, 16
    key = jax.random.PRNGKey(0)
    kp, ko, ka = jax.random.split(key, 3)

    raw = init_raw_params(kp, action_sizes, state_sizes)
    params = pack_params(raw)
    obs = jax.random.normal(ko, (batch, state_sizes), jnp.float32)
    act = jax.random.normal(ka, (batch, action_sizes), jnp.float32)

    # max_batch_tile=8 -> grid=(2,) so the batch-tiled ("parallel") path is exercised.
    z, log_q = flow_policy_forward(obs, act, params, max_batch_tile=8)
    jax.block_until_ready((z, log_q))

    assert z.shape == (batch, action_sizes) and log_q.shape == (batch,)
    assert bool(jnp.all(jnp.isfinite(z))) and bool(jnp.all(jnp.isfinite(log_q)))

    # (1) Tight check vs a pure-JAX reference using the SAME packed bf16 weights/math.
    H = params["W_flow"].shape[-1]
    act_pad = jnp.pad(act, ((0, 0), (0, H - action_sizes)))
    z_full, lq = _forward_packed(obs, act_pad, params["W_obs"], params["W_flow"],
                                 params["W_scale"], params["P"], act_dim=action_sizes)
    assert jnp.allclose(z, z_full[:, :action_sizes], atol=1e-3, rtol=1e-3), \
        "z mismatch vs packed reference"
    assert jnp.allclose(log_q, lq[:, 0], atol=1e-3, rtol=1e-3), \
        "log_q mismatch vs packed reference"

    # (2) Loose check vs an f32 torch-layout reference (catches packing/mask errors;
    # tolerance accounts for bf16 weight storage + bf16 matmul operands in the kernel).
    z_raw, logq_raw = _reference_forward_raw(obs, act, raw)
    assert jnp.allclose(z, z_raw, atol=1.5e-1, rtol=1e-1), "z mismatch vs raw f32 reference"
    assert jnp.allclose(log_q, logq_raw, atol=1.0, rtol=1e-1), \
        "log_q mismatch vs raw f32 reference"

    print("KERNEL_OK")
</pallas_src>

<mosaic_0001>
module attributes {stable_mosaic.version = 11 : i64} {
  func.func @_flow_policy_kernel(%arg0: i32, %arg1: memref<8x17xbf16, #tpu.memory_space<vmem>>, %arg2: memref<8x64xf32, #tpu.memory_space<vmem>>, %arg3: memref<17x1024xbf16, #tpu.memory_space<vmem>>, %arg4: memref<768x64xbf16, #tpu.memory_space<vmem>>, %arg5: memref<512x256xbf16, #tpu.memory_space<vmem>>, %arg6: memref<40x256xf32, #tpu.memory_space<vmem>>, %arg7: memref<8x128xf32, #tpu.memory_space<vmem>>) attributes {dimension_semantics = [#tpu.dimension_semantics<parallel>], iteration_bounds = array<i64: 2>, scalar_prefetch = 0 : i64, scratch_operands = 0 : i64, tpu.core_type = #tpu.core_type<tc>, window_params = [{transform_indices = @transform_0, window_bounds = array<i64: 8, 17>}, {transform_indices = @transform_1, window_bounds = array<i64: 8, 64>}, {pipeline_mode = #tpu.pipeline_mode<synchronous>, transform_indices = @transform_2, window_bounds = array<i64: 17, 1024>}, {pipeline_mode = #tpu.pipeline_mode<synchronous>, transform_indices = @transform_3, window_bounds = array<i64: 768, 64>}, {pipeline_mode = #tpu.pipeline_mode<synchronous>, transform_indices = @transform_4, window_bounds = array<i64: 512, 256>}, {pipeline_mode = #tpu.pipeline_mode<synchronous>, transform_indices = @transform_5, window_bounds = array<i64: 40, 256>}, {transform_indices = @transform_6, window_bounds = array<i64: 8, 128>}]} {
    %c0 = arith.constant 0 : index
    %c0_0 = arith.constant 0 : index
    %0 = vector.load %arg1[%c0, %c0_0] : memref<8x17xbf16, #tpu.memory_space<vmem>>, vector<8x17xbf16>
    %c0_1 = arith.constant 0 : index
    %c0_2 = arith.constant 0 : index
    %1 = vector.load %arg2[%c0_1, %c0_2] : memref<8x64xf32, #tpu.memory_space<vmem>>, vector<8x64xf32>
    %c0_3 = arith.constant 0 : index
    %c0_4 = arith.constant 0 : index
    %2 = vector.load %arg3[%c0_3, %c0_4] : memref<17x1024xbf16, #tpu.memory_space<vmem>>, vector<17x1024xbf16>
    %cst = arith.constant dense<0.000000e+00> : vector<8x1024xf32>
    %3 = tpu.matmul %0, %2, %cst {dimension_numbers = #tpu.dot_dimension_numbers<[1], [0], [0], [1], [0, 0, 1, 1], [], []>} : vector<8x17xbf16>, vector<17x1024xbf16>, vector<8x1024xf32> -> vector<8x1024xf32>
    %4 = arith.truncf %1 : vector<8x64xf32> to vector<8x64xbf16>
    %c0_5 = arith.constant 0 : index
    %c0_6 = arith.constant 0 : index
    %5 = vector.load %arg4[%c0_5, %c0_6] : memref<768x64xbf16, #tpu.memory_space<vmem>>, vector<64x64xbf16>
    %cst_7 = arith.constant dense<0.000000e+00> : vector<8x64xf32>
    %6 = tpu.matmul %4, %5, %cst_7 {dimension_numbers = #tpu.dot_dimension_numbers<[1], [0], [0], [1], [0, 0, 1, 1], [], []>} : vector<8x64xbf16>, vector<64x64xbf16>, vector<8x64xf32> -> vector<8x64xf32>
    %7 = vector.extract_strided_slice %3 {offsets = [0, 0], sizes = [8, 64], strides = [1, 1]} : vector<8x1024xf32> to vector<8x64xf32>
    %8 = arith.addf %6, %7 : vector<8x64xf32>
    %c0_8 = arith.constant 0 : index
    %c0_9 = arith.constant 0 : index
    %9 = vector.load %arg6[%c0_8, %c0_9] : memref<40x256xf32, #tpu.memory_space<vmem>>, vector<1x64xf32>
    %10 = vector.broadcast %9 : vector<1x64xf32> to vector<8x64xf32>
    %11 = arith.addf %8, %10 : vector<8x64xf32>
    %c1 = arith.constant 1 : index
    %c0_10 = arith.constant 0 : index
    %12 = vector.load %arg6[%c1, %c0_10] : memref<40x256xf32, #tpu.memory_space<vmem>>, vector<1x64xf32>
    %c2 = arith.constant 2 : index
    %c0_11 = arith.constant 0 : index
    %13 = vector.load %arg6[%c2, %c0_11] : memref<40x256xf32, #tpu.memory_space<vmem>>, vector<1x64xf32>
    %cst_12 = arith.constant dense<0.000000e+00> : vector<8xf32>
    %14 = vector.multi_reduction <add>, %11, %cst_12 [1] : vector<8x64xf32> to vector<8xf32>
    %15 = vector.shape_cast %14 : vector<8xf32> to vector<8x1xf32>
    %16 = arith.mulf %11, %11 : vector<8x64xf32>
    %cst_13 = arith.constant dense<0.000000e+00> : vector<8xf32>
    %17 = vector.multi_reduction <add>, %16, %cst_13 [1] : vector<8x64xf32> to vector<8xf32>
    %18 = vector.shape_cast %17 : vector<8xf32> to vector<8x1xf32>
    %cst_14 = arith.constant 1.562500e-02 : f32
    %19 = vector.broadcast %cst_14 : f32 to vector<8x1xf32>
    %20 = arith.mulf %15, %19 : vector<8x1xf32>
    %cst_15 = arith.constant 1.562500e-02 : f32
    %21 = vector.broadcast %cst_15 : f32 to vector<8x1xf32>
    %22 = arith.mulf %18, %21 : vector<8x1xf32>
    %23 = arith.mulf %20, %20 : vector<8x1xf32>
    %24 = arith.subf %22, %23 : vector<8x1xf32>
    %cst_16 = arith.constant 0.000000e+00 : f32
    %25 = vector.broadcast %cst_16 : f32 to vector<8x1xf32>
    %26 = arith.maximumf %24, %25 : vector<8x1xf32>
    %27 = vector.broadcast %20 : vector<8x1xf32> to vector<8x64xf32>
    %28 = arith.subf %11, %27 : vector<8x64xf32>
    %cst_17 = arith.constant 9.99999974E-6 : f32
    %29 = vector.broadcast %cst_17 : f32 to vector<8x1xf32>
    %30 = arith.addf %26, %29 : vector<8x1xf32>
    %31 = math.rsqrt %30 : vector<8x1xf32>
    %32 = vector.broadcast %31 : vector<8x1xf32> to vector<8x64xf32>
    %33 = arith.mulf %28, %32 : vector<8x64xf32>
    %34 = vector.broadcast %12 : vector<1x64xf32> to vector<8x64xf32>
    %35 = arith.mulf %33, %34 : vector<8x64xf32>
    %36 = vector.broadcast %13 : vector<1x64xf32> to vector<8x64xf32>
    %37 = arith.addf %35, %36 : vector<8x64xf32>
    %cst_18 = arith.constant 0.000000e+00 : f32
    %38 = vector.broadcast %cst_18 : f32 to vector<8x64xf32>
    %39 = arith.maximumf %37, %38 : vector<8x64xf32>
    %40 = arith.truncf %39 : vector<8x64xf32> to vector<8x64xbf16>
    %c64 = arith.constant 64 : index
    %c0_19 = arith.constant 0 : index
    %41 = vector.load %arg4[%c64, %c0_19] : memref<768x64xbf16, #tpu.memory_space<vmem>>, vector<64x64xbf16>
    %cst_20 = arith.constant dense<0.000000e+00> : vector<8x64xf32>
    %42 = tpu.matmul %40, %41, %cst_20 {dimension_numbers = #tpu.dot_dimension_numbers<[1], [0], [0], [1], [0, 0, 1, 1], [], []>} : vector<8x64xbf16>, vector<64x64xbf16>, vector<8x64xf32> -> vector<8x64xf32>
    %c3 = arith.constant 3 : index
    %c0_21 = arith.constant 0 : index
    %43 = vector.load %arg6[%c3, %c0_21] : memref<40x256xf32, #tpu.memory_space<vmem>>, vector<1x64xf32>
    %44 = vector.broadcast %43 : vector<1x64xf32> to vector<8x64xf32>
    %45 = arith.addf %42, %44 : vector<8x64xf32>
    %c4 = arith.constant 4 : index
    %c0_22 = arith.constant 0 : index
    %46 = vector.load %arg6[%c4, %c0_22] : memref<40x256xf32, #tpu.memory_space<vmem>>, vector<1x64xf32>
    %c5 = arith.constant 5 : index
    %c0_23 = arith.constant 0 : index
    %47 = vector.load %arg6[%c5, %c0_23] : memref<40x256xf32, #tpu.memory_space<vmem>>, vector<1x64xf32>
    %cst_24 = arith.constant dense<0.000000e+00> : vector<8xf32>
    %48 = vector.multi_reduction <add>, %45, %cst_24 [1] : vector<8x64xf32> to vector<8xf32>
    %49 = vector.shape_cast %48 : vector<8xf32> to vector<8x1xf32>
    %50 = arith.mulf %45, %45 : vector<8x64xf32>
    %cst_25 = arith.constant dense<0.000000e+00> : vector<8xf32>
    %51 = vector.multi_reduction <add>, %50, %cst_25 [1] : vector<8x64xf32> to vector<8xf32>
    %52 = vector.shape_cast %51 : vector<8xf32> to vector<8x1xf32>
    %cst_26 = arith.constant 1.562500e-02 : f32
    %53 = vector.broadcast %cst_26 : f32 to vector<8x1xf32>
    %54 = arith.mulf %49, %53 : vector<8x1xf32>
    %cst_27 = arith.constant 1.562500e-02 : f32
    %55 = vector.broadcast %cst_27 : f32 to vector<8x1xf32>
    %56 = arith.mulf %52, %55 : vector<8x1xf32>
    %57 = arith.mulf %54, %54 : vector<8x1xf32>
    %58 = arith.subf %56, %57 : vector<8x1xf32>
    %cst_28 = arith.constant 0.000000e+00 : f32
    %59 = vector.broadcast %cst_28 : f32 to vector<8x1xf32>
    %60 = arith.maximumf %58, %59 : vector<8x1xf32>
    %61 = vector.broadcast %54 : vector<8x1xf32> to vector<8x64xf32>
    %62 = arith.subf %45, %61 : vector<8x64xf32>
    %cst_29 = arith.constant 9.99999974E-6 : f32
    %63 = vector.broadcast %cst_29 : f32 to vector<8x1xf32>
    %64 = arith.addf %60, %63 : vector<8x1xf32>
    %65 = math.rsqrt %64 : vector<8x1xf32>
    %66 = vector.broadcast %65 : vector<8x1xf32> to vector<8x64xf32>
    %67 = arith.mulf %62, %66 : vector<8x64xf32>
    %68 = vector.broadcast %46 : vector<1x64xf32> to vector<8x64xf32>
    %69 = arith.mulf %67, %68 : vector<8x64xf32>
    %70 = vector.broadcast %47 : vector<1x64xf32> to vector<8x64xf32>
    %71 = arith.addf %69, %70 : vector<8x64xf32>
    %cst_30 = arith.constant 0.000000e+00 : f32
    %72 = vector.broadcast %cst_30 : f32 to vector<8x64xf32>
    %73 = arith.maximumf %71, %72 : vector<8x64xf32>
    %74 = arith.truncf %73 : vector<8x64xf32> to vector<8x64xbf16>
    %c128 = arith.constant 128 : index
    %c0_31 = arith.constant 0 : index
    %75 = vector.load %arg4[%c128, %c0_31] : memref<768x64xbf16, #tpu.memory_space<vmem>>, vector<64x64xbf16>
    %cst_32 = arith.constant dense<0.000000e+00> : vector<8x64xf32>
    %76 = tpu.matmul %74, %75, %cst_32 {dimension_numbers = #tpu.dot_dimension_numbers<[1], [0], [0], [1], [0, 0, 1, 1], [], []>} : vector<8x64xbf16>, vector<64x64xbf16>, vector<8x64xf32> -> vector<8x64xf32>
    %c6 = arith.constant 6 : index
    %c0_33 = arith.constant 0 : index
    %77 = vector.load %arg6[%c6, %c0_33] : memref<40x256xf32, #tpu.memory_space<vmem>>, vector<1x64xf32>
    %78 = vector.broadcast %77 : vector<1x64xf32> to vector<8x64xf32>
    %79 = arith.addf %76, %78 : vector<8x64xf32>
    %80 = arith.addf %1, %79 : vector<8x64xf32>
    %81 = arith.truncf %80 : vector<8x64xf32> to vector<8x64xbf16>
    %c192 = arith.constant 192 : index
    %c0_34 = arith.constant 0 : index
    %82 = vector.load %arg4[%c192, %c0_34] : memref<768x64xbf16, #tpu.memory_space<vmem>>, vector<64x64xbf16>
    %cst_35 = arith.constant dense<0.000000e+00> : vector<8x64xf32>
    %83 = tpu.matmul %81, %82, %cst_35 {dimension_numbers = #tpu.dot_dimension_numbers<[1], [0], [0], [1], [0, 0, 1, 1], [], []>} : vector<8x64xbf16>, vector<64x64xbf16>, vector<8x64xf32> -> vector<8x64xf32>
    %84 = vector.extract_strided_slice %3 {offsets = [0, 128], sizes = [8, 64], strides = [1, 1]} : vector<8x1024xf32> to vector<8x64xf32>
    %85 = arith.addf %83, %84 : vector<8x64xf32>
    %c8 = arith.constant 8 : index
    %c0_36 = arith.constant 0 : index
    %86 = vector.load %arg6[%c8, %c0_36] : memref<40x256xf32, #tpu.memory_space<vmem>>, vector<1x64xf32>
    %87 = vector.broadcast %86 : vector<1x64xf32> to vector<8x64xf32>
    %88 = arith.addf %85, %87 : vector<8x64xf32>
    %c9 = arith.constant 9 : index
    %c0_37 = arith.constant 0 : index
    %89 = vector.load %arg6[%c9, %c0_37] : memref<40x256xf32, #tpu.memory_space<vmem>>, vector<1x64xf32>
    %c10 = arith.constant 10 : index
    %c0_38 = arith.constant 0 : index
    %90 = vector.load %arg6[%c10, %c0_38] : memref<40x256xf32, #tpu.memory_space<vmem>>, vector<1x64xf32>
    %cst_39 = arith.constant dense<0.000000e+00> : vector<8xf32>
    %91 = vector.multi_reduction <add>, %88, %cst_39 [1] : vector<8x64xf32> to vector<8xf32>
    %92 = vector.shape_cast %91 : vector<8xf32> to vector<8x1xf32>
    %93 = arith.mulf %88, %88 : vector<8x64xf32>
    %cst_40 = arith.constant dense<0.000000e+00> : vector<8xf32>
    %94 = vector.multi_reduction <add>, %93, %cst_40 [1] : vector<8x64xf32> to vector<8xf32>
    %95 = vector.shape_cast %94 : vector<8xf32> to vector<8x1xf32>
    %cst_41 = arith.constant 1.562500e-02 : f32
    %96 = vector.broadcast %cst_41 : f32 to vector<8x1xf32>
    %97 = arith.mulf %92, %96 : vector<8x1xf32>
    %cst_42 = arith.constant 1.562500e-02 : f32
    %98 = vector.broadcast %cst_42 : f32 to vector<8x1xf32>
    %99 = arith.mulf %95, %98 : vector<8x1xf32>
    %100 = arith.mulf %97, %97 : vector<8x1xf32>
    %101 = arith.subf %99, %100 : vector<8x1xf32>
    %cst_43 = arith.constant 0.000000e+00 : f32
    %102 = vector.broadcast %cst_43 : f32 to vector<8x1xf32>
    %103 = arith.maximumf %101, %102 : vector<8x1xf32>
    %104 = vector.broadcast %97 : vector<8x1xf32> to vector<8x64xf32>
    %105 = arith.subf %88, %104 : vector<8x64xf32>
    %cst_44 = arith.constant 9.99999974E-6 : f32
    %106 = vector.broadcast %cst_44 : f32 to vector<8x1xf32>
    %107 = arith.addf %103, %106 : vector<8x1xf32>
    %108 = math.rsqrt %107 : vector<8x1xf32>
    %109 = vector.broadcast %108 : vector<8x1xf32> to vector<8x64xf32>
    %110 = arith.mulf %105, %109 : vector<8x64xf32>
    %111 = vector.broadcast %89 : vector<1x64xf32> to vector<8x64xf32>
    %112 = arith.mulf %110, %111 : vector<8x64xf32>
    %113 = vector.broadcast %90 : vector<1x64xf32> to vector<8x64xf32>
    %114 = arith.addf %112, %113 : vector<8x64xf32>
    %cst_45 = arith.constant 0.000000e+00 : f32
    %115 = vector.broadcast %cst_45 : f32 to vector<8x64xf32>
    %116 = arith.maximumf %114, %115 : vector<8x64xf32>
    %117 = arith.truncf %116 : vector<8x64xf32> to vector<8x64xbf16>
    %c256 = arith.constant 256 : index
    %c0_46 = arith.constant 0 : index
    %118 = vector.load %arg4[%c256, %c0_46] : memref<768x64xbf16, #tpu.memory_space<vmem>>, vector<64x64xbf16>
    %cst_47 = arith.constant dense<0.000000e+00> : vector<8x64xf32>
    %119 = tpu.matmul %117, %118, %cst_47 {dimension_numbers = #tpu.dot_dimension_numbers<[1], [0], [0], [1], [0, 0, 1, 1], [], []>} : vector<8x64xbf16>, vector<64x64xbf16>, vector<8x64xf32> -> vector<8x64xf32>
    %c11 = arith.constant 11 : index
    %c0_48 = arith.constant 0 : index
    %120 = vector.load %arg6[%c11, %c0_48] : memref<40x256xf32, #tpu.memory_space<vmem>>, vector<1x64xf32>
    %121 = vector.broadcast %120 : vector<1x64xf32> to vector<8x64xf32>
    %122 = arith.addf %119, %121 : vector<8x64xf32>
    %c12 = arith.constant 12 : index
    %c0_49 = arith.constant 0 : index
    %123 = vector.load %arg6[%c12, %c0_49] : memref<40x256xf32, #tpu.memory_space<vmem>>, vector<1x64xf32>
    %c13 = arith.constant 13 : index
    %c0_50 = arith.constant 0 : index
    %124 = vector.load %arg6[%c13, %c0_50] : memref<40x256xf32, #tpu.memory_space<vmem>>, vector<1x64xf32>
    %cst_51 = arith.constant dense<0.000000e+00> : vector<8xf32>
    %125 = vector.multi_reduction <add>, %122, %cst_51 [1] : vector<8x64xf32> to vector<8xf32>
    %126 = vector.shape_cast %125 : vector<8xf32> to vector<8x1xf32>
    %127 = arith.mulf %122, %122 : vector<8x64xf32>
    %cst_52 = arith.constant dense<0.000000e+00> : vector<8xf32>
    %128 = vector.multi_reduction <add>, %127, %cst_52 [1] : vector<8x64xf32> to vector<8xf32>
    %129 = vector.shape_cast %128 : vector<8xf32> to vector<8x1xf32>
    %cst_53 = arith.constant 1.562500e-02 : f32
    %130 = vector.broadcast %cst_53 : f32 to vector<8x1xf32>
    %131 = arith.mulf %126, %130 : vector<8x1xf32>
    %cst_54 = arith.constant 1.562500e-02 : f32
    %132 = vector.broadcast %cst_54 : f32 to vector<8x1xf32>
    %133 = arith.mulf %129, %132 : vector<8x1xf32>
    %134 = arith.mulf %131, %131 : vector<8x1xf32>
    %135 = arith.subf %133, %134 : vector<8x1xf32>
    %cst_55 = arith.constant 0.000000e+00 : f32
    %136 = vector.broadcast %cst_55 : f32 to vector<8x1xf32>
    %137 = arith.maximumf %135, %136 : vector<8x1xf32>
    %138 = vector.broadcast %131 : vector<8x1xf32> to vector<8x64xf32>
    %139 = arith.subf %122, %138 : vector<8x64xf32>
    %cst_56 = arith.constant 9.99999974E-6 : f32
    %140 = vector.broadcast %cst_56 : f32 to vector<8x1xf32>
    %141 = arith.addf %137, %140 : vector<8x1xf32>
    %142 = math.rsqrt %141 : vector<8x1xf32>
    %143 = vector.broadcast %142 : vector<8x1xf32> to vector<8x64xf32>
    %144 = arith.mulf %139, %143 : vector<8x64xf32>
    %145 = vector.broadcast %123 : vector<1x64xf32> to vector<8x64xf32>
    %146 = arith.mulf %144, %145 : vector<8x64xf32>
    %147 = vector.broadcast %124 : vector<1x64xf32> to vector<8x64xf32>
    %148 = arith.addf %146, %147 : vector<8x64xf32>
    %cst_57 = arith.constant 0.000000e+00 : f32
    %149 = vector.broadcast %cst_57 : f32 to vector<8x64xf32>
    %150 = arith.maximumf %148, %149 : vector<8x64xf32>
    %151 = arith.truncf %150 : vector<8x64xf32> to vector<8x64xbf16>
    %c320 = arith.constant 320 : index
    %c0_58 = arith.constant 0 : index
    %152 = vector.load %arg4[%c320, %c0_58] : memref<768x64xbf16, #tpu.memory_space<vmem>>, vector<64x64xbf16>
    %cst_59 = arith.constant dense<0.000000e+00> : vector<8x64xf32>
    %153 = tpu.matmul %151, %152, %cst_59 {dimension_numbers = #tpu.dot_dimension_numbers<[1], [0], [0], [1], [0, 0, 1, 1], [], []>} : vector<8x64xbf16>, vector<64x64xbf16>, vector<8x64xf32> -> vector<8x64xf32>
    %c14 = arith.constant 14 : index
    %c0_60 = arith.constant 0 : index
    %154 = vector.load %arg6[%c14, %c0_60] : memref<40x256xf32, #tpu.memory_space<vmem>>, vector<1x64xf32>
    %155 = vector.broadcast %154 : vector<1x64xf32> to vector<8x64xf32>
    %156 = arith.addf %153, %155 : vector<8x64xf32>
    %157 = arith.addf %80, %156 : vector<8x64xf32>
    %158 = arith.truncf %157 : vector<8x64xf32> to vector<8x64xbf16>
    %c384 = arith.constant 384 : index
    %c0_61 = arith.constant 0 : index
    %159 = vector.load %arg4[%c384, %c0_61] : memref<768x64xbf16, #tpu.memory_space<vmem>>, vector<64x64xbf16>
    %cst_62 = arith.constant dense<0.000000e+00> : vector<8x64xf32>
    %160 = tpu.matmul %158, %159, %cst_62 {dimension_numbers = #tpu.dot_dimension_numbers<[1], [0], [0], [1], [0, 0, 1, 1], [], []>} : vector<8x64xbf16>, vector<64x64xbf16>, vector<8x64xf32> -> vector<8x64xf32>
    %161 = vector.extract_strided_slice %3 {offsets = [0, 256], sizes = [8, 64], strides = [1, 1]} : vector<8x1024xf32> to vector<8x64xf32>
    %162 = arith.addf %160, %161 : vector<8x64xf32>
    %c16 = arith.constant 16 : index
    %c0_63 = arith.constant 0 : index
    %163 = vector.load %arg6[%c16, %c0_63] : memref<40x256xf32, #tpu.memory_space<vmem>>, vector<1x64xf32>
    %164 = vector.broadcast %163 : vector<1x64xf32> to vector<8x64xf32>
    %165 = arith.addf %162, %164 : vector<8x64xf32>
    %c17 = arith.constant 17 : index
    %c0_64 = arith.constant 0 : index
    %166 = vector.load %arg6[%c17, %c0_64] : memref<40x256xf32, #tpu.memory_space<vmem>>, vector<1x64xf32>
    %c18 = arith.constant 18 : index
    %c0_65 = arith.constant 0 : index
    %167 = vector.load %arg6[%c18, %c0_65] : memref<40x256xf32, #tpu.memory_space<vmem>>, vector<1x64xf32>
    %cst_66 = arith.constant dense<0.000000e+00> : vector<8xf32>
    %168 = vector.multi_reduction <add>, %165, %cst_66 [1] : vector<8x64xf32> to vector<8xf32>
    %169 = vector.shape_cast %168 : vector<8xf32> to vector<8x1xf32>
    %170 = arith.mulf %165, %165 : vector<8x64xf32>
    %cst_67 = arith.constant dense<0.000000e+00> : vector<8xf32>
    %171 = vector.multi_reduction <add>, %170, %cst_67 [1] : vector<8x64xf32> to vector<8xf32>
    %172 = vector.shape_cast %171 : vector<8xf32> to vector<8x1xf32>
    %cst_68 = arith.constant 1.562500e-02 : f32
    %173 = vector.broadcast %cst_68 : f32 to vector<8x1xf32>
    %174 = arith.mulf %169, %173 : vector<8x1xf32>
    %cst_69 = arith.constant 1.562500e-02 : f32
    %175 = vector.broadcast %cst_69 : f32 to vector<8x1xf32>
    %176 = arith.mulf %172, %175 : vector<8x1xf32>
    %177 = arith.mulf %174, %174 : vector<8x1xf32>
    %178 = arith.subf %176, %177 : vector<8x1xf32>
    %cst_70 = arith.constant 0.000000e+00 : f32
    %179 = vector.broadcast %cst_70 : f32 to vector<8x1xf32>
    %180 = arith.maximumf %178, %179 : vector<8x1xf32>
    %181 = vector.broadcast %174 : vector<8x1xf32> to vector<8x64xf32>
    %182 = arith.subf %165, %181 : vector<8x64xf32>
    %cst_71 = arith.constant 9.99999974E-6 : f32
    %183 = vector.broadcast %cst_71 : f32 to vector<8x1xf32>
    %184 = arith.addf %180, %183 : vector<8x1xf32>
    %185 = math.rsqrt %184 : vector<8x1xf32>
    %186 = vector.broadcast %185 : vector<8x1xf32> to vector<8x64xf32>
    %187 = arith.mulf %182, %186 : vector<8x64xf32>
    %188 = vector.broadcast %166 : vector<1x64xf32> to vector<8x64xf32>
    %189 = arith.mulf %187, %188 : vector<8x64xf32>
    %190 = vector.broadcast %167 : vector<1x64xf32> to vector<8x64xf32>
    %191 = arith.addf %189, %190 : vector<8x64xf32>
    %cst_72 = arith.constant 0.000000e+00 : f32
    %192 = vector.broadcast %cst_72 : f32 to vector<8x64xf32>
    %193 = arith.maximumf %191, %192 : vector<8x64xf32>
    %194 = arith.truncf %193 : vector<8x64xf32> to vector<8x64xbf16>
    %c448 = arith.constant 448 : index
    %c0_73 = arith.constant 0 : index
    %195 = vector.load %arg4[%c448, %c0_73] : memref<768x64xbf16, #tpu.memory_space<vmem>>, vector<64x64xbf16>
    %cst_74 = arith.constant dense<0.000000e+00> : vector<8x64xf32>
    %196 = tpu.matmul %194, %195, %cst_74 {dimension_numbers = #tpu.dot_dimension_numbers<[1], [0], [0], [1], [0, 0, 1, 1], [], []>} : vector<8x64xbf16>, vector<64x64xbf16>, vector<8x64xf32> -> vector<8x64xf32>
    %c19 = arith.constant 19 : index
    %c0_75 = arith.constant 0 : index
    %197 = vector.load %arg6[%c19, %c0_75] : memref<40x256xf32, #tpu.memory_space<vmem>>, vector<1x64xf32>
    %198 = vector.broadcast %197 : vector<1x64xf32> to vector<8x64xf32>
    %199 = arith.addf %196, %198 : vector<8x64xf32>
    %c20 = arith.constant 20 : index
    %c0_76 = arith.constant 0 : index
    %200 = vector.load %arg6[%c20, %c0_76] : memref<40x256xf32, #tpu.memory_space<vmem>>, vector<1x64xf32>
    %c21 = arith.constant 21 : index
    %c0_77 = arith.constant 0 : index
    %201 = vector.load %arg6[%c21, %c0_77] : memref<40x256xf32, #tpu.memory_space<vmem>>, vector<1x64xf32>
    %cst_78 = arith.constant dense<0.000000e+00> : vector<8xf32>
    %202 = vector.multi_reduction <add>, %199, %cst_78 [1] : vector<8x64xf32> to vector<8xf32>
    %203 = vector.shape_cast %202 : vector<8xf32> to vector<8x1xf32>
    %204 = arith.mulf %199, %199 : vector<8x64xf32>
    %cst_79 = arith.constant dense<0.000000e+00> : vector<8xf32>
    %205 = vector.multi_reduction <add>, %204, %cst_79 [1] : vector<8x64xf32> to vector<8xf32>
    %206 = vector.shape_cast %205 : vector<8xf32> to vector<8x1xf32>
    %cst_80 = arith.constant 1.562500e-02 : f32
    %207 = vector.broadcast %cst_80 : f32 to vector<8x1xf32>
    %208 = arith.mulf %203, %207 : vector<8x1xf32>
    %cst_81 = arith.constant 1.562500e-02 : f32
    %209 = vector.broadcast %cst_81 : f32 to vector<8x1xf32>
    %210 = arith.mulf %206, %209 : vector<8x1xf32>
    %211 = arith.mulf %208, %208 : vector<8x1xf32>
    %212 = arith.subf %210, %211 : vector<8x1xf32>
    %cst_82 = arith.constant 0.000000e+00 : f32
    %213 = vector.broadcast %cst_82 : f32 to vector<8x1xf32>
    %214 = arith.maximumf %212, %213 : vector<8x1xf32>
    %215 = vector.broadcast %208 : vector<8x1xf32> to vector<8x64xf32>
    %216 = arith.subf %199, %215 : vector<8x64xf32>
    %cst_83 = arith.constant 9.99999974E-6 : f32
    %217 = vector.broadcast %cst_83 : f32 to vector<8x1xf32>
    %218 = arith.addf %214, %217 : vector<8x1xf32>
    %219 = math.rsqrt %218 : vector<8x1xf32>
    %220 = vector.broadcast %219 : vector<8x1xf32> to vector<8x64xf32>
    %221 = arith.mulf %216, %220 : vector<8x64xf32>
    %222 = vector.broadcast %200 : vector<1x64xf32> to vector<8x64xf32>
    %223 = arith.mulf %221, %222 : vector<8x64xf32>
    %224 = vector.broadcast %201 : vector<1x64xf32> to vector<8x64xf32>
    %225 = arith.addf %223, %224 : vector<8x64xf32>
    %cst_84 = arith.constant 0.000000e+00 : f32
    %226 = vector.broadcast %cst_84 : f32 to vector<8x64xf32>
    %227 = arith.maximumf %225, %226 : vector<8x64xf32>
    %228 = arith.truncf %227 : vector<8x64xf32> to vector<8x64xbf16>
    %c512 = arith.constant 512 : index
    %c0_85 = arith.constant 0 : index
    %229 = vector.load %arg4[%c512, %c0_85] : memref<768x64xbf16, #tpu.memory_space<vmem>>, vector<64x64xbf16>
    %cst_86 = arith.constant dense<0.000000e+00> : vector<8x64xf32>
    %230 = tpu.matmul %228, %229, %cst_86 {dimension_numbers = #tpu.dot_dimension_numbers<[1], [0], [0], [1], [0, 0, 1, 1], [], []>} : vector<8x64xbf16>, vector<64x64xbf16>, vector<8x64xf32> -> vector<8x64xf32>
    %c22 = arith.constant 22 : index
    %c0_87 = arith.constant 0 : index
    %231 = vector.load %arg6[%c22, %c0_87] : memref<40x256xf32, #tpu.memory_space<vmem>>, vector<1x64xf32>
    %232 = vector.broadcast %231 : vector<1x64xf32> to vector<8x64xf32>
    %233 = arith.addf %230, %232 : vector<8x64xf32>
    %234 = arith.addf %157, %233 : vector<8x64xf32>
    %235 = arith.truncf %234 : vector<8x64xf32> to vector<8x64xbf16>
    %c576 = arith.constant 576 : index
    %c0_88 = arith.constant 0 : index
    %236 = vector.load %arg4[%c576, %c0_88] : memref<768x64xbf16, #tpu.memory_space<vmem>>, vector<64x64xbf16>
    %cst_89 = arith.constant dense<0.000000e+00> : vector<8x64xf32>
    %237 = tpu.matmul %235, %236, %cst_89 {dimension_numbers = #tpu.dot_dimension_numbers<[1], [0], [0], [1], [0, 0, 1, 1], [], []>} : vector<8x64xbf16>, vector<64x64xbf16>, vector<8x64xf32> -> vector<8x64xf32>
    %238 = vector.extract_strided_slice %3 {offsets = [0, 384], sizes = [8, 64], strides = [1, 1]} : vector<8x1024xf32> to vector<8x64xf32>
    %239 = arith.addf %237, %238 : vector<8x64xf32>
    %c24 = arith.constant 24 : index
    %c0_90 = arith.constant 0 : index
    %240 = vector.load %arg6[%c24, %c0_90] : memref<40x256xf32, #tpu.memory_space<vmem>>, vector<1x64xf32>
    %241 = vector.broadcast %240 : vector<1x64xf32> to vector<8x64xf32>
    %242 = arith.addf %239, %241 : vector<8x64xf32>
    %c25 = arith.constant 25 : index
    %c0_91 = arith.constant 0 : index
    %243 = vector.load %arg6[%c25, %c0_91] : memref<40x256xf32, #tpu.memory_space<vmem>>, vector<1x64xf32>
    %c26 = arith.constant 26 : index
    %c0_92 = arith.constant 0 : index
    %244 = vector.load %arg6[%c26, %c0_92] : memref<40x256xf32, #tpu.memory_space<vmem>>, vector<1x64xf32>
    %cst_93 = arith.constant dense<0.000000e+00> : vector<8xf32>
    %245 = vector.multi_reduction <add>, %242, %cst_93 [1] : vector<8x64xf32> to vector<8xf32>
    %246 = vector.shape_cast %245 : vector<8xf32> to vector<8x1xf32>
    %247 = arith.mulf %242, %242 : vector<8x64xf32>
    %cst_94 = arith.constant dense<0.000000e+00> : vector<8xf32>
    %248 = vector.multi_reduction <add>, %247, %cst_94 [1] : vector<8x64xf32> to vector<8xf32>
    %249 = vector.shape_cast %248 : vector<8xf32> to vector<8x1xf32>
    %cst_95 = arith.constant 1.562500e-02 : f32
    %250 = vector.broadcast %cst_95 : f32 to vector<8x1xf32>
    %251 = arith.mulf %246, %250 : vector<8x1xf32>
    %cst_96 = arith.constant 1.562500e-02 : f32
    %252 = vector.broadcast %cst_96 : f32 to vector<8x1xf32>
    %253 = arith.mulf %249, %252 : vector<8x1xf32>
    %254 = arith.mulf %251, %251 : vector<8x1xf32>
    %255 = arith.subf %253, %254 : vector<8x1xf32>
    %cst_97 = arith.constant 0.000000e+00 : f32
    %256 = vector.broadcast %cst_97 : f32 to vector<8x1xf32>
    %257 = arith.maximumf %255, %256 : vector<8x1xf32>
    %258 = vector.broadcast %251 : vector<8x1xf32> to vector<8x64xf32>
    %259 = arith.subf %242, %258 : vector<8x64xf32>
    %cst_98 = arith.constant 9.99999974E-6 : f32
    %260 = vector.broadcast %cst_98 : f32 to vector<8x1xf32>
    %261 = arith.addf %257, %260 : vector<8x1xf32>
    %262 = math.rsqrt %261 : vector<8x1xf32>
    %263 = vector.broadcast %262 : vector<8x1xf32> to vector<8x64xf32>
    %264 = arith.mulf %259, %263 : vector<8x64xf32>
    %265 = vector.broadcast %243 : vector<1x64xf32> to vector<8x64xf32>
    %266 = arith.mulf %264, %265 : vector<8x64xf32>
    %267 = vector.broadcast %244 : vector<1x64xf32> to vector<8x64xf32>
    %268 = arith.addf %266, %267 : vector<8x64xf32>
    %cst_99 = arith.constant 0.000000e+00 : f32
    %269 = vector.broadcast %cst_99 : f32 to vector<8x64xf32>
    %270 = arith.maximumf %268, %269 : vector<8x64xf32>
    %271 = arith.truncf %270 : vector<8x64xf32> to vector<8x64xbf16>
    %c640 = arith.constant 640 : index
    %c0_100 = arith.constant 0 : index
    %272 = vector.load %arg4[%c640, %c0_100] : memref<768x64xbf16, #tpu.memory_space<vmem>>, vector<64x64xbf16>
    %cst_101 = arith.constant dense<0.000000e+00> : vector<8x64xf32>
    %273 = tpu.matmul %271, %272, %cst_101 {dimension_numbers = #tpu.dot_dimension_numbers<[1], [0], [0], [1], [0, 0, 1, 1], [], []>} : vector<8x64xbf16>, vector<64x64xbf16>, vector<8x64xf32> -> vector<8x64xf32>
    %c27 = arith.constant 27 : index
    %c0_102 = arith.constant 0 : index
    %274 = vector.load %arg6[%c27, %c0_102] : memref<40x256xf32, #tpu.memory_space<vmem>>, vector<1x64xf32>
    %275 = vector.broadcast %274 : vector<1x64xf32> to vector<8x64xf32>
    %276 = arith.addf %273, %275 : vector<8x64xf32>
    %c28 = arith.constant 28 : index
    %c0_103 = arith.constant 0 : index
    %277 = vector.load %arg6[%c28, %c0_103] : memref<40x256xf32, #tpu.memory_space<vmem>>, vector<1x64xf32>
    %c29 = arith.constant 29 : index
    %c0_104 = arith.constant 0 : index
    %278 = vector.load %arg6[%c29, %c0_104] : memref<40x256xf32, #tpu.memory_space<vmem>>, vector<1x64xf32>
    %cst_105 = arith.constant dense<0.000000e+00> : vector<8xf32>
    %279 = vector.multi_reduction <add>, %276, %cst_105 [1] : vector<8x64xf32> to vector<8xf32>
    %280 = vector.shape_cast %279 : vector<8xf32> to vector<8x1xf32>
    %281 = arith.mulf %276, %276 : vector<8x64xf32>
    %cst_106 = arith.constant dense<0.000000e+00> : vector<8xf32>
    %282 = vector.multi_reduction <add>, %281, %cst_106 [1] : vector<8x64xf32> to vector<8xf32>
    %283 = vector.shape_cast %282 : vector<8xf32> to vector<8x1xf32>
    %cst_107 = arith.constant 1.562500e-02 : f32
    %284 = vector.broadcast %cst_107 : f32 to vector<8x1xf32>
    %285 = arith.mulf %280, %284 : vector<8x1xf32>
    %cst_108 = arith.constant 1.562500e-02 : f32
    %286 = vector.broadcast %cst_108 : f32 to vector<8x1xf32>
    %287 = arith.mulf %283, %286 : vector<8x1xf32>
    %288 = arith.mulf %285, %285 : vector<8x1xf32>
    %289 = arith.subf %287, %288 : vector<8x1xf32>
    %cst_109 = arith.constant 0.000000e+00 : f32
    %290 = vector.broadcast %cst_109 : f32 to vector<8x1xf32>
    %291 = arith.maximumf %289, %290 : vector<8x1xf32>
    %292 = vector.broadcast %285 : vector<8x1xf32> to vector<8x64xf32>
    %293 = arith.subf %276, %292 : vector<8x64xf32>
    %cst_110 = arith.constant 9.99999974E-6 : f32
    %294 = vector.broadcast %cst_110 : f32 to vector<8x1xf32>
    %295 = arith.addf %291, %294 : vector<8x1xf32>
    %296 = math.rsqrt %295 : vector<8x1xf32>
    %297 = vector.broadcast %296 : vector<8x1xf32> to vector<8x64xf32>
    %298 = arith.mulf %293, %297 : vector<8x64xf32>
    %299 = vector.broadcast %277 : vector<1x64xf32> to vector<8x64xf32>
    %300 = arith.mulf %298, %299 : vector<8x64xf32>
    %301 = vector.broadcast %278 : vector<1x64xf32> to vector<8x64xf32>
    %302 = arith.addf %300, %301 : vector<8x64xf32>
    %cst_111 = arith.constant 0.000000e+00 : f32
    %303 = vector.broadcast %cst_111 : f32 to vector<8x64xf32>
    %304 = arith.maximumf %302, %303 : vector<8x64xf32>
    %305 = arith.truncf %304 : vector<8x64xf32> to vector<8x64xbf16>
    %c704 = arith.constant 704 : index
    %c0_112 = arith.constant 0 : index
    %306 = vector.load %arg4[%c704, %c0_112] : memref<768x64xbf16, #tpu.memory_space<vmem>>, vector<64x64xbf16>
    %cst_113 = arith.constant dense<0.000000e+00> : vector<8x64xf32>
    %307 = tpu.matmul %305, %306, %cst_113 {dimension_numbers = #tpu.dot_dimension_numbers<[1], [0], [0], [1], [0, 0, 1, 1], [], []>} : vector<8x64xbf16>, vector<64x64xbf16>, vector<8x64xf32> -> vector<8x64xf32>
    %c30 = arith.constant 30 : index
    %c0_114 = arith.constant 0 : index
    %308 = vector.load %arg6[%c30, %c0_114] : memref<40x256xf32, #tpu.memory_space<vmem>>, vector<1x64xf32>
    %309 = vector.broadcast %308 : vector<1x64xf32> to vector<8x64xf32>
    %310 = arith.addf %307, %309 : vector<8x64xf32>
    %311 = arith.addf %234, %310 : vector<8x64xf32>
    %312 = vector.extract_strided_slice %3 {offsets = [0, 512], sizes = [8, 256], strides = [1, 1]} : vector<8x1024xf32> to vector<8x256xf32>
    %c32 = arith.constant 32 : index
    %c0_115 = arith.constant 0 : index
    %313 = vector.load %arg6[%c32, %c0_115] : memref<40x256xf32, #tpu.memory_space<vmem>>, vector<1x256xf32>
    %314 = vector.broadcast %313 : vector<1x256xf32> to vector<8x256xf32>
    %315 = arith.addf %312, %314 : vector<8x256xf32>
    %cst_116 = arith.constant 0.000000e+00 : f32
    %316 = vector.broadcast %cst_116 : f32 to vector<8x256xf32>
    %317 = arith.maximumf %315, %316 : vector<8x256xf32>
    %318 = vector.extract_strided_slice %3 {offsets = [0, 768], sizes = [8, 256], strides = [1, 1]} : vector<8x1024xf32> to vector<8x256xf32>
    %c33 = arith.constant 33 : index
    %c0_117 = arith.constant 0 : index
    %319 = vector.load %arg6[%c33, %c0_117] : memref<40x256xf32, #tpu.memory_space<vmem>>, vector<1x256xf32>
    %320 = vector.broadcast %319 : vector<1x256xf32> to vector<8x256xf32>
    %321 = arith.addf %318, %320 : vector<8x256xf32>
    %cst_118 = arith.constant 0.000000e+00 : f32
    %322 = vector.broadcast %cst_118 : f32 to vector<8x256xf32>
    %323 = arith.maximumf %321, %322 : vector<8x256xf32>
    %324 = arith.truncf %317 : vector<8x256xf32> to vector<8x256xbf16>
    %c0_119 = arith.constant 0 : index
    %c0_120 = arith.constant 0 : index
    %325 = vector.load %arg5[%c0_119, %c0_120] : memref<512x256xbf16, #tpu.memory_space<vmem>>, vector<256x256xbf16>
    %cst_121 = arith.constant dense<0.000000e+00> : vector<8x256xf32>
    %326 = tpu.matmul %324, %325, %cst_121 {dimension_numbers = #tpu.dot_dimension_numbers<[1], [0], [0], [1], [0, 0, 1, 1], [], []>} : vector<8x256xbf16>, vector<256x256xbf16>, vector<8x256xf32> -> vector<8x256xf32>
    %c34 = arith.constant 34 : index
    %c0_122 = arith.constant 0 : index
    %327 = vector.load %arg6[%c34, %c0_122] : memref<40x256xf32, #tpu.memory_space<vmem>>, vector<1x256xf32>
    %328 = vector.broadcast %327 : vector<1x256xf32> to vector<8x256xf32>
    %329 = arith.addf %326, %328 : vector<8x256xf32>
    %cst_123 = arith.constant 0.000000e+00 : f32
    %330 = vector.broadcast %cst_123 : f32 to vector<8x256xf32>
    %331 = arith.maximumf %329, %330 : vector<8x256xf32>
    %332 = arith.truncf %323 : vector<8x256xf32> to vector<8x256xbf16>
    %c256_124 = arith.constant 256 : index
    %c0_125 = arith.constant 0 : index
    %333 = vector.load %arg5[%c256_124, %c0_125] : memref<512x256xbf16, #tpu.memory_space<vmem>>, vector<256x256xbf16>
    %cst_126 = arith.constant dense<0.000000e+00> : vector<8x256xf32>
    %334 = tpu.matmul %332, %333, %cst_126 {dimension_numbers = #tpu.dot_dimension_numbers<[1], [0], [0], [1], [0, 0, 1, 1], [], []>} : vector<8x256xbf16>, vector<256x256xbf16>, vector<8x256xf32> -> vector<8x256xf32>
    %c35 = arith.constant 35 : index
    %c0_127 = arith.constant 0 : index
    %335 = vector.load %arg6[%c35, %c0_127] : memref<40x256xf32, #tpu.memory_space<vmem>>, vector<1x256xf32>
    %336 = vector.broadcast %335 : vector<1x256xf32> to vector<8x256xf32>
    %337 = arith.addf %334, %336 : vector<8x256xf32>
    %cst_128 = arith.constant 0.000000e+00 : f32
    %338 = vector.broadcast %cst_128 : f32 to vector<8x256xf32>
    %339 = arith.maximumf %337, %338 : vector<8x256xf32>
    %c36 = arith.constant 36 : index
    %c0_129 = arith.constant 0 : index
    %340 = vector.load %arg6[%c36, %c0_129] : memref<40x256xf32, #tpu.memory_space<vmem>>, vector<1x256xf32>
    %341 = vector.broadcast %340 : vector<1x256xf32> to vector<8x256xf32>
    %342 = arith.mulf %331, %341 : vector<8x256xf32>
    %cst_130 = arith.constant dense<0.000000e+00> : vector<8xf32>
    %343 = vector.multi_reduction <add>, %342, %cst_130 [1] : vector<8x256xf32> to vector<8xf32>
    %344 = vector.shape_cast %343 : vector<8xf32> to vector<8x1xf32>
    %c37 = arith.constant 37 : index
    %c0_131 = arith.constant 0 : index
    %345 = vector.load %arg6[%c37, %c0_131] : memref<40x256xf32, #tpu.memory_space<vmem>>, vector<1x256xf32>
    %346 = vector.broadcast %345 : vector<1x256xf32> to vector<8x256xf32>
    %347 = arith.mulf %339, %346 : vector<8x256xf32>
    %cst_132 = arith.constant dense<0.000000e+00> : vector<8xf32>
    %348 = vector.multi_reduction <add>, %347, %cst_132 [1] : vector<8x256xf32> to vector<8xf32>
    %349 = vector.shape_cast %348 : vector<8xf32> to vector<8x1xf32>
    %350 = arith.subf %344, %349 : vector<8x1xf32>
    %c38 = arith.constant 38 : index
    %c0_133 = arith.constant 0 : index
    %351 = vector.load %arg6[%c38, %c0_133] : memref<40x256xf32, #tpu.memory_space<vmem>>, vector<1x1xf32>
    %352 = vector.broadcast %351 : vector<1x1xf32> to vector<8x1xf32>
    %353 = arith.addf %350, %352 : vector<8x1xf32>
    %cst_134 = arith.constant 0.000000e+00 : f32
    %354 = vector.broadcast %cst_134 : f32 to vector<8x1xf32>
    %355 = arith.subf %354, %353 : vector<8x1xf32>
    %356 = math.tanh %311 : vector<8x64xf32>
    %357 = vector.extract_strided_slice %311 {offsets = [0, 0], sizes = [8, 6], strides = [1, 1]} : vector<8x64xf32> to vector<8x6xf32>
    %cst_135 = arith.constant 2.000000e+00 : f32
    %358 = math.log %cst_135 : f32
    %359 = vector.broadcast %358 : f32 to vector<8x6xf32>
    %360 = arith.subf %359, %357 : vector<8x6xf32>
    %cst_136 = arith.constant -2.000000e+00 : f32
    %361 = vector.broadcast %cst_136 : f32 to vector<8x6xf32>
    %362 = arith.mulf %361, %357 : vector<8x6xf32>
    %cst_137 = arith.constant 0.000000e+00 : f32
    %363 = vector.broadcast %cst_137 : f32 to vector<8x6xf32>
    %364 = arith.maximumf %362, %363 : vector<8x6xf32>
    %365 = math.absf %362 : vector<8x6xf32>
    %cst_138 = arith.constant 0.000000e+00 : f32
    %366 = vector.broadcast %cst_138 : f32 to vector<8x6xf32>
    %367 = arith.subf %366, %365 : vector<8x6xf32>
    %368 = math.exp %367 : vector<8x6xf32>
    %cst_139 = arith.constant 1.000000e+00 : f32
    %369 = vector.broadcast %cst_139 : f32 to vector<8x6xf32>
    %370 = arith.addf %369, %368 : vector<8x6xf32>
    %371 = math.log %370 : vector<8x6xf32>
    %372 = arith.addf %364, %371 : vector<8x6xf32>
    %373 = arith.subf %360, %372 : vector<8x6xf32>
    %cst_140 = arith.constant 2.000000e+00 : f32
    %374 = vector.broadcast %cst_140 : f32 to vector<8x6xf32>
    %375 = arith.mulf %374, %373 : vector<8x6xf32>
    %cst_141 = arith.constant dense<0.000000e+00> : vector<8xf32>
    %376 = vector.multi_reduction <add>, %375, %cst_141 [1] : vector<8x6xf32> to vector<8xf32>
    %377 = vector.shape_cast %376 : vector<8xf32> to vector<8x1xf32>
    %378 = arith.subf %355, %377 : vector<8x1xf32>
    %cst_142 = arith.constant 0.000000e+00 : f32
    %379 = vector.broadcast %cst_142 : f32 to vector<8x63xf32>
    %380 = tpu.concatenate %356, %378, %379 in 1 : vector<8x64xf32>, vector<8x1xf32>, vector<8x63xf32> -> vector<8x128xf32>
    %c0_143 = arith.constant 0 : index
    %c0_144 = arith.constant 0 : index
    %381 = vector.load %arg7[%c0_143, %c0_144] : memref<8x128xf32, #tpu.memory_space<vmem>>, vector<8x128xf32>
    tpu.vector_store %arg7[%c0_143, %c0_144], %380 {strides = array<i32>} : memref<8x128xf32, #tpu.memory_space<vmem>>, vector<8x128xf32>,
    return
  }
  func.func @transform_0(%arg0: i32) -> (i32, i32) {
    %c0_i32 = arith.constant 0 : i32
    %c0_i32_0 = arith.constant 0 : i32
    return %arg0, %c0_i32 : i32, i32
  }
  func.func @transform_1(%arg0: i32) -> (i32, i32) {
    %c0_i32 = arith.constant 0 : i32
    %c0_i32_0 = arith.constant 0 : i32
    return %arg0, %c0_i32 : i32, i32
  }
  func.func @transform_2(%arg0: i32) -> (i32, i32) {
    %c0_i32 = arith.constant 0 : i32
    %c0_i32_0 = arith.constant 0 : i32
    %c0_i32_1 = arith.constant 0 : i32
    return %c0_i32, %c0_i32_0 : i32, i32
  }
  func.func @transform_3(%arg0: i32) -> (i32, i32) {
    %c0_i32 = arith.constant 0 : i32
    %c0_i32_0 = arith.constant 0 : i32
    %c0_i32_1 = arith.constant 0 : i32
    return %c0_i32, %c0_i32_0 : i32, i32
  }
  func.func @transform_4(%arg0: i32) -> (i32, i32) {
    %c0_i32 = arith.constant 0 : i32
    %c0_i32_0 = arith.constant 0 : i32
    %c0_i32_1 = arith.constant 0 : i32
    return %c0_i32, %c0_i32_0 : i32, i32
  }
  func.func @transform_5(%arg0: i32) -> (i32, i32) {
    %c0_i32 = arith.constant 0 : i32
    %c0_i32_0 = arith.constant 0 : i32
    %c0_i32_1 = arith.constant 0 : i32
    return %c0_i32, %c0_i32_0 : i32, i32
  }
  func.func @transform_6(%arg0: i32) -> (i32, i32) {
    %c0_i32 = arith.constant 0 : i32
    %c0_i32_0 = arith.constant 0 : i32
    return %arg0, %c0_i32 : i32, i32
  }
}

module attributes {stable_mosaic.version = 11 : i64} {
  func.func @_flow_policy_kernel(%arg0: i32, %arg1: memref<8x17xbf16, #tpu.memory_space<vmem>>, %arg2: memref<8x64xf32, #tpu.memory_space<vmem>>, %arg3: memref<17x1024xbf16, #tpu.memory_space<vmem>>, %arg4: memref<768x64xbf16, #tpu.memory_space<vmem>>, %arg5: memref<512x256xbf16, #tpu.memory_space<vmem>>, %arg6: memref<40x256xf32, #tpu.memory_space<vmem>>, %arg7: memref<8x128xf32, #tpu.memory_space<vmem>>) attributes {dimension_semantics = [#tpu.dimension_semantics<parallel>], iteration_bounds = array<i64: 2>, scalar_prefetch = 0 : i64, scratch_operands = 0 : i64, tpu.core_type = #tpu.core_type<tc>, window_params = [{transform_indices = @transform_0, window_bounds = array<i64: 8, 17>}, {transform_indices = @transform_1, window_bounds = array<i64: 8, 64>}, {pipeline_mode = #tpu.pipeline_mode<synchronous>, transform_indices = @transform_2, window_bounds = array<i64: 17, 1024>}, {pipeline_mode = #tpu.pipeline_mode<synchronous>, transform_indices = @transform_3, window_bounds = array<i64: 768, 64>}, {pipeline_mode = #tpu.pipeline_mode<synchronous>, transform_indices = @transform_4, window_bounds = array<i64: 512, 256>}, {pipeline_mode = #tpu.pipeline_mode<synchronous>, transform_indices = @transform_5, window_bounds = array<i64: 40, 256>}, {transform_indices = @transform_6, window_bounds = array<i64: 8, 128>}]} {
    %c0 = arith.constant 0 : index
    %c0_0 = arith.constant 0 : index
    %0 = vector.load %arg1[%c0, %c0_0] : memref<8x17xbf16, #tpu.memory_space<vmem>>, vector<8x17xbf16>
    %c0_1 = arith.constant 0 : index
    %c0_2 = arith.constant 0 : index
    %1 = vector.load %arg2[%c0_1, %c0_2] : memref<8x64xf32, #tpu.memory_space<vmem>>, vector<8x64xf32>
    %c0_3 = arith.constant 0 : index
    %c0_4 = arith.constant 0 : index
    %2 = vector.load %arg3[%c0_3, %c0_4] : memref<17x1024xbf16, #tpu.memory_space<vmem>>, vector<17x1024xbf16>
    %cst = arith.constant dense<0.000000e+00> : vector<8x1024xf32>
    %3 = tpu.matmul %0, %2, %cst {dimension_numbers = #tpu.dot_dimension_numbers<[1], [0], [0], [1], [0, 0, 1, 1], [], []>} : vector<8x17xbf16>, vector<17x1024xbf16>, vector<8x1024xf32> -> vector<8x1024xf32>
    %4 = arith.truncf %1 : vector<8x64xf32> to vector<8x64xbf16>
    %c0_5 = arith.constant 0 : index
    %c0_6 = arith.constant 0 : index
    %5 = vector.load %arg4[%c0_5, %c0_6] : memref<768x64xbf16, #tpu.memory_space<vmem>>, vector<64x64xbf16>
    %cst_7 = arith.constant dense<0.000000e+00> : vector<8x64xf32>
    %6 = tpu.matmul %4, %5, %cst_7 {dimension_numbers = #tpu.dot_dimension_numbers<[1], [0], [0], [1], [0, 0, 1, 1], [], []>} : vector<8x64xbf16>, vector<64x64xbf16>, vector<8x64xf32> -> vector<8x64xf32>
    %7 = vector.extract_strided_slice %3 {offsets = [0, 0], sizes = [8, 64], strides = [1, 1]} : vector<8x1024xf32> to vector<8x64xf32>
    %8 = arith.addf %6, %7 : vector<8x64xf32>
    %c0_8 = arith.constant 0 : index
    %c0_9 = arith.constant 0 : index
    %9 = vector.load %arg6[%c0_8, %c0_9] : memref<40x256xf32, #tpu.memory_space<vmem>>, vector<1x64xf32>
    %10 = vector.broadcast %9 : vector<1x64xf32> to vector<8x64xf32>
    %11 = arith.addf %8, %10 : vector<8x64xf32>
    %c1 = arith.constant 1 : index
    %c0_10 = arith.constant 0 : index
    %12 = vector.load %arg6[%c1, %c0_10] : memref<40x256xf32, #tpu.memory_space<vmem>>, vector<1x64xf32>
    %c2 = arith.constant 2 : index
    %c0_11 = arith.constant 0 : index
    %13 = vector.load %arg6[%c2, %c0_11] : memref<40x256xf32, #tpu.memory_space<vmem>>, vector<1x64xf32>
    %cst_12 = arith.constant dense<0.000000e+00> : vector<8xf32>
    %14 = vector.multi_reduction <add>, %11, %cst_12 [1] : vector<8x64xf32> to vector<8xf32>
    %15 = vector.shape_cast %14 : vector<8xf32> to vector<8x1xf32>
    %16 = arith.mulf %11, %11 : vector<8x64xf32>
    %cst_13 = arith.constant dense<0.000000e+00> : vector<8xf32>
    %17 = vector.multi_reduction <add>, %16, %cst_13 [1] : vector<8x64xf32> to vector<8xf32>
    %18 = vector.shape_cast %17 : vector<8xf32> to vector<8x1xf32>
    %cst_14 = arith.constant 1.562500e-02 : f32
    %19 = vector.broadcast %cst_14 : f32 to vector<8x1xf32>
    %20 = arith.mulf %15, %19 : vector<8x1xf32>
    %cst_15 = arith.constant 1.562500e-02 : f32
    %21 = vector.broadcast %cst_15 : f32 to vector<8x1xf32>
    %22 = arith.mulf %18, %21 : vector<8x1xf32>
    %23 = arith.mulf %20, %20 : vector<8x1xf32>
    %24 = arith.subf %22, %23 : vector<8x1xf32>
    %cst_16 = arith.constant 0.000000e+00 : f32
    %25 = vector.broadcast %cst_16 : f32 to vector<8x1xf32>
    %26 = arith.maximumf %24, %25 : vector<8x1xf32>
    %27 = vector.broadcast %20 : vector<8x1xf32> to vector<8x64xf32>
    %28 = arith.subf %11, %27 : vector<8x64xf32>
    %cst_17 = arith.constant 9.99999974E-6 : f32
    %29 = vector.broadcast %cst_17 : f32 to vector<8x1xf32>
    %30 = arith.addf %26, %29 : vector<8x1xf32>
    %31 = math.rsqrt %30 : vector<8x1xf32>
    %32 = vector.broadcast %31 : vector<8x1xf32> to vector<8x64xf32>
    %33 = arith.mulf %28, %32 : vector<8x64xf32>
    %34 = vector.broadcast %12 : vector<1x64xf32> to vector<8x64xf32>
    %35 = arith.mulf %33, %34 : vector<8x64xf32>
    %36 = vector.broadcast %13 : vector<1x64xf32> to vector<8x64xf32>
    %37 = arith.addf %35, %36 : vector<8x64xf32>
    %cst_18 = arith.constant 0.000000e+00 : f32
    %38 = vector.broadcast %cst_18 : f32 to vector<8x64xf32>
    %39 = arith.maximumf %37, %38 : vector<8x64xf32>
    %40 = arith.truncf %39 : vector<8x64xf32> to vector<8x64xbf16>
    %c64 = arith.constant 64 : index
    %c0_19 = arith.constant 0 : index
    %41 = vector.load %arg4[%c64, %c0_19] : memref<768x64xbf16, #tpu.memory_space<vmem>>, vector<64x64xbf16>
    %cst_20 = arith.constant dense<0.000000e+00> : vector<8x64xf32>
    %42 = tpu.matmul %40, %41, %cst_20 {dimension_numbers = #tpu.dot_dimension_numbers<[1], [0], [0], [1], [0, 0, 1, 1], [], []>} : vector<8x64xbf16>, vector<64x64xbf16>, vector<8x64xf32> -> vector<8x64xf32>
    %c3 = arith.constant 3 : index
    %c0_21 = arith.constant 0 : index
    %43 = vector.load %arg6[%c3, %c0_21] : memref<40x256xf32, #tpu.memory_space<vmem>>, vector<1x64xf32>
    %44 = vector.broadcast %43 : vector<1x64xf32> to vector<8x64xf32>
    %45 = arith.addf %42, %44 : vector<8x64xf32>
    %c4 = arith.constant 4 : index
    %c0_22 = arith.constant 0 : index
    %46 = vector.load %arg6[%c4, %c0_22] : memref<40x256xf32, #tpu.memory_space<vmem>>, vector<1x64xf32>
    %c5 = arith.constant 5 : index
    %c0_23 = arith.constant 0 : index
    %47 = vector.load %arg6[%c5, %c0_23] : memref<40x256xf32, #tpu.memory_space<vmem>>, vector<1x64xf32>
    %cst_24 = arith.constant dense<0.000000e+00> : vector<8xf32>
    %48 = vector.multi_reduction <add>, %45, %cst_24 [1] : vector<8x64xf32> to vector<8xf32>
    %49 = vector.shape_cast %48 : vector<8xf32> to vector<8x1xf32>
    %50 = arith.mulf %45, %45 : vector<8x64xf32>
    %cst_25 = arith.constant dense<0.000000e+00> : vector<8xf32>
    %51 = vector.multi_reduction <add>, %50, %cst_25 [1] : vector<8x64xf32> to vector<8xf32>
    %52 = vector.shape_cast %51 : vector<8xf32> to vector<8x1xf32>
    %cst_26 = arith.constant 1.562500e-02 : f32
    %53 = vector.broadcast %cst_26 : f32 to vector<8x1xf32>
    %54 = arith.mulf %49, %53 : vector<8x1xf32>
    %cst_27 = arith.constant 1.562500e-02 : f32
    %55 = vector.broadcast %cst_27 : f32 to vector<8x1xf32>
    %56 = arith.mulf %52, %55 : vector<8x1xf32>
    %57 = arith.mulf %54, %54 : vector<8x1xf32>
    %58 = arith.subf %56, %57 : vector<8x1xf32>
    %cst_28 = arith.constant 0.000000e+00 : f32
    %59 = vector.broadcast %cst_28 : f32 to vector<8x1xf32>
    %60 = arith.maximumf %58, %59 : vector<8x1xf32>
    %61 = vector.broadcast %54 : vector<8x1xf32> to vector<8x64xf32>
    %62 = arith.subf %45, %61 : vector<8x64xf32>
    %cst_29 = arith.constant 9.99999974E-6 : f32
    %63 = vector.broadcast %cst_29 : f32 to vector<8x1xf32>
    %64 = arith.addf %60, %63 : vector<8x1xf32>
    %65 = math.rsqrt %64 : vector<8x1xf32>
    %66 = vector.broadcast %65 : vector<8x1xf32> to vector<8x64xf32>
    %67 = arith.mulf %62, %66 : vector<8x64xf32>
    %68 = vector.broadcast %46 : vector<1x64xf32> to vector<8x64xf32>
    %69 = arith.mulf %67, %68 : vector<8x64xf32>
    %70 = vector.broadcast %47 : vector<1x64xf32> to vector<8x64xf32>
    %71 = arith.addf %69, %70 : vector<8x64xf32>
    %cst_30 = arith.constant 0.000000e+00 : f32
    %72 = vector.broadcast %cst_30 : f32 to vector<8x64xf32>
    %73 = arith.maximumf %71, %72 : vector<8x64xf32>
    %74 = arith.truncf %73 : vector<8x64xf32> to vector<8x64xbf16>
    %c128 = arith.constant 128 : index
    %c0_31 = arith.constant 0 : index
    %75 = vector.load %arg4[%c128, %c0_31] : memref<768x64xbf16, #tpu.memory_space<vmem>>, vector<64x64xbf16>
    %cst_32 = arith.constant dense<0.000000e+00> : vector<8x64xf32>
    %76 = tpu.matmul %74, %75, %cst_32 {dimension_numbers = #tpu.dot_dimension_numbers<[1], [0], [0], [1], [0, 0, 1, 1], [], []>} : vector<8x64xbf16>, vector<64x64xbf16>, vector<8x64xf32> -> vector<8x64xf32>
    %c6 = arith.constant 6 : index
    %c0_33 = arith.constant 0 : index
    %77 = vector.load %arg6[%c6, %c0_33] : memref<40x256xf32, #tpu.memory_space<vmem>>, vector<1x64xf32>
    %78 = vector.broadcast %77 : vector<1x64xf32> to vector<8x64xf32>
    %79 = arith.addf %76, %78 : vector<8x64xf32>
    %80 = arith.addf %1, %79 : vector<8x64xf32>
    %81 = arith.truncf %80 : vector<8x64xf32> to vector<8x64xbf16>
    %c192 = arith.constant 192 : index
    %c0_34 = arith.constant 0 : index
    %82 = vector.load %arg4[%c192, %c0_34] : memref<768x64xbf16, #tpu.memory_space<vmem>>, vector<64x64xbf16>
    %cst_35 = arith.constant dense<0.000000e+00> : vector<8x64xf32>
    %83 = tpu.matmul %81, %82, %cst_35 {dimension_numbers = #tpu.dot_dimension_numbers<[1], [0], [0], [1], [0, 0, 1, 1], [], []>} : vector<8x64xbf16>, vector<64x64xbf16>, vector<8x64xf32> -> vector<8x64xf32>
    %84 = vector.extract_strided_slice %3 {offsets = [0, 128], sizes = [8, 64], strides = [1, 1]} : vector<8x1024xf32> to vector<8x64xf32>
    %85 = arith.addf %83, %84 : vector<8x64xf32>
    %c8 = arith.constant 8 : index
    %c0_36 = arith.constant 0 : index
    %86 = vector.load %arg6[%c8, %c0_36] : memref<40x256xf32, #tpu.memory_space<vmem>>, vector<1x64xf32>
    %87 = vector.broadcast %86 : vector<1x64xf32> to vector<8x64xf32>
    %88 = arith.addf %85, %87 : vector<8x64xf32>
    %c9 = arith.constant 9 : index
    %c0_37 = arith.constant 0 : index
    %89 = vector.load %arg6[%c9, %c0_37] : memref<40x256xf32, #tpu.memory_space<vmem>>, vector<1x64xf32>
    %c10 = arith.constant 10 : index
    %c0_38 = arith.constant 0 : index
    %90 = vector.load %arg6[%c10, %c0_38] : memref<40x256xf32, #tpu.memory_space<vmem>>, vector<1x64xf32>
    %cst_39 = arith.constant dense<0.000000e+00> : vector<8xf32>
    %91 = vector.multi_reduction <add>, %88, %cst_39 [1] : vector<8x64xf32> to vector<8xf32>
    %92 = vector.shape_cast %91 : vector<8xf32> to vector<8x1xf32>
    %93 = arith.mulf %88, %88 : vector<8x64xf32>
    %cst_40 = arith.constant dense<0.000000e+00> : vector<8xf32>
    %94 = vector.multi_reduction <add>, %93, %cst_40 [1] : vector<8x64xf32> to vector<8xf32>
    %95 = vector.shape_cast %94 : vector<8xf32> to vector<8x1xf32>
    %cst_41 = arith.constant 1.562500e-02 : f32
    %96 = vector.broadcast %cst_41 : f32 to vector<8x1xf32>
    %97 = arith.mulf %92, %96 : vector<8x1xf32>
    %cst_42 = arith.constant 1.562500e-02 : f32
    %98 = vector.broadcast %cst_42 : f32 to vector<8x1xf32>
    %99 = arith.mulf %95, %98 : vector<8x1xf32>
    %100 = arith.mulf %97, %97 : vector<8x1xf32>
    %101 = arith.subf %99, %100 : vector<8x1xf32>
    %cst_43 = arith.constant 0.000000e+00 : f32
    %102 = vector.broadcast %cst_43 : f32 to vector<8x1xf32>
    %103 = arith.maximumf %101, %102 : vector<8x1xf32>
    %104 = vector.broadcast %97 : vector<8x1xf32> to vector<8x64xf32>
    %105 = arith.subf %88, %104 : vector<8x64xf32>
    %cst_44 = arith.constant 9.99999974E-6 : f32
    %106 = vector.broadcast %cst_44 : f32 to vector<8x1xf32>
    %107 = arith.addf %103, %106 : vector<8x1xf32>
    %108 = math.rsqrt %107 : vector<8x1xf32>
    %109 = vector.broadcast %108 : vector<8x1xf32> to vector<8x64xf32>
    %110 = arith.mulf %105, %109 : vector<8x64xf32>
    %111 = vector.broadcast %89 : vector<1x64xf32> to vector<8x64xf32>
    %112 = arith.mulf %110, %111 : vector<8x64xf32>
    %113 = vector.broadcast %90 : vector<1x64xf32> to vector<8x64xf32>
    %114 = arith.addf %112, %113 : vector<8x64xf32>
    %cst_45 = arith.constant 0.000000e+00 : f32
    %115 = vector.broadcast %cst_45 : f32 to vector<8x64xf32>
    %116 = arith.maximumf %114, %115 : vector<8x64xf32>
    %117 = arith.truncf %116 : vector<8x64xf32> to vector<8x64xbf16>
    %c256 = arith.constant 256 : index
    %c0_46 = arith.constant 0 : index
    %118 = vector.load %arg4[%c256, %c0_46] : memref<768x64xbf16, #tpu.memory_space<vmem>>, vector<64x64xbf16>
    %cst_47 = arith.constant dense<0.000000e+00> : vector<8x64xf32>
    %119 = tpu.matmul %117, %118, %cst_47 {dimension_numbers = #tpu.dot_dimension_numbers<[1], [0], [0], [1], [0, 0, 1, 1], [], []>} : vector<8x64xbf16>, vector<64x64xbf16>, vector<8x64xf32> -> vector<8x64xf32>
    %c11 = arith.constant 11 : index
    %c0_48 = arith.constant 0 : index
    %120 = vector.load %arg6[%c11, %c0_48] : memref<40x256xf32, #tpu.memory_space<vmem>>, vector<1x64xf32>
    %121 = vector.broadcast %120 : vector<1x64xf32> to vector<8x64xf32>
    %122 = arith.addf %119, %121 : vector<8x64xf32>
    %c12 = arith.constant 12 : index
    %c0_49 = arith.constant 0 : index
    %123 = vector.load %arg6[%c12, %c0_49] : memref<40x256xf32, #tpu.memory_space<vmem>>, vector<1x64xf32>
    %c13 = arith.constant 13 : index
    %c0_50 = arith.constant 0 : index
    %124 = vector.load %arg6[%c13, %c0_50] : memref<40x256xf32, #tpu.memory_space<vmem>>, vector<1x64xf32>
    %cst_51 = arith.constant dense<0.000000e+00> : vector<8xf32>
    %125 = vector.multi_reduction <add>, %122, %cst_51 [1] : vector<8x64xf32> to vector<8xf32>
    %126 = vector.shape_cast %125 : vector<8xf32> to vector<8x1xf32>
    %127 = arith.mulf %122, %122 : vector<8x64xf32>
    %cst_52 = arith.constant dense<0.000000e+00> : vector<8xf32>
    %128 = vector.multi_reduction <add>, %127, %cst_52 [1] : vector<8x64xf32> to vector<8xf32>
    %129 = vector.shape_cast %128 : vector<8xf32> to vector<8x1xf32>
    %cst_53 = arith.constant 1.562500e-02 : f32
    %130 = vector.broadcast %cst_53 : f32 to vector<8x1xf32>
    %131 = arith.mulf %126, %130 : vector<8x1xf32>
    %cst_54 = arith.constant 1.562500e-02 : f32
    %132 = vector.broadcast %cst_54 : f32 to vector<8x1xf32>
    %133 = arith.mulf %129, %132 : vector<8x1xf32>
    %134 = arith.mulf %131, %131 : vector<8x1xf32>
    %135 = arith.subf %133, %134 : vector<8x1xf32>
    %cst_55 = arith.constant 0.000000e+00 : f32
    %136 = vector.broadcast %cst_55 : f32 to vector<8x1xf32>
    %137 = arith.maximumf %135, %136 : vector<8x1xf32>
    %138 = vector.broadcast %131 : vector<8x1xf32> to vector<8x64xf32>
    %139 = arith.subf %122, %138 : vector<8x64xf32>
    %cst_56 = arith.constant 9.99999974E-6 : f32
    %140 = vector.broadcast %cst_56 : f32 to vector<8x1xf32>
    %141 = arith.addf %137, %140 : vector<8x1xf32>
    %142 = math.rsqrt %141 : vector<8x1xf32>
    %143 = vector.broadcast %142 : vector<8x1xf32> to vector<8x64xf32>
    %144 = arith.mulf %139, %143 : vector<8x64xf32>
    %145 = vector.broadcast %123 : vector<1x64xf32> to vector<8x64xf32>
    %146 = arith.mulf %144, %145 : vector<8x64xf32>
    %147 = vector.broadcast %124 : vector<1x64xf32> to vector<8x64xf32>
    %148 = arith.addf %146, %147 : vector<8x64xf32>
    %cst_57 = arith.constant 0.000000e+00 : f32
    %149 = vector.broadcast %cst_57 : f32 to vector<8x64xf32>
    %150 = arith.maximumf %148, %149 : vector<8x64xf32>
    %151 = arith.truncf %150 : vector<8x64xf32> to vector<8x64xbf16>
    %c320 = arith.constant 320 : index
    %c0_58 = arith.constant 0 : index
    %152 = vector.load %arg4[%c320, %c0_58] : memref<768x64xbf16, #tpu.memory_space<vmem>>, vector<64x64xbf16>
    %cst_59 = arith.constant dense<0.000000e+00> : vector<8x64xf32>
    %153 = tpu.matmul %151, %152, %cst_59 {dimension_numbers = #tpu.dot_dimension_numbers<[1], [0], [0], [1], [0, 0, 1, 1], [], []>} : vector<8x64xbf16>, vector<64x64xbf16>, vector<8x64xf32> -> vector<8x64xf32>
    %c14 = arith.constant 14 : index
    %c0_60 = arith.constant 0 : index
    %154 = vector.load %arg6[%c14, %c0_60] : memref<40x256xf32, #tpu.memory_space<vmem>>, vector<1x64xf32>
    %155 = vector.broadcast %154 : vector<1x64xf32> to vector<8x64xf32>
    %156 = arith.addf %153, %155 : vector<8x64xf32>
    %157 = arith.addf %80, %156 : vector<8x64xf32>
    %158 = arith.truncf %157 : vector<8x64xf32> to vector<8x64xbf16>
    %c384 = arith.constant 384 : index
    %c0_61 = arith.constant 0 : index
    %159 = vector.load %arg4[%c384, %c0_61] : memref<768x64xbf16, #tpu.memory_space<vmem>>, vector<64x64xbf16>
    %cst_62 = arith.constant dense<0.000000e+00> : vector<8x64xf32>
    %160 = tpu.matmul %158, %159, %cst_62 {dimension_numbers = #tpu.dot_dimension_numbers<[1], [0], [0], [1], [0, 0, 1, 1], [], []>} : vector<8x64xbf16>, vector<64x64xbf16>, vector<8x64xf32> -> vector<8x64xf32>
    %161 = vector.extract_strided_slice %3 {offsets = [0, 256], sizes = [8, 64], strides = [1, 1]} : vector<8x1024xf32> to vector<8x64xf32>
    %162 = arith.addf %160, %161 : vector<8x64xf32>
    %c16 = arith.constant 16 : index
    %c0_63 = arith.constant 0 : index
    %163 = vector.load %arg6[%c16, %c0_63] : memref<40x256xf32, #tpu.memory_space<vmem>>, vector<1x64xf32>
    %164 = vector.broadcast %163 : vector<1x64xf32> to vector<8x64xf32>
    %165 = arith.addf %162, %164 : vector<8x64xf32>
    %c17 = arith.constant 17 : index
    %c0_64 = arith.constant 0 : index
    %166 = vector.load %arg6[%c17, %c0_64] : memref<40x256xf32, #tpu.memory_space<vmem>>, vector<1x64xf32>
    %c18 = arith.constant 18 : index
    %c0_65 = arith.constant 0 : index
    %167 = vector.load %arg6[%c18, %c0_65] : memref<40x256xf32, #tpu.memory_space<vmem>>, vector<1x64xf32>
    %cst_66 = arith.constant dense<0.000000e+00> : vector<8xf32>
    %168 = vector.multi_reduction <add>, %165, %cst_66 [1] : vector<8x64xf32> to vector<8xf32>
    %169 = vector.shape_cast %168 : vector<8xf32> to vector<8x1xf32>
    %170 = arith.mulf %165, %165 : vector<8x64xf32>
    %cst_67 = arith.constant dense<0.000000e+00> : vector<8xf32>
    %171 = vector.multi_reduction <add>, %170, %cst_67 [1] : vector<8x64xf32> to vector<8xf32>
    %172 = vector.shape_cast %171 : vector<8xf32> to vector<8x1xf32>
    %cst_68 = arith.constant 1.562500e-02 : f32
    %173 = vector.broadcast %cst_68 : f32 to vector<8x1xf32>
    %174 = arith.mulf %169, %173 : vector<8x1xf32>
    %cst_69 = arith.constant 1.562500e-02 : f32
    %175 = vector.broadcast %cst_69 : f32 to vector<8x1xf32>
    %176 = arith.mulf %172, %175 : vector<8x1xf32>
    %177 = arith.mulf %174, %174 : vector<8x1xf32>
    %178 = arith.subf %176, %177 : vector<8x1xf32>
    %cst_70 = arith.constant 0.000000e+00 : f32
    %179 = vector.broadcast %cst_70 : f32 to vector<8x1xf32>
    %180 = arith.maximumf %178, %179 : vector<8x1xf32>
    %181 = vector.broadcast %174 : vector<8x1xf32> to vector<8x64xf32>
    %182 = arith.subf %165, %181 : vector<8x64xf32>
    %cst_71 = arith.constant 9.99999974E-6 : f32
    %183 = vector.broadcast %cst_71 : f32 to vector<8x1xf32>
    %184 = arith.addf %180, %183 : vector<8x1xf32>
    %185 = math.rsqrt %184 : vector<8x1xf32>
    %186 = vector.broadcast %185 : vector<8x1xf32> to vector<8x64xf32>
    %187 = arith.mulf %182, %186 : vector<8x64xf32>
    %188 = vector.broadcast %166 : vector<1x64xf32> to vector<8x64xf32>
    %189 = arith.mulf %187, %188 : vector<8x64xf32>
    %190 = vector.broadcast %167 : vector<1x64xf32> to vector<8x64xf32>
    %191 = arith.addf %189, %190 : vector<8x64xf32>
    %cst_72 = arith.constant 0.000000e+00 : f32
    %192 = vector.broadcast %cst_72 : f32 to vector<8x64xf32>
    %193 = arith.maximumf %191, %192 : vector<8x64xf32>
    %194 = arith.truncf %193 : vector<8x64xf32> to vector<8x64xbf16>
    %c448 = arith.constant 448 : index
    %c0_73 = arith.constant 0 : index
    %195 = vector.load %arg4[%c448, %c0_73] : memref<768x64xbf16, #tpu.memory_space<vmem>>, vector<64x64xbf16>
    %cst_74 = arith.constant dense<0.000000e+00> : vector<8x64xf32>
    %196 = tpu.matmul %194, %195, %cst_74 {dimension_numbers = #tpu.dot_dimension_numbers<[1], [0], [0], [1], [0, 0, 1, 1], [], []>} : vector<8x64xbf16>, vector<64x64xbf16>, vector<8x64xf32> -> vector<8x64xf32>
    %c19 = arith.constant 19 : index
    %c0_75 = arith.constant 0 : index
    %197 = vector.load %arg6[%c19, %c0_75] : memref<40x256xf32, #tpu.memory_space<vmem>>, vector<1x64xf32>
    %198 = vector.broadcast %197 : vector<1x64xf32> to vector<8x64xf32>
    %199 = arith.addf %196, %198 : vector<8x64xf32>
    %c20 = arith.constant 20 : index
    %c0_76 = arith.constant 0 : index
    %200 = vector.load %arg6[%c20, %c0_76] : memref<40x256xf32, #tpu.memory_space<vmem>>, vector<1x64xf32>
    %c21 = arith.constant 21 : index
    %c0_77 = arith.constant 0 : index
    %201 = vector.load %arg6[%c21, %c0_77] : memref<40x256xf32, #tpu.memory_space<vmem>>, vector<1x64xf32>
    %cst_78 = arith.constant dense<0.000000e+00> : vector<8xf32>
    %202 = vector.multi_reduction <add>, %199, %cst_78 [1] : vector<8x64xf32> to vector<8xf32>
    %203 = vector.shape_cast %202 : vector<8xf32> to vector<8x1xf32>
    %204 = arith.mulf %199, %199 : vector<8x64xf32>
    %cst_79 = arith.constant dense<0.000000e+00> : vector<8xf32>
    %205 = vector.multi_reduction <add>, %204, %cst_79 [1] : vector<8x64xf32> to vector<8xf32>
    %206 = vector.shape_cast %205 : vector<8xf32> to vector<8x1xf32>
    %cst_80 = arith.constant 1.562500e-02 : f32
    %207 = vector.broadcast %cst_80 : f32 to vector<8x1xf32>
    %208 = arith.mulf %203, %207 : vector<8x1xf32>
    %cst_81 = arith.constant 1.562500e-02 : f32
    %209 = vector.broadcast %cst_81 : f32 to vector<8x1xf32>
    %210 = arith.mulf %206, %209 : vector<8x1xf32>
    %211 = arith.mulf %208, %208 : vector<8x1xf32>
    %212 = arith.subf %210, %211 : vector<8x1xf32>
    %cst_82 = arith.constant 0.000000e+00 : f32
    %213 = vector.broadcast %cst_82 : f32 to vector<8x1xf32>
    %214 = arith.maximumf %212, %213 : vector<8x1xf32>
    %215 = vector.broadcast %208 : vector<8x1xf32> to vector<8x64xf32>
    %216 = arith.subf %199, %215 : vector<8x64xf32>
    %cst_83 = arith.constant 9.99999974E-6 : f32
    %217 = vector.broadcast %cst_83 : f32 to vector<8x1xf32>
    %218 = arith.addf %214, %217 : vector<8x1xf32>
    %219 = math.rsqrt %218 : vector<8x1xf32>
    %220 = vector.broadcast %219 : vector<8x1xf32> to vector<8x64xf32>
    %221 = arith.mulf %216, %220 : vector<8x64xf32>
    %222 = vector.broadcast %200 : vector<1x64xf32> to vector<8x64xf32>
    %223 = arith.mulf %221, %222 : vector<8x64xf32>
    %224 = vector.broadcast %201 : vector<1x64xf32> to vector<8x64xf32>
    %225 = arith.addf %223, %224 : vector<8x64xf32>
    %cst_84 = arith.constant 0.000000e+00 : f32
    %226 = vector.broadcast %cst_84 : f32 to vector<8x64xf32>
    %227 = arith.maximumf %225, %226 : vector<8x64xf32>
    %228 = arith.truncf %227 : vector<8x64xf32> to vector<8x64xbf16>
    %c512 = arith.constant 512 : index
    %c0_85 = arith.constant 0 : index
    %229 = vector.load %arg4[%c512, %c0_85] : memref<768x64xbf16, #tpu.memory_space<vmem>>, vector<64x64xbf16>
    %cst_86 = arith.constant dense<0.000000e+00> : vector<8x64xf32>
    %230 = tpu.matmul %228, %229, %cst_86 {dimension_numbers = #tpu.dot_dimension_numbers<[1], [0], [0], [1], [0, 0, 1, 1], [], []>} : vector<8x64xbf16>, vector<64x64xbf16>, vector<8x64xf32> -> vector<8x64xf32>
    %c22 = arith.constant 22 : index
    %c0_87 = arith.constant 0 : index
    %231 = vector.load %arg6[%c22, %c0_87] : memref<40x256xf32, #tpu.memory_space<vmem>>, vector<1x64xf32>
    %232 = vector.broadcast %231 : vector<1x64xf32> to vector<8x64xf32>
    %233 = arith.addf %230, %232 : vector<8x64xf32>
    %234 = arith.addf %157, %233 : vector<8x64xf32>
    %235 = arith.truncf %234 : vector<8x64xf32> to vector<8x64xbf16>
    %c576 = arith.constant 576 : index
    %c0_88 = arith.constant 0 : index
    %236 = vector.load %arg4[%c576, %c0_88] : memref<768x64xbf16, #tpu.memory_space<vmem>>, vector<64x64xbf16>
    %cst_89 = arith.constant dense<0.000000e+00> : vector<8x64xf32>
    %237 = tpu.matmul %235, %236, %cst_89 {dimension_numbers = #tpu.dot_dimension_numbers<[1], [0], [0], [1], [0, 0, 1, 1], [], []>} : vector<8x64xbf16>, vector<64x64xbf16>, vector<8x64xf32> -> vector<8x64xf32>
    %238 = vector.extract_strided_slice %3 {offsets = [0, 384], sizes = [8, 64], strides = [1, 1]} : vector<8x1024xf32> to vector<8x64xf32>
    %239 = arith.addf %237, %238 : vector<8x64xf32>
    %c24 = arith.constant 24 : index
    %c0_90 = arith.constant 0 : index
    %240 = vector.load %arg6[%c24, %c0_90] : memref<40x256xf32, #tpu.memory_space<vmem>>, vector<1x64xf32>
    %241 = vector.broadcast %240 : vector<1x64xf32> to vector<8x64xf32>
    %242 = arith.addf %239, %241 : vector<8x64xf32>
    %c25 = arith.constant 25 : index
    %c0_91 = arith.constant 0 : index
    %243 = vector.load %arg6[%c25, %c0_91] : memref<40x256xf32, #tpu.memory_space<vmem>>, vector<1x64xf32>
    %c26 = arith.constant 26 : index
    %c0_92 = arith.constant 0 : index
    %244 = vector.load %arg6[%c26, %c0_92] : memref<40x256xf32, #tpu.memory_space<vmem>>, vector<1x64xf32>
    %cst_93 = arith.constant dense<0.000000e+00> : vector<8xf32>
    %245 = vector.multi_reduction <add>, %242, %cst_93 [1] : vector<8x64xf32> to vector<8xf32>
    %246 = vector.shape_cast %245 : vector<8xf32> to vector<8x1xf32>
    %247 = arith.mulf %242, %242 : vector<8x64xf32>
    %cst_94 = arith.constant dense<0.000000e+00> : vector<8xf32>
    %248 = vector.multi_reduction <add>, %247, %cst_94 [1] : vector<8x64xf32> to vector<8xf32>
    %249 = vector.shape_cast %248 : vector<8xf32> to vector<8x1xf32>
    %cst_95 = arith.constant 1.562500e-02 : f32
    %250 = vector.broadcast %cst_95 : f32 to vector<8x1xf32>
    %251 = arith.mulf %246, %250 : vector<8x1xf32>
    %cst_96 = arith.constant 1.562500e-02 : f32
    %252 = vector.broadcast %cst_96 : f32 to vector<8x1xf32>
    %253 = arith.mulf %249, %252 : vector<8x1xf32>
    %254 = arith.mulf %251, %251 : vector<8x1xf32>
    %255 = arith.subf %253, %254 : vector<8x1xf32>
    %cst_97 = arith.constant 0.000000e+00 : f32
    %256 = vector.broadcast %cst_97 : f32 to vector<8x1xf32>
    %257 = arith.maximumf %255, %256 : vector<8x1xf32>
    %258 = vector.broadcast %251 : vector<8x1xf32> to vector<8x64xf32>
    %259 = arith.subf %242, %258 : vector<8x64xf32>
    %cst_98 = arith.constant 9.99999974E-6 : f32
    %260 = vector.broadcast %cst_98 : f32 to vector<8x1xf32>
    %261 = arith.addf %257, %260 : vector<8x1xf32>
    %262 = math.rsqrt %261 : vector<8x1xf32>
    %263 = vector.broadcast %262 : vector<8x1xf32> to vector<8x64xf32>
    %264 = arith.mulf %259, %263 : vector<8x64xf32>
    %265 = vector.broadcast %243 : vector<1x64xf32> to vector<8x64xf32>
    %266 = arith.mulf %264, %265 : vector<8x64xf32>
    %267 = vector.broadcast %244 : vector<1x64xf32> to vector<8x64xf32>
    %268 = arith.addf %266, %267 : vector<8x64xf32>
    %cst_99 = arith.constant 0.000000e+00 : f32
    %269 = vector.broadcast %cst_99 : f32 to vector<8x64xf32>
    %270 = arith.maximumf %268, %269 : vector<8x64xf32>
    %271 = arith.truncf %270 : vector<8x64xf32> to vector<8x64xbf16>
    %c640 = arith.constant 640 : index
    %c0_100 = arith.constant 0 : index
    %272 = vector.load %arg4[%c640, %c0_100] : memref<768x64xbf16, #tpu.memory_space<vmem>>, vector<64x64xbf16>
    %cst_101 = arith.constant dense<0.000000e+00> : vector<8x64xf32>
    %273 = tpu.matmul %271, %272, %cst_101 {dimension_numbers = #tpu.dot_dimension_numbers<[1], [0], [0], [1], [0, 0, 1, 1], [], []>} : vector<8x64xbf16>, vector<64x64xbf16>, vector<8x64xf32> -> vector<8x64xf32>
    %c27 = arith.constant 27 : index
    %c0_102 = arith.constant 0 : index
    %274 = vector.load %arg6[%c27, %c0_102] : memref<40x256xf32, #tpu.memory_space<vmem>>, vector<1x64xf32>
    %275 = vector.broadcast %274 : vector<1x64xf32> to vector<8x64xf32>
    %276 = arith.addf %273, %275 : vector<8x64xf32>
    %c28 = arith.constant 28 : index
    %c0_103 = arith.constant 0 : index
    %277 = vector.load %arg6[%c28, %c0_103] : memref<40x256xf32, #tpu.memory_space<vmem>>, vector<1x64xf32>
    %c29 = arith.constant 29 : index
    %c0_104 = arith.constant 0 : index
    %278 = vector.load %arg6[%c29, %c0_104] : memref<40x256xf32, #tpu.memory_space<vmem>>, vector<1x64xf32>
    %cst_105 = arith.constant dense<0.000000e+00> : vector<8xf32>
    %279 = vector.multi_reduction <add>, %276, %cst_105 [1] : vector<8x64xf32> to vector<8xf32>
    %280 = vector.shape_cast %279 : vector<8xf32> to vector<8x1xf32>
    %281 = arith.mulf %276, %276 : vector<8x64xf32>
    %cst_106 = arith.constant dense<0.000000e+00> : vector<8xf32>
    %282 = vector.multi_reduction <add>, %281, %cst_106 [1] : vector<8x64xf32> to vector<8xf32>
    %283 = vector.shape_cast %282 : vector<8xf32> to vector<8x1xf32>
    %cst_107 = arith.constant 1.562500e-02 : f32
    %284 = vector.broadcast %cst_107 : f32 to vector<8x1xf32>
    %285 = arith.mulf %280, %284 : vector<8x1xf32>
    %cst_108 = arith.constant 1.562500e-02 : f32
    %286 = vector.broadcast %cst_108 : f32 to vector<8x1xf32>
    %287 = arith.mulf %283, %286 : vector<8x1xf32>
    %288 = arith.mulf %285, %285 : vector<8x1xf32>
    %289 = arith.subf %287, %288 : vector<8x1xf32>
    %cst_109 = arith.constant 0.000000e+00 : f32
    %290 = vector.broadcast %cst_109 : f32 to vector<8x1xf32>
    %291 = arith.maximumf %289, %290 : vector<8x1xf32>
    %292 = vector.broadcast %285 : vector<8x1xf32> to vector<8x64xf32>
    %293 = arith.subf %276, %292 : vector<8x64xf32>
    %cst_110 = arith.constant 9.99999974E-6 : f32
    %294 = vector.broadcast %cst_110 : f32 to vector<8x1xf32>
    %295 = arith.addf %291, %294 : vector<8x1xf32>
    %296 = math.rsqrt %295 : vector<8x1xf32>
    %297 = vector.broadcast %296 : vector<8x1xf32> to vector<8x64xf32>
    %298 = arith.mulf %293, %297 : vector<8x64xf32>
    %299 = vector.broadcast %277 : vector<1x64xf32> to vector<8x64xf32>
    %300 = arith.mulf %298, %299 : vector<8x64xf32>
    %301 = vector.broadcast %278 : vector<1x64xf32> to vector<8x64xf32>
    %302 = arith.addf %300, %301 : vector<8x64xf32>
    %cst_111 = arith.constant 0.000000e+00 : f32
    %303 = vector.broadcast %cst_111 : f32 to vector<8x64xf32>
    %304 = arith.maximumf %302, %303 : vector<8x64xf32>
    %305 = arith.truncf %304 : vector<8x64xf32> to vector<8x64xbf16>
    %c704 = arith.constant 704 : index
    %c0_112 = arith.constant 0 : index
    %306 = vector.load %arg4[%c704, %c0_112] : memref<768x64xbf16, #tpu.memory_space<vmem>>, vector<64x64xbf16>
    %cst_113 = arith.constant dense<0.000000e+00> : vector<8x64xf32>
    %307 = tpu.matmul %305, %306, %cst_113 {dimension_numbers = #tpu.dot_dimension_numbers<[1], [0], [0], [1], [0, 0, 1, 1], [], []>} : vector<8x64xbf16>, vector<64x64xbf16>, vector<8x64xf32> -> vector<8x64xf32>
    %c30 = arith.constant 30 : index
    %c0_114 = arith.constant 0 : index
    %308 = vector.load %arg6[%c30, %c0_114] : memref<40x256xf32, #tpu.memory_space<vmem>>, vector<1x64xf32>
    %309 = vector.broadcast %308 : vector<1x64xf32> to vector<8x64xf32>
    %310 = arith.addf %307, %309 : vector<8x64xf32>
    %311 = arith.addf %234, %310 : vector<8x64xf32>
    %312 = vector.extract_strided_slice %3 {offsets = [0, 512], sizes = [8, 256], strides = [1, 1]} : vector<8x1024xf32> to vector<8x256xf32>
    %c32 = arith.constant 32 : index
    %c0_115 = arith.constant 0 : index
    %313 = vector.load %arg6[%c32, %c0_115] : memref<40x256xf32, #tpu.memory_space<vmem>>, vector<1x256xf32>
    %314 = vector.broadcast %313 : vector<1x256xf32> to vector<8x256xf32>
    %315 = arith.addf %312, %314 : vector<8x256xf32>
    %cst_116 = arith.constant 0.000000e+00 : f32
    %316 = vector.broadcast %cst_116 : f32 to vector<8x256xf32>
    %317 = arith.maximumf %315, %316 : vector<8x256xf32>
    %318 = vector.extract_strided_slice %3 {offsets = [0, 768], sizes = [8, 256], strides = [1, 1]} : vector<8x1024xf32> to vector<8x256xf32>
    %c33 = arith.constant 33 : index
    %c0_117 = arith.constant 0 : index
    %319 = vector.load %arg6[%c33, %c0_117] : memref<40x256xf32, #tpu.memory_space<vmem>>, vector<1x256xf32>
    %320 = vector.broadcast %319 : vector<1x256xf32> to vector<8x256xf32>
    %321 = arith.addf %318, %320 : vector<8x256xf32>
    %cst_118 = arith.constant 0.000000e+00 : f32
    %322 = vector.broadcast %cst_118 : f32 to vector<8x256xf32>
    %323 = arith.maximumf %321, %322 : vector<8x256xf32>
    %324 = arith.truncf %317 : vector<8x256xf32> to vector<8x256xbf16>
    %c0_119 = arith.constant 0 : index
    %c0_120 = arith.constant 0 : index
    %325 = vector.load %arg5[%c0_119, %c0_120] : memref<512x256xbf16, #tpu.memory_space<vmem>>, vector<256x256xbf16>
    %cst_121 = arith.constant dense<0.000000e+00> : vector<8x256xf32>
    %326 = tpu.matmul %324, %325, %cst_121 {dimension_numbers = #tpu.dot_dimension_numbers<[1], [0], [0], [1], [0, 0, 1, 1], [], []>} : vector<8x256xbf16>, vector<256x256xbf16>, vector<8x256xf32> -> vector<8x256xf32>
    %c34 = arith.constant 34 : index
    %c0_122 = arith.constant 0 : index
    %327 = vector.load %arg6[%c34, %c0_122] : memref<40x256xf32, #tpu.memory_space<vmem>>, vector<1x256xf32>
    %328 = vector.broadcast %327 : vector<1x256xf32> to vector<8x256xf32>
    %329 = arith.addf %326, %328 : vector<8x256xf32>
    %cst_123 = arith.constant 0.000000e+00 : f32
    %330 = vector.broadcast %cst_123 : f32 to vector<8x256xf32>
    %331 = arith.maximumf %329, %330 : vector<8x256xf32>
    %332 = arith.truncf %323 : vector<8x256xf32> to vector<8x256xbf16>
    %c256_124 = arith.constant 256 : index
    %c0_125 = arith.constant 0 : index
    %333 = vector.load %arg5[%c256_124, %c0_125] : memref<512x256xbf16, #tpu.memory_space<vmem>>, vector<256x256xbf16>
    %cst_126 = arith.constant dense<0.000000e+00> : vector<8x256xf32>
    %334 = tpu.matmul %332, %333, %cst_126 {dimension_numbers = #tpu.dot_dimension_numbers<[1], [0], [0], [1], [0, 0, 1, 1], [], []>} : vector<8x256xbf16>, vector<256x256xbf16>, vector<8x256xf32> -> vector<8x256xf32>
    %c35 = arith.constant 35 : index
    %c0_127 = arith.constant 0 : index
    %335 = vector.load %arg6[%c35, %c0_127] : memref<40x256xf32, #tpu.memory_space<vmem>>, vector<1x256xf32>
    %336 = vector.broadcast %335 : vector<1x256xf32> to vector<8x256xf32>
    %337 = arith.addf %334, %336 : vector<8x256xf32>
    %cst_128 = arith.constant 0.000000e+00 : f32
    %338 = vector.broadcast %cst_128 : f32 to vector<8x256xf32>
    %339 = arith.maximumf %337, %338 : vector<8x256xf32>
    %c36 = arith.constant 36 : index
    %c0_129 = arith.constant 0 : index
    %340 = vector.load %arg6[%c36, %c0_129] : memref<40x256xf32, #tpu.memory_space<vmem>>, vector<1x256xf32>
    %341 = vector.broadcast %340 : vector<1x256xf32> to vector<8x256xf32>
    %342 = arith.mulf %331, %341 : vector<8x256xf32>
    %cst_130 = arith.constant dense<0.000000e+00> : vector<8xf32>
    %343 = vector.multi_reduction <add>, %342, %cst_130 [1] : vector<8x256xf32> to vector<8xf32>
    %344 = vector.shape_cast %343 : vector<8xf32> to vector<8x1xf32>
    %c37 = arith.constant 37 : index
    %c0_131 = arith.constant 0 : index
    %345 = vector.load %arg6[%c37, %c0_131] : memref<40x256xf32, #tpu.memory_space<vmem>>, vector<1x256xf32>
    %346 = vector.broadcast %345 : vector<1x256xf32> to vector<8x256xf32>
    %347 = arith.mulf %339, %346 : vector<8x256xf32>
    %cst_132 = arith.constant dense<0.000000e+00> : vector<8xf32>
    %348 = vector.multi_reduction <add>, %347, %cst_132 [1] : vector<8x256xf32> to vector<8xf32>
    %349 = vector.shape_cast %348 : vector<8xf32> to vector<8x1xf32>
    %350 = arith.subf %344, %349 : vector<8x1xf32>
    %c38 = arith.constant 38 : index
    %c0_133 = arith.constant 0 : index
    %351 = vector.load %arg6[%c38, %c0_133] : memref<40x256xf32, #tpu.memory_space<vmem>>, vector<1x1xf32>
    %352 = vector.broadcast %351 : vector<1x1xf32> to vector<8x1xf32>
    %353 = arith.addf %350, %352 : vector<8x1xf32>
    %cst_134 = arith.constant 0.000000e+00 : f32
    %354 = vector.broadcast %cst_134 : f32 to vector<8x1xf32>
    %355 = arith.subf %354, %353 : vector<8x1xf32>
    %356 = math.tanh %311 : vector<8x64xf32>
    %357 = vector.extract_strided_slice %311 {offsets = [0, 0], sizes = [8, 6], strides = [1, 1]} : vector<8x64xf32> to vector<8x6xf32>
    %cst_135 = arith.constant 2.000000e+00 : f32
    %358 = math.log %cst_135 : f32
    %359 = vector.broadcast %358 : f32 to vector<8x6xf32>
    %360 = arith.subf %359, %357 : vector<8x6xf32>
    %cst_136 = arith.constant -2.000000e+00 : f32
    %361 = vector.broadcast %cst_136 : f32 to vector<8x6xf32>
    %362 = arith.mulf %361, %357 : vector<8x6xf32>
    %cst_137 = arith.constant 0.000000e+00 : f32
    %363 = vector.broadcast %cst_137 : f32 to vector<8x6xf32>
    %364 = arith.maximumf %362, %363 : vector<8x6xf32>
    %365 = math.absf %362 : vector<8x6xf32>
    %cst_138 = arith.constant 0.000000e+00 : f32
    %366 = vector.broadcast %cst_138 : f32 to vector<8x6xf32>
    %367 = arith.subf %366, %365 : vector<8x6xf32>
    %368 = math.exp %367 : vector<8x6xf32>
    %cst_139 = arith.constant 1.000000e+00 : f32
    %369 = vector.broadcast %cst_139 : f32 to vector<8x6xf32>
    %370 = arith.addf %369, %368 : vector<8x6xf32>
    %371 = math.log %370 : vector<8x6xf32>
    %372 = arith.addf %364, %371 : vector<8x6xf32>
    %373 = arith.subf %360, %372 : vector<8x6xf32>
    %cst_140 = arith.constant 2.000000e+00 : f32
    %374 = vector.broadcast %cst_140 : f32 to vector<8x6xf32>
    %375 = arith.mulf %374, %373 : vector<8x6xf32>
    %cst_141 = arith.constant dense<0.000000e+00> : vector<8xf32>
    %376 = vector.multi_reduction <add>, %375, %cst_141 [1] : vector<8x6xf32> to vector<8xf32>
    %377 = vector.shape_cast %376 : vector<8xf32> to vector<8x1xf32>
    %378 = arith.subf %355, %377 : vector<8x1xf32>
    %cst_142 = arith.constant 0.000000e+00 : f32
    %379 = vector.broadcast %cst_142 : f32 to vector<8x63xf32>
    %380 = tpu.concatenate %356, %378, %379 in 1 : vector<8x64xf32>, vector<8x1xf32>, vector<8x63xf32> -> vector<8x128xf32>
    %c0_143 = arith.constant 0 : index
    %c0_144 = arith.constant 0 : index
    %381 = vector.load %arg7[%c0_143, %c0_144] : memref<8x128xf32, #tpu.memory_space<vmem>>, vector<8x128xf32>
    tpu.vector_store %arg7[%c0_143, %c0_144], %380 {strides = array<i32>} : memref<8x128xf32, #tpu.memory_space<vmem>>, vector<8x128xf32>,
    return
  }
  func.func @transform_0(%arg0: i32) -> (i32, i32) {
    %c0_i32 = arith.constant 0 : i32
    %c0_i32_0 = arith.constant 0 : i32
    return %arg0, %c0_i32 : i32, i32
  }
  func.func @transform_1(%arg0: i32) -> (i32, i32) {
    %c0_i32 = arith.constant 0 : i32
    %c0_i32_0 = arith.constant 0 : i32
    return %arg0, %c0_i32 : i32, i32
  }
  func.func @transform_2(%arg0: i32) -> (i32, i32) {
    %c0_i32 = arith.constant 0 : i32
    %c0_i32_0 = arith.constant 0 : i32
    %c0_i32_1 = arith.constant 0 : i32
    return %c0_i32, %c0_i32_0 : i32, i32
  }
  func.func @transform_3(%arg0: i32) -> (i32, i32) {
    %c0_i32 = arith.constant 0 : i32
    %c0_i32_0 = arith.constant 0 : i32
    %c0_i32_1 = arith.constant 0 : i32
    return %c0_i32, %c0_i32_0 : i32, i32
  }
  func.func @transform_4(%arg0: i32) -> (i32, i32) {
    %c0_i32 = arith.constant 0 : i32
    %c0_i32_0 = arith.constant 0 : i32
    %c0_i32_1 = arith.constant 0 : i32
    return %c0_i32, %c0_i32_0 : i32, i32
  }
  func.func @transform_5(%arg0: i32) -> (i32, i32) {
    %c0_i32 = arith.constant 0 : i32
    %c0_i32_0 = arith.constant 0 : i32
    %c0_i32_1 = arith.constant 0 : i32
    return %c0_i32, %c0_i32_0 : i32, i32
  }
  func.func @transform_6(%arg0: i32) -> (i32, i32) {
    %c0_i32 = arith.constant 0 : i32
    %c0_i32_0 = arith.constant 0 : i32
    return %arg0, %c0_i32 : i32, i32
  }
}

</mosaic_0001>

<llo_original>
// kernel: tpu_custom_call.1
$region0: #{tpu_custom_call.1}
  #allocation0 [shape = 'u32[]', space=smem, size = 0x4, offset = 0x4, fixed_abs, tag = 'smem constant byte address 0x4 - core index']
  #allocation1 [shape = 'u32[144,128]{1,0:T(1,128)}', space=vmem, size = 0x12000, scoped, tag = 'internal scratch']
  %s0 = inlined_call_operand.vmem [shape: bf16[16,17], index: 0, kind: input, shape index: {}]
  %s1 = inlined_call_operand.vmem [shape: f32[16,64], index: 1, kind: input, shape index: {}]
  %s2 = inlined_call_operand.hbm [shape: bf16[17,1024], index: 2, kind: input, shape index: {}]
  %s3 = inlined_call_operand.vmem [shape: bf16[768,64], index: 3, kind: input, shape index: {}]
  %s4 = inlined_call_operand.vmem [shape: bf16[512,256], index: 4, kind: input, shape index: {}]
  %s5 = inlined_call_operand.hbm [shape: f32[40,256], index: 5, kind: input, shape index: {}]
  %s6 = inlined_call_operand.hbm [shape: f32[16,128], index: 6, kind: output, shape index: {}]
  %s7 = sld [smem:[#allocation0]]
  $region65: #{tpu_custom_call.1} parent=0
    _
  %s9 = ssub.s32 1, %s7
  %s10 = scalar_select 0, %s9, %s7
  $region1: #{tpu_custom_call.1} parent=0
    #allocation2 [shape = 'u8[49152]{0}', space=vmem, size = 0xc000, scoped, tag = 'input window, operand 2, single buffered']
    #allocation3 [shape = 's32[2]{0}', space=sflag, size = 0x8, scoped, tag = 'scoped memory for tpu_custom_call.1']
    #allocation4 [shape = 's32[2]{0}', space=sflag, size = 0x8, scoped, tag = 'scoped memory for tpu_custom_call.1']
    #allocation5 [shape = 'u8[40960]{0}', space=vmem, size = 0xa000, scoped, tag = 'input window, operand 5, single buffered']
    #allocation6 [shape = 's32[1]{0}', space=sflag, size = 0x4, scoped, tag = 'scoped memory for tpu_custom_call.1']
    #allocation7 [shape = 'u8[8192]{0}', space=vmem, size = 0x2000, scoped, tag = 'output window, operand 0']
    %11 = vsyncpa [#allocation3], 0
    %12 = vsyncpa [#allocation6], 0
    %13 = vsyncpa [#allocation4], 0
    %s14 = scalar_lea.sflag [#allocation4], 1
    %15 = vsyncpa %s14, 0
    loop: start=0, step=1, limit=4
    $region2: #{tpu_custom_call.1} parent=1 // loop_pre_header
      _
    $region3: #{tpu_custom_call.1} parent=1 // loop_header
      %s17 = sphi 0, %s21
      %p18 = scmp.ge.s32.totalorder %s17, 4
      %s27 = sphi 0, %s29
      %s30 = sphi 0, %s27
      %s31 = sphi 0, %s30
      %s47 = sphi 0, %s31
      %s53 = sphi 0, %s55
      %s56 = sphi 0, %s53
      %s57 = sphi 0, %s56
      %s73 = sphi 0, %s57
      %s77 = sphi 0, %s77
      %s79 = sphi 0, %s77
      %s80 = sphi 0, %s79
      %s94 = sphi 0, %s80
      %s98 = sphi 0, %s98
      %s100 = sphi 0, %s98
      %s101 = sphi 0, %s100
      %s115 = sphi 0, %s101
      %s119 = sphi 0, %s119
      %s121 = sphi 0, %s119
      %s122 = sphi 0, %s121
      %s136 = sphi 0, %s122
      %s140 = sphi 0, %s140
      %s142 = sphi 0, %s140
      %s143 = sphi 0, %s142
      %s157 = sphi 0, %s143
      %s163 = sphi 0, %s165
      %s166 = sphi 0, %s163
      %s167 = sphi 0, %s166
      %s183 = sphi 0, %s167
    $region4: #{tpu_custom_call.1} parent=1 // loop_header_branch
      %20 = sbr.rel (%p18) target = $region8
    $region5: #{tpu_custom_call.1} parent=1 // loop_body
      %s22 = ssub.s32 %s17, 1
      %s23 = ssub.s32 %s17, 2
      %s24 = sadd.s32 %s17, 1
      %s25 = ssub.s32 %s17, %s24
      %p26 = scmp.eq.s32.totalorder %s25, 0
      %s28 = sadd.s32 %s27, 1
      %s29 = scalar_select %p26, %s27, %s28
      %p32 = pneg %p26
      %p33 = scmp.eq.s32.totalorder %s17, 1
      %p34 = por %p32, %p33
      %p35 = scmp.ne.s32.totalorder %s27, %s30
      %p36 = scmp.eq.s32.totalorder %s17, 0
      %p37 = por %p35, %p36
      %p38 = scmp.ne.s32.totalorder %s27, %s30
      %p39 = scmp.eq.s32.totalorder %s22, 1
      %p40 = por %p38, %p39
      %p41 = scmp.ne.s32.totalorder %s30, %s31
      %p42 = scmp.eq.s32.totalorder %s22, 0
      %p43 = por %p41, %p42
      %p44 = scmp.ne.s32.totalorder %s30, %s31
      %p45 = scmp.eq.s32.totalorder %s23, 1
      %p46 = por %p44, %p45
      %p48 = scmp.ne.s32.totalorder %s31, %s47
      %p49 = scmp.eq.s32.totalorder %s23, 0
      %p50 = por %p48, %p49
      %s51 = ssub.s32 %s17, %s24
      %p52 = scmp.eq.s32.totalorder %s51, 0
      %s54 = sadd.s32 %s53, 1
      %s55 = scalar_select %p52, %s53, %s54
      %p58 = pneg %p52
      %p59 = scmp.eq.s32.totalorder %s17, 1
      %p60 = por %p58, %p59
      %p61 = scmp.ne.s32.totalorder %s53, %s56
      %p62 = scmp.eq.s32.totalorder %s17, 0
      %p63 = por %p61, %p62
      %p64 = scmp.ne.s32.totalorder %s53, %s56
      %p65 = scmp.eq.s32.totalorder %s22, 1
      %p66 = por %p64, %p65
      %p67 = scmp.ne.s32.totalorder %s56, %s57
      %p68 = scmp.eq.s32.totalorder %s22, 0
      %p69 = por %p67, %p68
      %p70 = scmp.ne.s32.totalorder %s56, %s57
      %p71 = scmp.eq.s32.totalorder %s23, 1
      %p72 = por %p70, %p71
      %p74 = scmp.ne.s32.totalorder %s57, %s73
      %p75 = scmp.eq.s32.totalorder %s23, 0
      %p76 = por %p74, %p75
      %s78 = sadd.s32 %s77, 1
      %p81 = scmp.eq.s32.totalorder %s17, 1
      %p82 = scmp.ne.s32.totalorder %s77, %s79
      %p83 = scmp.eq.s32.totalorder %s17, 0
      %p84 = por %p82, %p83
      %p85 = scmp.ne.s32.totalorder %s77, %s79
      %p86 = scmp.eq.s32.totalorder %s22, 1
      %p87 = por %p85, %p86
      %p88 = scmp.ne.s32.totalorder %s79, %s80
      %p89 = scmp.eq.s32.totalorder %s22, 0
      %p90 = por %p88, %p89
      %p91 = scmp.ne.s32.totalorder %s79, %s80
      %p92 = scmp.eq.s32.totalorder %s23, 1
      %p93 = por %p91, %p92
      %p95 = scmp.ne.s32.totalorder %s80, %s94
      %p96 = scmp.eq.s32.totalorder %s23, 0
      %p97 = por %p95, %p96
      %s99 = sadd.s32 %s98, 1
      %p102 = scmp.eq.s32.totalorder %s17, 1
      %p103 = scmp.ne.s32.totalorder %s98, %s100
      %p104 = scmp.eq.s32.totalorder %s17, 0
      %p105 = por %p103, %p104
      %p106 = scmp.ne.s32.totalorder %s98, %s100
      %p107 = scmp.eq.s32.totalorder %s22, 1
      %p108 = por %p106, %p107
      %p109 = scmp.ne.s32.totalorder %s100, %s101
      %p110 = scmp.eq.s32.totalorder %s22, 0
      %p111 = por %p109, %p110
      %p112 = scmp.ne.s32.totalorder %s100, %s101
      %p113 = scmp.eq.s32.totalorder %s23, 1
      %p114 = por %p112, %p113
      %p116 = scmp.ne.s32.totalorder %s101, %s115
      %p117 = scmp.eq.s32.totalorder %s23, 0
      %p118 = por %p116, %p117
      %s120 = sadd.s32 %s119, 1
      %p123 = scmp.eq.s32.totalorder %s17, 1
      %p124 = scmp.ne.s32.totalorder %s119, %s121
      %p125 = scmp.eq.s32.totalorder %s17, 0
      %p126 = por %p124, %p125
      %p127 = scmp.ne.s32.totalorder %s119, %s121
      %p128 = scmp.eq.s32.totalorder %s22, 1
      %p129 = por %p127, %p128
      %p130 = scmp.ne.s32.totalorder %s121, %s122
      %p131 = scmp.eq.s32.totalorder %s22, 0
      %p132 = por %p130, %p131
      %p133 = scmp.ne.s32.totalorder %s121, %s122
      %p134 = scmp.eq.s32.totalorder %s23, 1
      %p135 = por %p133, %p134
      %p137 = scmp.ne.s32.totalorder %s122, %s136
      %p138 = scmp.eq.s32.totalorder %s23, 0
      %p139 = por %p137, %p138
      %s141 = sadd.s32 %s140, 1
      %p144 = scmp.eq.s32.totalorder %s17, 1
      %p145 = scmp.ne.s32.totalorder %s140, %s142
      %p146 = scmp.eq.s32.totalorder %s17, 0
      %p147 = por %p145, %p146
      %p148 = scmp.ne.s32.totalorder %s140, %s142
      %p149 = scmp.eq.s32.totalorder %s22, 1
      %p150 = por %p148, %p149
      %p151 = scmp.ne.s32.totalorder %s142, %s143
      %p152 = scmp.eq.s32.totalorder %s22, 0
      %p153 = por %p151, %p152
      %p154 = scmp.ne.s32.totalorder %s142, %s143
      %p155 = scmp.eq.s32.totalorder %s23, 1
      %p156 = por %p154, %p155
      %p158 = scmp.ne.s32.totalorder %s143, %s157
      %p159 = scmp.eq.s32.totalorder %s23, 0
      %p160 = por %p158, %p159
      %s161 = ssub.s32 %s17, %s24
      %p162 = scmp.eq.s32.totalorder %s161, 0
      %s164 = sadd.s32 %s163, 1
      %s165 = scalar_select %p162, %s163, %s164
      %p168 = pneg %p162
      %p169 = scmp.eq.s32.totalorder %s17, 1
      %p170 = por %p168, %p169
      %p171 = scmp.ne.s32.totalorder %s163, %s166
      %p172 = scmp.eq.s32.totalorder %s17, 0
      %p173 = por %p171, %p172
      %p174 = scmp.ne.s32.totalorder %s163, %s166
      %p175 = scmp.eq.s32.totalorder %s22, 1
      %p176 = por %p174, %p175
      %p177 = scmp.ne.s32.totalorder %s166, %s167
      %p178 = scmp.eq.s32.totalorder %s22, 0
      %p179 = por %p177, %p178
      %p180 = scmp.ne.s32.totalorder %s166, %s167
      %p181 = scmp.eq.s32.totalorder %s23, 1
      %p182 = por %p180, %p181
      %p184 = scmp.ne.s32.totalorder %s167, %s183
      %p185 = scmp.eq.s32.totalorder %s23, 0
      %p186 = por %p184, %p185
      %p187 = scmp.le.s32.totalorder 1, %s17
      %p188 = scmp.lt.s32.totalorder %s17, 3
      %p189 = pnand %p187, %p188
      %p190 = pneg %p189
      // Predicated region
      $region9: #{tpu_custom_call.1} parent=5 // pred_check
        _
      $region10: #{tpu_custom_call.1} parent=5 // pred_check_branch
        %192 = sbr.rel (%p189) target = $region12
      $region11: #{tpu_custom_call.1} parent=5 // pred_region
        %s193 = ssub.s32 %s17, 1
        // Predicated region
        $region13: #{tpu_custom_call.1} parent=11 // pred_check
          %p194 = pneg %p90
        $region14: #{tpu_custom_call.1} parent=11 // pred_check_branch
          %196 = sbr.rel (%p194) target = $region16
        $region15: #{tpu_custom_call.1} parent=11 // pred_region
          %s198 = ssub.s32 1536, 1536
          %199 = vsyncadd [#allocation3], %s198
          %s200 = sshll.u32 [#allocation2], 4
          %s201 = int_to_ptr.vmem [resolvable:$true] %s200
          %206 = dma.hbm_to_vmem [thread:$0]  %s2, 1536, %s201, [#allocation3], 512, 512, 32
        $region16: #{tpu_custom_call.1} parent=11 // pred_fallthru
          _
        // Predicated region
        $region17: #{tpu_custom_call.1} parent=11 // pred_check
          %p207 = pneg %p111
        $region18: #{tpu_custom_call.1} parent=11 // pred_check_branch
          %209 = sbr.rel (%p207) target = $region20
        $region19: #{tpu_custom_call.1} parent=11 // pred_region
          _
        $region20: #{tpu_custom_call.1} parent=11 // pred_fallthru
          _
        // Predicated region
        $region21: #{tpu_custom_call.1} parent=11 // pred_check
          %p210 = pneg %p132
        $region22: #{tpu_custom_call.1} parent=11 // pred_check_branch
          %212 = sbr.rel (%p210) target = $region24
        $region23: #{tpu_custom_call.1} parent=11 // pred_region
          _
        $region24: #{tpu_custom_call.1} parent=11 // pred_fallthru
          _
        // Predicated region
        $region25: #{tpu_custom_call.1} parent=11 // pred_check
          %p213 = pneg %p153
        $region26: #{tpu_custom_call.1} parent=11 // pred_check_branch
          %215 = sbr.rel (%p213) target = $region28
        $region27: #{tpu_custom_call.1} parent=11 // pred_region
          %s217 = ssub.s32 1280, 1280
          %218 = vsyncadd [#allocation6], %s217
          %s219 = sshll.u32 [#allocation5], 4
          %s220 = int_to_ptr.vmem [resolvable:$true] %s219
          %225 = dma.hbm_to_vmem [thread:$0]  %s5, 1280, %s220, [#allocation6], 256, 256, 16
        $region28: #{tpu_custom_call.1} parent=11 // pred_fallthru
          _
      $region12: #{tpu_custom_call.1} parent=5 // pred_fallthru
        _
      %p226 = scmp.lt.s32.totalorder %s17, 2
      // Predicated region
      $region29: #{tpu_custom_call.1} parent=5 // pred_check
        %p227 = pneg %p226
      $region30: #{tpu_custom_call.1} parent=5 // pred_check_branch
        %229 = sbr.rel (%p227) target = $region32
      $region31: #{tpu_custom_call.1} parent=5 // pred_region
        // Predicated region
        $region33: #{tpu_custom_call.1} parent=31 // pred_check
          %p230 = pneg %p37
        $region34: #{tpu_custom_call.1} parent=31 // pred_check_branch
          %232 = sbr.rel (%p230) target = $region36
        $region35: #{tpu_custom_call.1} parent=31 // pred_region
          %p233 = scmp.lt.s32.totalorder %s17, 1
          %s234 = scalar_select %p233, %s17, 1
          %s235 = smul.addr %s234, 4
          %s236 = scalar_lea.vmem %s0, %s235
        $region36: #{tpu_custom_call.1} parent=31 // pred_fallthru
          _
        // Predicated region
        $region37: #{tpu_custom_call.1} parent=31 // pred_check
          %p237 = pneg %p63
        $region38: #{tpu_custom_call.1} parent=31 // pred_check_branch
          %239 = sbr.rel (%p237) target = $region40
        $region39: #{tpu_custom_call.1} parent=31 // pred_region
          %p240 = scmp.lt.s32.totalorder %s17, 1
          %s241 = scalar_select %p240, %s17, 1
          %s242 = smul.addr %s241, 8
          %s243 = scalar_lea.vmem %s1, %s242
        $region40: #{tpu_custom_call.1} parent=31 // pred_fallthru
          _
      $region32: #{tpu_custom_call.1} parent=5 // pred_fallthru
        _
      %p244 = scmp.le.s32.totalorder 1, %s17
      %p245 = scmp.lt.s32.totalorder %s17, 3
      %p246 = pnand %p244, %p245
      %p247 = pneg %p246
      // Predicated region
      $region41: #{tpu_custom_call.1} parent=5 // pred_check
        _
      $region42: #{tpu_custom_call.1} parent=5 // pred_check_branch
        %249 = sbr.rel (%p246) target = $region44
      $region43: #{tpu_custom_call.1} parent=5 // pred_region
        %s250 = ssub.s32 %s17, 1
        // Predicated region
        $region45: #{tpu_custom_call.1} parent=43 // pred_check
          %p251 = pneg %p90
        $region46: #{tpu_custom_call.1} parent=43 // pred_check_branch
          %253 = sbr.rel (%p251) target = $region48
        $region47: #{tpu_custom_call.1} parent=43 // pred_region
          %254 = dma.done [#allocation3], 1536
        $region48: #{tpu_custom_call.1} parent=43 // pred_fallthru
          _
        // Predicated region
        $region49: #{tpu_custom_call.1} parent=43 // pred_check
          %p255 = pneg %p153
        $region50: #{tpu_custom_call.1} parent=43 // pred_check_branch
          %257 = sbr.rel (%p255) target = $region52
        $region51: #{tpu_custom_call.1} parent=43 // pred_region
          %258 = dma.done [#allocation6], 1280
        $region52: #{tpu_custom_call.1} parent=43 // pred_fallthru
          _
        %p259 = scmp.lt.s32.totalorder %s22, 1
        %s260 = scalar_select %p259, %s22, 1
        %s261 = smul.addr %s260, 4
        %s262 = scalar_lea.vmem %s0, %s261
        %p263 = pneg %p43
        %p264 = pneg %p40
        %p265 = scmp.lt.s32.totalorder %s22, 1
        %s266 = scalar_select %p265, %s22, 1
        %s267 = smul.addr %s266, 8
        %s268 = scalar_lea.vmem %s1, %s267
        %p269 = pneg %p69
        %p270 = pneg %p66
        %p271 = pneg %p90
        %p272 = pneg %p87
        %p273 = pneg %p111
        %p274 = pneg %p108
        %p275 = pneg %p132
        %p276 = pneg %p129
        %p277 = pneg %p153
        %p278 = pneg %p150
        %p279 = pneg %p179
        %p280 = pneg %p176
        %s281 = sand.u32 %s166, 1
        %s282 = scalar_lea.sflag [#allocation4], %s281
        %s283 = sand.u32 %s166, 1
        %s284 = smul.addr %s283, 8
        %s285 = scalar_lea.vmem [#allocation7], %s284
        %p286 = scmp.lt.s32.totalorder %s22, 1
        %s287 = scalar_select %p286, %s22, 1
        %s288 = smul.addr %s287, 4
        %s289 = scalar_lea.vmem %s0, %s288
        %p290 = scmp.lt.s32.totalorder %s22, 1
        %s291 = scalar_select %p290, %s22, 1
        %s292 = smul.addr %s291, 8
        %s293 = scalar_lea.vmem %s1, %s292
        %v295 = vld [vmem:[%s289] sm:$0xf]
        %v296 = vld [vmem:[%s293] sm:$0xff]
        %v297 = vld [vmem:[#allocation2] sm:$0xff]
        %v298 = vld [vmem:[#allocation2 + $0x8] sm:$0xff]
        %v299 = vld [vmem:[#allocation2 + $0x10] sm:$0xff]
        %v300 = vld [vmem:[#allocation2 + $0x18] sm:$0xff]
        %v301 = vld [vmem:[#allocation2 + $0x20] sm:$0xff]
        %v302 = vld [vmem:[#allocation2 + $0x28] sm:$0xff]
        %v303 = vld [vmem:[#allocation2 + $0x30] sm:$0xff]
        %v304 = vld [vmem:[#allocation2 + $0x38] sm:$0xff]
        %v305 = vld [vmem:[#allocation2 + $0x40] sm:$0x11]
        %v306 = vld [vmem:[#allocation2 + $0x48] sm:$0x11]
        %v307 = vld [vmem:[#allocation2 + $0x50] sm:$0x11]
        %v308 = vld [vmem:[#allocation2 + $0x58] sm:$0x11]
        %v321 = vunpack.c.l.b16 %v297
        %v322 = vunpack.c.h.b16 %v297
        %v323 = vunpack.c.l.b16 %v298
        %v324 = vunpack.c.h.b16 %v298
        %v325 = vunpack.c.l.b16 %v299
        %v326 = vunpack.c.h.b16 %v299
        %v327 = vunpack.c.l.b16 %v300
        %v328 = vunpack.c.h.b16 %v300
        %v329 = vunpack.c.l.b16 %v301
        %v330 = vunpack.c.h.b16 %v301
        %v331 = vunpack.c.l.b16 %v302
        %v332 = vunpack.c.h.b16 %v302
        %v333 = vunpack.c.l.b16 %v303
        %v334 = vunpack.c.h.b16 %v303
        %v335 = vunpack.c.l.b16 %v304
        %v336 = vunpack.c.h.b16 %v304
        %v337 = vunpack.c.l.b16 %v305
        %v338 = vunpack.c.h.b16 %v305
        %v339 = vunpack.c.l.b16 %v306
        %v340 = vunpack.c.h.b16 %v306
        %v341 = vunpack.c.l.b16 %v307
        %v342 = vunpack.c.h.b16 %v307
        %v343 = vunpack.c.l.b16 %v308
        %v344 = vunpack.c.h.b16 %v308
        %v345 = vpack.c.b16 %v329, %v321
        %v346 = vpack.c.b16 %v330, %v322
        %v347 = vpack.c.b16 %v331, %v323
        %v348 = vpack.c.b16 %v332, %v324
        %v349 = vpack.c.b16 %v333, %v325
        %v350 = vpack.c.b16 %v334, %v326
        %v351 = vpack.c.b16 %v335, %v327
        %v352 = vpack.c.b16 %v336, %v328
        %v353 = vpack.c.b16 %v337, %v337
        %v354 = vpack.c.b16 %v338, %v338
        %v355 = vpack.c.b16 %v339, %v339
        %v356 = vpack.c.b16 %v340, %v340
        %v357 = vpack.c.b16 %v341, %v341
        %v358 = vpack.c.b16 %v342, %v342
        %v359 = vpack.c.b16 %v343, %v343
        %v360 = vpack.c.b16 %v344, %v344
        %vm369 = vcmask 138240
        %v371 = vsel %vm369, %v295, 0
        %vm373 = vcmask 1040384
        %v374 = vsel 0, 4294967295, 65535
        %v375 = vsel %vm373, %v374, 0
        %v377 = vand.u32 %v353, %v375
        %v380 = vand.u32 %v354, %v375
        %v383 = vand.u32 %v355, %v375
        %v386 = vand.u32 %v356, %v375
        %v389 = vand.u32 %v357, %v375
        %v392 = vand.u32 %v358, %v375
        %v395 = vand.u32 %v359, %v375
        %v398 = vand.u32 %v360, %v375
        %400 = vmatprep.subr.bf16.mxu0 0
        %401 = vmatpush1.bf16.msra.mxu0 0
        %402 = vmatprep.subr.bf16.mxu0 0
        %403 = vmatpush1.bf16.msra.mxu0 0
        %404 = vmatprep.subr.bf16.mxu0 0
        %405 = vmatpush1.bf16.msra.mxu0 0
        %406 = vmatprep.subr.bf16.mxu0 0
        %407 = vmatpush1.bf16.msra.mxu0 0
        %408 = vmatprep.subr.bf16.mxu0 0
        %409 = vmatpush1.bf16.msra.mxu0 0
        %410 = vmatprep.subr.bf16.mxu0 0
        %411 = vmatpush1.bf16.msra.mxu0 0
        %412 = vmatprep.subr.bf16.mxu0 %v380
        %413 = vmatpush1.bf16.msra.mxu0 %v377
        %414 = vmatprep.subr.bf16.mxu0 %v346
        %415 = vmatpush1.bf16.msra.mxu0 %v345
        %416 = vmatprep.subr.bf16.mxu0 0
        %417 = vmatpush2.bf16.msra.mxu0 0
        %418 = vmatprep.subr.bf16.mxu0 0
        %419 = vmatpush2.bf16.msra.mxu0 0
        %420 = vmatprep.subr.bf16.mxu0 0
        %421 = vmatpush2.bf16.msra.mxu0 0
        %422 = vmatprep.subr.bf16.mxu0 0
        %423 = vmatpush2.bf16.msra.mxu0 0
        %424 = vmatprep.subr.bf16.mxu0 0
        %425 = vmatpush2.bf16.msra.mxu0 0
        %426 = vmatprep.subr.bf16.mxu0 0
        %427 = vmatpush2.bf16.msra.mxu0 0
        %428 = vmatprep.subr.bf16.mxu0 0
        %429 = vmatpush2.bf16.msra.mxu0 0
        %430 = vmatprep.subr.bf16.mxu0 0
        %431 = vmatpush2.bf16.msra.mxu0 0
        %432 = vmatprep.mubr.bf16.mxu0 0
        %433 = vmatmul.mubr.bf16.gmra.mxu0 %v371
        %v434 = vpop.f32.mrf.mxu0
        %v435 = vadd.f32 0.0, %v434
        %v436 = vpop.f32.mrf.mxu0
        %v437 = vadd.f32 0.0, %v436
        %v438 = vpop.f32.mrf.mxu0
        %v439 = vpop.f32.mrf.mxu0
        %440 = vdwg.mxu0
        %441 = vmatprep.subr.bf16.mxu0 0
        %442 = vmatpush1.bf16.msra.mxu0 0
        %443 = vmatprep.subr.bf16.mxu0 0
        %444 = vmatpush1.bf16.msra.mxu0 0
        %445 = vmatprep.subr.bf16.mxu0 0
        %446 = vmatpush1.bf16.msra.mxu0 0
        %447 = vmatprep.subr.bf16.mxu0 0
        %448 = vmatpush1.bf16.msra.mxu0 0
        %449 = vmatprep.subr.bf16.mxu0 0
        %450 = vmatpush1.bf16.msra.mxu0 0
        %451 = vmatprep.subr.bf16.mxu0 0
        %452 = vmatpush1.bf16.msra.mxu0 0
        %453 = vmatprep.subr.bf16.mxu0 %v386
        %454 = vmatpush1.bf16.msra.mxu0 %v383
        %455 = vmatprep.subr.bf16.mxu0 %v348
        %456 = vmatpush1.bf16.msra.mxu0 %v347
        %457 = vmatprep.subr.bf16.mxu0 0
        %458 = vmatpush2.bf16.msra.mxu0 0
        %459 = vmatprep.subr.bf16.mxu0 0
        %460 = vmatpush2.bf16.msra.mxu0 0
        %461 = vmatprep.subr.bf16.mxu0 0
        %462 = vmatpush2.bf16.msra.mxu0 0
        %463 = vmatprep.subr.bf16.mxu0 0
        %464 = vmatpush2.bf16.msra.mxu0 0
        %465 = vmatprep.subr.bf16.mxu0 0
        %466 = vmatpush2.bf16.msra.mxu0 0
        %467 = vmatprep.subr.bf16.mxu0 0
        %468 = vmatpush2.bf16.msra.mxu0 0
        %469 = vmatprep.subr.bf16.mxu0 0
        %470 = vmatpush2.bf16.msra.mxu0 0
        %471 = vmatprep.subr.bf16.mxu0 0
        %472 = vmatpush2.bf16.msra.mxu0 0
        %473 = vmatprep.mubr.bf16.mxu0 0
        %474 = vmatmul.mubr.bf16.gmra.mxu0 %v371
        %v475 = vpop.f32.mrf.mxu0
        %v476 = vadd.f32 0.0, %v475
        %v477 = vpop.f32.mrf.mxu0
        %v478 = vadd.f32 0.0, %v477
        %v479 = vpop.f32.mrf.mxu0
        %v480 = vpop.f32.mrf.mxu0
        %481 = vdwg.mxu0
        %482 = vmatprep.subr.bf16.mxu0 0
        %483 = vmatpush1.bf16.msra.mxu0 0
        %484 = vmatprep.subr.bf16.mxu0 0
        %485 = vmatpush1.bf16.msra.mxu0 0
        %486 = vmatprep.subr.bf16.mxu0 0
        %487 = vmatpush1.bf16.msra.mxu0 0
        %488 = vmatprep.subr.bf16.mxu0 0
        %489 = vmatpush1.bf16.msra.mxu0 0
        %490 = vmatprep.subr.bf16.mxu0 0
        %491 = vmatpush1.bf16.msra.mxu0 0
        %492 = vmatprep.subr.bf16.mxu0 0
        %493 = vmatpush1.bf16.msra.mxu0 0
        %494 = vmatprep.subr.bf16.mxu0 %v392
        %495 = vmatpush1.bf16.msra.mxu0 %v389
        %496 = vmatprep.subr.bf16.mxu0 %v350
        %497 = vmatpush1.bf16.msra.mxu0 %v349
        %498 = vmatprep.subr.bf16.mxu0 0
        %499 = vmatpush2.bf16.msra.mxu0 0
        %500 = vmatprep.subr.bf16.mxu0 0
        %501 = vmatpush2.bf16.msra.mxu0 0
        %502 = vmatprep.subr.bf16.mxu0 0
        %503 = vmatpush2.bf16.msra.mxu0 0
        %504 = vmatprep.subr.bf16.mxu0 0
        %505 = vmatpush2.bf16.msra.mxu0 0
        %506 = vmatprep.subr.bf16.mxu0 0
        %507 = vmatpush2.bf16.msra.mxu0 0
        %508 = vmatprep.subr.bf16.mxu0 0
        %509 = vmatpush2.bf16.msra.mxu0 0
        %510 = vmatprep.subr.bf16.mxu0 0
        %511 = vmatpush2.bf16.msra.mxu0 0
        %512 = vmatprep.subr.bf16.mxu0 0
        %513 = vmatpush2.bf16.msra.mxu0 0
        %514 = vmatprep.mubr.bf16.mxu0 0
        %515 = vmatmul.mubr.bf16.gmra.mxu0 %v371
        %v516 = vpop.f32.mrf.mxu0
        %v517 = vadd.f32 0.0, %v516
        %v518 = vpop.f32.mrf.mxu0
        %v519 = vadd.f32 0.0, %v518
        %v520 = vpop.f32.mrf.mxu0
        %v521 = vpop.f32.mrf.mxu0
        %522 = vdwg.mxu0
        %523 = vmatprep.subr.bf16.mxu0 0
        %524 = vmatpush1.bf16.msra.mxu0 0
        %525 = vmatprep.subr.bf16.mxu0 0
        %526 = vmatpush1.bf16.msra.mxu0 0
        %527 = vmatprep.subr.bf16.mxu0 0
        %528 = vmatpush1.bf16.msra.mxu0 0
        %529 = vmatprep.subr.bf16.mxu0 0
        %530 = vmatpush1.bf16.msra.mxu0 0
        %531 = vmatprep.subr.bf16.mxu0 0
        %532 = vmatpush1.bf16.msra.mxu0 0
        %533 = vmatprep.subr.bf16.mxu0 0
        %534 = vmatpush1.bf16.msra.mxu0 0
        %535 = vmatprep.subr.bf16.mxu0 %v398
        %536 = vmatpush1.bf16.msra.mxu0 %v395
        %537 = vmatprep.subr.bf16.mxu0 %v352
        %538 = vmatpush1.bf16.msra.mxu0 %v351
        %539 = vmatprep.subr.bf16.mxu0 0
        %540 = vmatpush2.bf16.msra.mxu0 0
        %541 = vmatprep.subr.bf16.mxu0 0
        %542 = vmatpush2.bf16.msra.mxu0 0
        %543 = vmatprep.subr.bf16.mxu0 0
        %544 = vmatpush2.bf16.msra.mxu0 0
        %545 = vmatprep.subr.bf16.mxu0 0
        %546 = vmatpush2.bf16.msra.mxu0 0
        %547 = vmatprep.subr.bf16.mxu0 0
        %548 = vmatpush2.bf16.msra.mxu0 0
        %549 = vmatprep.subr.bf16.mxu0 0
        %550 = vmatpush2.bf16.msra.mxu0 0
        %551 = vmatprep.subr.bf16.mxu0 0
        %552 = vmatpush2.bf16.msra.mxu0 0
        %553 = vmatprep.subr.bf16.mxu0 0
        %554 = vmatpush2.bf16.msra.mxu0 0
        %555 = vmatprep.mubr.bf16.mxu0 0
        %556 = vmatmul.mubr.bf16.gmra.mxu0 %v371
        %v557 = vpop.f32.mrf.mxu0
        %v558 = vadd.f32 0.0, %v557
        %v559 = vpop.f32.mrf.mxu0
        %v560 = vadd.f32 0.0, %v559
        %v561 = vpop.f32.mrf.mxu0
        %v562 = vpop.f32.mrf.mxu0
        %563 = vdwg.mxu0
        %v564 = vpack.c.bf16 %v296, %v296
        %v565 = vld [vmem:[%s3] sm:$0xf]
        %v566 = vld [vmem:[%s3 + $0x4] sm:$0xf]
        %v567 = vld [vmem:[%s3 + $0x8] sm:$0xf]
        %v568 = vld [vmem:[%s3 + $0xc] sm:$0xf]
        %v569 = vld [vmem:[%s3 + $0x10] sm:$0xf]
        %v570 = vld [vmem:[%s3 + $0x14] sm:$0xf]
        %v571 = vld [vmem:[%s3 + $0x18] sm:$0xf]
        %v572 = vld [vmem:[%s3 + $0x1c] sm:$0xf]
        %v581 = vunpack.c.l.b16 %v565
        %v582 = vunpack.c.l.b16 %v566
        %v583 = vunpack.c.l.b16 %v567
        %v584 = vunpack.c.l.b16 %v568
        %v585 = vunpack.c.l.b16 %v569
        %v586 = vunpack.c.l.b16 %v570
        %v587 = vunpack.c.l.b16 %v571
        %v588 = vunpack.c.l.b16 %v572
        %v589 = vpack.c.b16 %v582, %v581
        %v590 = vpack.c.b16 %v584, %v583
        %v591 = vpack.c.b16 %v586, %v585
        %v592 = vpack.c.b16 %v588, %v587
        %vm597 = vcmask 523264
        %v599 = vsel %vm597, %v564, 0
        %601 = vmatprep.subr.bf16.mxu0 0
        %602 = vmatpush1.bf16.msra.mxu0 0
        %603 = vmatprep.subr.bf16.mxu0 0
        %604 = vmatpush1.bf16.msra.mxu0 0
        %605 = vmatprep.subr.bf16.mxu0 0
        %606 = vmatpush1.bf16.msra.mxu0 0
        %607 = vmatprep.subr.bf16.mxu0 0
        %608 = vmatpush1.bf16.msra.mxu0 0
        %609 = vmatprep.subr.bf16.mxu0 0
        %610 = vmatpush1.bf16.msra.mxu0 %v592
        %611 = vmatprep.subr.bf16.mxu0 0
        %612 = vmatpush1.bf16.msra.mxu0 %v591
        %613 = vmatprep.subr.bf16.mxu0 0
        %614 = vmatpush1.bf16.msra.mxu0 %v590
        %615 = vmatprep.subr.bf16.mxu0 0
        %616 = vmatpush1.bf16.msra.mxu0 %v589
        %617 = vmatprep.subr.bf16.mxu0 0
        %618 = vmatpush2.bf16.msra.mxu0 0
        %619 = vmatprep.subr.bf16.mxu0 0
        %620 = vmatpush2.bf16.msra.mxu0 0
        %621 = vmatprep.subr.bf16.mxu0 0
        %622 = vmatpush2.bf16.msra.mxu0 0
        %623 = vmatprep.subr.bf16.mxu0 0
        %624 = vmatpush2.bf16.msra.mxu0 0
        %625 = vmatprep.subr.bf16.mxu0 0
        %626 = vmatpush2.bf16.msra.mxu0 0
        %627 = vmatprep.subr.bf16.mxu0 0
        %628 = vmatpush2.bf16.msra.mxu0 0
        %629 = vmatprep.subr.bf16.mxu0 0
        %630 = vmatpush2.bf16.msra.mxu0 0
        %631 = vmatprep.subr.bf16.mxu0 0
        %632 = vmatpush2.bf16.msra.mxu0 0
        %633 = vmatprep.mubr.bf16.mxu0 0
        %634 = vmatmul.mubr.bf16.gmra.mxu0 %v599
        %v635 = vpop.f32.mrf.mxu0
        %v636 = vadd.f32 %v435, %v635
        %v637 = vpop.f32.mrf.mxu0
        %v638 = vpop.f32.mrf.mxu0
        %v639 = vpop.f32.mrf.mxu0
        %640 = vdwg.mxu0
        %v641 = vld [vmem:[#allocation5] ss:$0 sm:$0xff]
        %v642 = vadd.f32 %v636, %v641
        %v643 = vld [vmem:[#allocation5 + $0x1] ss:$0 sm:$0xff]
        %v644 = vld [vmem:[#allocation5 + $0x2] ss:$0 sm:$0xff]
        %v645 = vsel %vm597, %v642, 0.0
        %646 = vadd.xlane.f32.xlu0 %v645
        %v647 = vpop.xlane.xlu0 %646
        %v648 = vmul.f32 %v642, %v642
        %v649 = vsel %vm597, %v648, 0.0
        %650 = vadd.xlane.f32.xlu0 %v649
        %v651 = vpop.xlane.xlu0 %650
        %v652 = vmul.f32 %v647, 0.015625
        %v653 = vmul.f32 %v651, 0.015625
        %v654 = vmul.f32 %v652, %v652
        %v655 = vsub.f32 %v653, %v654
        %v656 = vmax.f32 %v655, 0.0
        %v657 = vsub.f32 %v642, %v652
        %v658 = vadd.f32 %v656, 1e-05
        %v659 = vrsqrt.pop %v658
        %v660 = vmul.f32 %v657, %v659
        %v661 = vmul.f32 %v660, %v643
        %v662 = vadd.f32 %v661, %v644
        %v663 = vmax.f32 %v662, 0.0
        %v664 = vpack.c.bf16 %v663, %v663
        %v665 = vld [vmem:[%s3 + $0x20] sm:$0xf]
        %v666 = vld [vmem:[%s3 + $0x24] sm:$0xf]
        %v667 = vld [vmem:[%s3 + $0x28] sm:$0xf]
        %v668 = vld [vmem:[%s3 + $0x2c] sm:$0xf]
        %v669 = vld [vmem:[%s3 + $0x30] sm:$0xf]
        %v670 = vld [vmem:[%s3 + $0x34] sm:$0xf]
        %v671 = vld [vmem:[%s3 + $0x38] sm:$0xf]
        %v672 = vld [vmem:[%s3 + $0x3c] sm:$0xf]
        %v673 = vld [vmem:[#allocation5 + $0x3] ss:$0 sm:$0xff]
        %v682 = vunpack.c.l.b16 %v665
        %v683 = vunpack.c.l.b16 %v666
        %v684 = vunpack.c.l.b16 %v667
        %v685 = vunpack.c.l.b16 %v668
        %v686 = vunpack.c.l.b16 %v669
        %v687 = vunpack.c.l.b16 %v670
        %v688 = vunpack.c.l.b16 %v671
        %v689 = vunpack.c.l.b16 %v672
        %v690 = vpack.c.b16 %v683, %v682
        %v691 = vpack.c.b16 %v685, %v684
        %v692 = vpack.c.b16 %v687, %v686
        %v693 = vpack.c.b16 %v689, %v688
        %v699 = vsel %vm597, %v664, 0
        %701 = vmatprep.subr.bf16.mxu0 0
        %702 = vmatpush1.bf16.msra.mxu0 0
        %703 = vmatprep.subr.bf16.mxu0 0
        %704 = vmatpush1.bf16.msra.mxu0 0
        %705 = vmatprep.subr.bf16.mxu0 0
        %706 = vmatpush1.bf16.msra.mxu0 0
        %707 = vmatprep.subr.bf16.mxu0 0
        %708 = vmatpush1.bf16.msra.mxu0 0
        %709 = vmatprep.subr.bf16.mxu0 0
        %710 = vmatpush1.bf16.msra.mxu0 %v693
        %711 = vmatprep.subr.bf16.mxu0 0
        %712 = vmatpush1.bf16.msra.mxu0 %v692
        %713 = vmatprep.subr.bf16.mxu0 0
        %714 = vmatpush1.bf16.msra.mxu0 %v691
        %715 = vmatprep.subr.bf16.mxu0 0
        %716 = vmatpush1.bf16.msra.mxu0 %v690
        %717 = vmatprep.subr.bf16.mxu0 0
        %718 = vmatpush2.bf16.msra.mxu0 0
        %719 = vmatprep.subr.bf16.mxu0 0
        %720 = vmatpush2.bf16.msra.mxu0 0
        %721 = vmatprep.subr.bf16.mxu0 0
        %722 = vmatpush2.bf16.msra.mxu0 0
        %723 = vmatprep.subr.bf16.mxu0 0
        %724 = vmatpush2.bf16.msra.mxu0 0
        %725 = vmatprep.subr.bf16.mxu0 0
        %726 = vmatpush2.bf16.msra.mxu0 0
        %727 = vmatprep.subr.bf16.mxu0 0
        %728 = vmatpush2.bf16.msra.mxu0 0
        %729 = vmatprep.subr.bf16.mxu0 0
        %730 = vmatpush2.bf16.msra.mxu0 0
        %731 = vmatprep.subr.bf16.mxu0 0
        %732 = vmatpush2.bf16.msra.mxu0 0
        %733 = vmatprep.mubr.bf16.mxu0 0
        %734 = vmatmul.mubr.bf16.gmra.mxu0 %v699
        %v735 = vpop.f32.mrf.mxu0
        %v736 = vadd.f32 %v673, %v735
        %v737 = vpop.f32.mrf.mxu0
        %v738 = vpop.f32.mrf.mxu0
        %v739 = vpop.f32.mrf.mxu0
        %740 = vdwg.mxu0
        %v741 = vld [vmem:[#allocation5 + $0x4] ss:$0 sm:$0xff]
        %v742 = vld [vmem:[#allocation5 + $0x5] ss:$0 sm:$0xff]
        %v743 = vsel %vm597, %v736, 0.0
        %744 = vadd.xlane.f32.xlu0 %v743
        %v745 = vpop.xlane.xlu0 %744
        %v746 = vmul.f32 %v736, %v736
        %v747 = vsel %vm597, %v746, 0.0
        %748 = vadd.xlane.f32.xlu0 %v747
        %v749 = vpop.xlane.xlu0 %748
        %v750 = vmul.f32 %v745, 0.015625
        %v751 = vmul.f32 %v749, 0.015625
        %v752 = vmul.f32 %v750, %v750
        %v753 = vsub.f32 %v751, %v752
        %v754 = vmax.f32 %v753, 0.0
        %v755 = vsub.f32 %v736, %v750
        %v756 = vadd.f32 %v754, 1e-05
        %v757 = vrsqrt.pop %v756
        %v758 = vmul.f32 %v755, %v757
        %v759 = vmul.f32 %v758, %v741
        %v760 = vadd.f32 %v759, %v742
        %v761 = vmax.f32 %v760, 0.0
        %v762 = vpack.c.bf16 %v761, %v761
        %v763 = vld [vmem:[%s3 + $0x40] sm:$0xf]
        %v764 = vld [vmem:[%s3 + $0x44] sm:$0xf]
        %v765 = vld [vmem:[%s3 + $0x48] sm:$0xf]
        %v766 = vld [vmem:[%s3 + $0x4c] sm:$0xf]
        %v767 = vld [vmem:[%s3 + $0x50] sm:$0xf]
        %v768 = vld [vmem:[%s3 + $0x54] sm:$0xf]
        %v769 = vld [vmem:[%s3 + $0x58] sm:$0xf]
        %v770 = vld [vmem:[%s3 + $0x5c] sm:$0xf]
        %v771 = vld [vmem:[#allocation5 + $0x6] ss:$0 sm:$0xff]
        %v780 = vunpack.c.l.b16 %v763
        %v781 = vunpack.c.l.b16 %v764
        %v782 = vunpack.c.l.b16 %v765
        %v783 = vunpack.c.l.b16 %v766
        %v784 = vunpack.c.l.b16 %v767
        %v785 = vunpack.c.l.b16 %v768
        %v786 = vunpack.c.l.b16 %v769
        %v787 = vunpack.c.l.b16 %v770
        %v788 = vpack.c.b16 %v781, %v780
        %v789 = vpack.c.b16 %v783, %v782
        %v790 = vpack.c.b16 %v785, %v784
        %v791 = vpack.c.b16 %v787, %v786
        %v797 = vsel %vm597, %v762, 0
        %799 = vmatprep.subr.bf16.mxu0 0
        %800 = vmatpush1.bf16.msra.mxu0 0
        %801 = vmatprep.subr.bf16.mxu0 0
        %802 = vmatpush1.bf16.msra.mxu0 0
        %803 = vmatprep.subr.bf16.mxu0 0
        %804 = vmatpush1.bf16.msra.mxu0 0
        %805 = vmatprep.subr.bf16.mxu0 0
        %806 = vmatpush1.bf16.msra.mxu0 0
        %807 = vmatprep.subr.bf16.mxu0 0
        %808 = vmatpush1.bf16.msra.mxu0 %v791
        %809 = vmatprep.subr.bf16.mxu0 0
        %810 = vmatpush1.bf16.msra.mxu0 %v790
        %811 = vmatprep.subr.bf16.mxu0 0
        %812 = vmatpush1.bf16.msra.mxu0 %v789
        %813 = vmatprep.subr.bf16.mxu0 0
        %814 = vmatpush1.bf16.msra.mxu0 %v788
        %815 = vmatprep.subr.bf16.mxu0 0
        %816 = vmatpush2.bf16.msra.mxu0 0
        %817 = vmatprep.subr.bf16.mxu0 0
        %818 = vmatpush2.bf16.msra.mxu0 0
        %819 = vmatprep.subr.bf16.mxu0 0
        %820 = vmatpush2.bf16.msra.mxu0 0
        %821 = vmatprep.subr.bf16.mxu0 0
        %822 = vmatpush2.bf16.msra.mxu0 0
        %823 = vmatprep.subr.bf16.mxu0 0
        %824 = vmatpush2.bf16.msra.mxu0 0
        %825 = vmatprep.subr.bf16.mxu0 0
        %826 = vmatpush2.bf16.msra.mxu0 0
        %827 = vmatprep.subr.bf16.mxu0 0
        %828 = vmatpush2.bf16.msra.mxu0 0
        %829 = vmatprep.subr.bf16.mxu0 0
        %830 = vmatpush2.bf16.msra.mxu0 0
        %831 = vmatprep.mubr.bf16.mxu0 0
        %832 = vmatmul.mubr.bf16.gmra.mxu0 %v797
        %v833 = vpop.f32.mrf.mxu0
        %v834 = vadd.f32 %v771, %v833
        %v835 = vpop.f32.mrf.mxu0
        %v836 = vpop.f32.mrf.mxu0
        %v837 = vpop.f32.mrf.mxu0
        %838 = vdwg.mxu0
        %v839 = vadd.f32 %v296, %v834
        %v840 = vpack.c.bf16 %v839, %v839
        %v841 = vld [vmem:[%s3 + $0x60] sm:$0xf]
        %v842 = vld [vmem:[%s3 + $0x64] sm:$0xf]
        %v843 = vld [vmem:[%s3 + $0x68] sm:$0xf]
        %v844 = vld [vmem:[%s3 + $0x6c] sm:$0xf]
        %v845 = vld [vmem:[%s3 + $0x70] sm:$0xf]
        %v846 = vld [vmem:[%s3 + $0x74] sm:$0xf]
        %v847 = vld [vmem:[%s3 + $0x78] sm:$0xf]
        %v848 = vld [vmem:[%s3 + $0x7c] sm:$0xf]
        %v857 = vunpack.c.l.b16 %v841
        %v858 = vunpack.c.l.b16 %v842
        %v859 = vunpack.c.l.b16 %v843
        %v860 = vunpack.c.l.b16 %v844
        %v861 = vunpack.c.l.b16 %v845
        %v862 = vunpack.c.l.b16 %v846
        %v863 = vunpack.c.l.b16 %v847
        %v864 = vunpack.c.l.b16 %v848
        %v865 = vpack.c.b16 %v858, %v857
        %v866 = vpack.c.b16 %v860, %v859
        %v867 = vpack.c.b16 %v862, %v861
        %v868 = vpack.c.b16 %v864, %v863
        %v874 = vsel %vm597, %v840, 0
        %876 = vmatprep.subr.bf16.mxu0 0
        %877 = vmatpush1.bf16.msra.mxu0 0
        %878 = vmatprep.subr.bf16.mxu0 0
        %879 = vmatpush1.bf16.msra.mxu0 0
        %880 = vmatprep.subr.bf16.mxu0 0
        %881 = vmatpush1.bf16.msra.mxu0 0
        %882 = vmatprep.subr.bf16.mxu0 0
        %883 = vmatpush1.bf16.msra.mxu0 0
        %884 = vmatprep.subr.bf16.mxu0 0
        %885 = vmatpush1.bf16.msra.mxu0 %v868
        %886 = vmatprep.subr.bf16.mxu0 0
        %887 = vmatpush1.bf16.msra.mxu0 %v867
        %888 = vmatprep.subr.bf16.mxu0 0
        %889 = vmatpush1.bf16.msra.mxu0 %v866
        %890 = vmatprep.subr.bf16.mxu0 0
        %891 = vmatpush1.bf16.msra.mxu0 %v865
        %892 = vmatprep.subr.bf16.mxu0 0
        %893 = vmatpush2.bf16.msra.mxu0 0
        %894 = vmatprep.subr.bf16.mxu0 0
        %895 = vmatpush2.bf16.msra.mxu0 0
        %896 = vmatprep.subr.bf16.mxu0 0
        %897 = vmatpush2.bf16.msra.mxu0 0
        %898 = vmatprep.subr.bf16.mxu0 0
        %899 = vmatpush2.bf16.msra.mxu0 0
        %900 = vmatprep.subr.bf16.mxu0 0
        %901 = vmatpush2.bf16.msra.mxu0 0
        %902 = vmatprep.subr.bf16.mxu0 0
        %903 = vmatpush2.bf16.msra.mxu0 0
        %904 = vmatprep.subr.bf16.mxu0 0
        %905 = vmatpush2.bf16.msra.mxu0 0
        %906 = vmatprep.subr.bf16.mxu0 0
        %907 = vmatpush2.bf16.msra.mxu0 0
        %908 = vmatprep.mubr.bf16.mxu0 0
        %909 = vmatmul.mubr.bf16.gmra.mxu0 %v874
        %v910 = vpop.f32.mrf.mxu0
        %v911 = vadd.f32 %v437, %v910
        %v912 = vpop.f32.mrf.mxu0
        %v913 = vpop.f32.mrf.mxu0
        %v914 = vpop.f32.mrf.mxu0
        %915 = vdwg.mxu0
        %v916 = vld [vmem:[#allocation5 + $0x10] ss:$0 sm:$0xff]
        %v917 = vadd.f32 %v911, %v916
        %v918 = vld [vmem:[#allocation5 + $0x11] ss:$0 sm:$0xff]
        %v919 = vld [vmem:[#allocation5 + $0x12] ss:$0 sm:$0xff]
        %v920 = vsel %vm597, %v917, 0.0
        %921 = vadd.xlane.f32.xlu0 %v920
        %v922 = vpop.xlane.xlu0 %921
        %v923 = vmul.f32 %v917, %v917
        %v924 = vsel %vm597, %v923, 0.0
        %925 = vadd.xlane.f32.xlu0 %v924
        %v926 = vpop.xlane.xlu0 %925
        %v927 = vmul.f32 %v922, 0.015625
        %v928 = vmul.f32 %v926, 0.015625
        %v929 = vmul.f32 %v927, %v927
        %v930 = vsub.f32 %v928, %v929
        %v931 = vmax.f32 %v930, 0.0
        %v932 = vsub.f32 %v917, %v927
        %v933 = vadd.f32 %v931, 1e-05
        %v934 = vrsqrt.pop %v933
        %v935 = vmul.f32 %v932, %v934
        %v936 = vmul.f32 %v935, %v918
        %v937 = vadd.f32 %v936, %v919
        %v938 = vmax.f32 %v937, 0.0
        %v939 = vpack.c.bf16 %v938, %v938
        %v940 = vld [vmem:[%s3 + $0x80] sm:$0xf]
        %v941 = vld [vmem:[%s3 + $0x84] sm:$0xf]
        %v942 = vld [vmem:[%s3 + $0x88] sm:$0xf]
        %v943 = vld [vmem:[%s3 + $0x8c] sm:$0xf]
        %v944 = vld [vmem:[%s3 + $0x90] sm:$0xf]
        %v945 = vld [vmem:[%s3 + $0x94] sm:$0xf]
        %v946 = vld [vmem:[%s3 + $0x98] sm:$0xf]
        %v947 = vld [vmem:[%s3 + $0x9c] sm:$0xf]
        %v948 = vld [vmem:[#allocation5 + $0x13] ss:$0 sm:$0xff]
        %v957 = vunpack.c.l.b16 %v940
        %v958 = vunpack.c.l.b16 %v941
        %v959 = vunpack.c.l.b16 %v942
        %v960 = vunpack.c.l.b16 %v943
        %v961 = vunpack.c.l.b16 %v944
        %v962 = vunpack.c.l.b16 %v945
        %v963 = vunpack.c.l.b16 %v946
        %v964 = vunpack.c.l.b16 %v947
        %v965 = vpack.c.b16 %v958, %v957
        %v966 = vpack.c.b16 %v960, %v959
        %v967 = vpack.c.b16 %v962, %v961
        %v968 = vpack.c.b16 %v964, %v963
        %v974 = vsel %vm597, %v939, 0
        %976 = vmatprep.subr.bf16.mxu0 0
        %977 = vmatpush1.bf16.msra.mxu0 0
        %978 = vmatprep.subr.bf16.mxu0 0
        %979 = vmatpush1.bf16.msra.mxu0 0
        %980 = vmatprep.subr.bf16.mxu0 0
        %981 = vmatpush1.bf16.msra.mxu0 0
        %982 = vmatprep.subr.bf16.mxu0 0
        %983 = vmatpush1.bf16.msra.mxu0 0
        %984 = vmatprep.subr.bf16.mxu0 0
        %985 = vmatpush1.bf16.msra.mxu0 %v968
        %986 = vmatprep.subr.bf16.mxu0 0
        %987 = vmatpush1.bf16.msra.mxu0 %v967
        %988 = vmatprep.subr.bf16.mxu0 0
        %989 = vmatpush1.bf16.msra.mxu0 %v966
        %990 = vmatprep.subr.bf16.mxu0 0
        %991 = vmatpush1.bf16.msra.mxu0 %v965
        %992 = vmatprep.subr.bf16.mxu0 0
        %993 = vmatpush2.bf16.msra.mxu0 0
        %994 = vmatprep.subr.bf16.mxu0 0
        %995 = vmatpush2.bf16.msra.mxu0 0
        %996 = vmatprep.subr.bf16.mxu0 0
        %997 = vmatpush2.bf16.msra.mxu0 0
        %998 = vmatprep.subr.bf16.mxu0 0
        %999 = vmatpush2.bf16.msra.mxu0 0
        %1000 = vmatprep.subr.bf16.mxu0 0
        %1001 = vmatpush2.bf16.msra.mxu0 0
        %1002 = vmatprep.subr.bf16.mxu0 0
        %1003 = vmatpush2.bf16.msra.mxu0 0
        %1004 = vmatprep.subr.bf16.mxu0 0
        %1005 = vmatpush2.bf16.msra.mxu0 0
        %1006 = vmatprep.subr.bf16.mxu0 0
        %1007 = vmatpush2.bf16.msra.mxu0 0
        %1008 = vmatprep.mubr.bf16.mxu0 0
        %1009 = vmatmul.mubr.bf16.gmra.mxu0 %v974
        %v1010 = vpop.f32.mrf.mxu0
        %v1011 = vadd.f32 %v948, %v1010
        %v1012 = vpop.f32.mrf.mxu0
        %v1013 = vpop.f32.mrf.mxu0
        %v1014 = vpop.f32.mrf.mxu0
        %1015 = vdwg.mxu0
        %v1016 = vld [vmem:[#allocation5 + $0x14] ss:$0 sm:$0xff]
        %v1017 = vld [vmem:[#allocation5 + $0x15] ss:$0 sm:$0xff]
        %v1018 = vsel %vm597, %v1011, 0.0
        %1019 = vadd.xlane.f32.xlu0 %v1018
        %v1020 = vpop.xlane.xlu0 %1019
        %v1021 = vmul.f32 %v1011, %v1011
        %v1022 = vsel %vm597, %v1021, 0.0
        %1023 = vadd.xlane.f32.xlu0 %v1022
        %v1024 = vpop.xlane.xlu0 %1023
        %v1025 = vmul.f32 %v1020, 0.015625
        %v1026 = vmul.f32 %v1024, 0.015625
        %v1027 = vmul.f32 %v1025, %v1025
        %v1028 = vsub.f32 %v1026, %v1027
        %v1029 = vmax.f32 %v1028, 0.0
        %v1030 = vsub.f32 %v1011, %v1025
        %v1031 = vadd.f32 %v1029, 1e-05
        %v1032 = vrsqrt.pop %v1031
        %v1033 = vmul.f32 %v1030, %v1032
        %v1034 = vmul.f32 %v1033, %v1016
        %v1035 = vadd.f32 %v1034, %v1017
        %v1036 = vmax.f32 %v1035, 0.0
        %v1037 = vpack.c.bf16 %v1036, %v1036
        %v1038 = vld [vmem:[%s3 + $0xa0] sm:$0xf]
        %v1039 = vld [vmem:[%s3 + $0xa4] sm:$0xf]
        %v1040 = vld [vmem:[%s3 + $0xa8] sm:$0xf]
        %v1041 = vld [vmem:[%s3 + $0xac] sm:$0xf]
        %v1042 = vld [vmem:[%s3 + $0xb0] sm:$0xf]
        %v1043 = vld [vmem:[%s3 + $0xb4] sm:$0xf]
        %v1044 = vld [vmem:[%s3 + $0xb8] sm:$0xf]
        %v1045 = vld [vmem:[%s3 + $0xbc] sm:$0xf]
        %v1046 = vld [vmem:[#allocation5 + $0x16] ss:$0 sm:$0xff]
        %v1055 = vunpack.c.l.b16 %v1038
        %v1056 = vunpack.c.l.b16 %v1039
        %v1057 = vunpack.c.l.b16 %v1040
        %v1058 = vunpack.c.l.b16 %v1041
        %v1059 = vunpack.c.l.b16 %v1042
        %v1060 = vunpack.c.l.b16 %v1043
        %v1061 = vunpack.c.l.b16 %v1044
        %v1062 = vunpack.c.l.b16 %v1045
        %v1063 = vpack.c.b16 %v1056, %v1055
        %v1064 = vpack.c.b16 %v1058, %v1057
        %v1065 = vpack.c.b16 %v1060, %v1059
        %v1066 = vpack.c.b16 %v1062, %v1061
        %v1072 = vsel %vm597, %v1037, 0
        %1074 = vmatprep.subr.bf16.mxu0 0
        %1075 = vmatpush1.bf16.msra.mxu0 0
        %1076 = vmatprep.subr.bf16.mxu0 0
        %1077 = vmatpush1.bf16.msra.mxu0 0
        %1078 = vmatprep.subr.bf16.mxu0 0
        %1079 = vmatpush1.bf16.msra.mxu0 0
        %1080 = vmatprep.subr.bf16.mxu0 0
        %1081 = vmatpush1.bf16.msra.mxu0 0
        %1082 = vmatprep.subr.bf16.mxu0 0
        %1083 = vmatpush1.bf16.msra.mxu0 %v1066
        %1084 = vmatprep.subr.bf16.mxu0 0
        %1085 = vmatpush1.bf16.msra.mxu0 %v1065
        %1086 = vmatprep.subr.bf16.mxu0 0
        %1087 = vmatpush1.bf16.msra.mxu0 %v1064
        %1088 = vmatprep.subr.bf16.mxu0 0
        %1089 = vmatpush1.bf16.msra.mxu0 %v1063
        %1090 = vmatprep.subr.bf16.mxu0 0
        %1091 = vmatpush2.bf16.msra.mxu0 0
        %1092 = vmatprep.subr.bf16.mxu0 0
        %1093 = vmatpush2.bf16.msra.mxu0 0
        %1094 = vmatprep.subr.bf16.mxu0 0
        %1095 = vmatpush2.bf16.msra.mxu0 0
        %1096 = vmatprep.subr.bf16.mxu0 0
        %1097 = vmatpush2.bf16.msra.mxu0 0
        %1098 = vmatprep.subr.bf16.mxu0 0
        %1099 = vmatpush2.bf16.msra.mxu0 0
        %1100 = vmatprep.subr.bf16.mxu0 0
        %1101 = vmatpush2.bf16.msra.mxu0 0
        %1102 = vmatprep.subr.bf16.mxu0 0
        %1103 = vmatpush2.bf16.msra.mxu0 0
        %1104 = vmatprep.subr.bf16.mxu0 0
        %1105 = vmatpush2.bf16.msra.mxu0 0
        %1106 = vmatprep.mubr.bf16.mxu0 0
        %1107 = vmatmul.mubr.bf16.gmra.mxu0 %v1072
        %v1108 = vpop.f32.mrf.mxu0
        %v1109 = vadd.f32 %v1046, %v1108
        %v1110 = vpop.f32.mrf.mxu0
        %v1111 = vpop.f32.mrf.mxu0
        %v1112 = vpop.f32.mrf.mxu0
        %1113 = vdwg.mxu0
        %v1114 = vadd.f32 %v839, %v1109
        %v1115 = vpack.c.bf16 %v1114, %v1114
        %v1116 = vld [vmem:[%s3 + $0xc0] sm:$0xf]
        %v1117 = vld [vmem:[%s3 + $0xc4] sm:$0xf]
        %v1118 = vld [vmem:[%s3 + $0xc8] sm:$0xf]
        %v1119 = vld [vmem:[%s3 + $0xcc] sm:$0xf]
        %v1120 = vld [vmem:[%s3 + $0xd0] sm:$0xf]
        %v1121 = vld [vmem:[%s3 + $0xd4] sm:$0xf]
        %v1122 = vld [vmem:[%s3 + $0xd8] sm:$0xf]
        %v1123 = vld [vmem:[%s3 + $0xdc] sm:$0xf]
        %v1132 = vunpack.c.l.b16 %v1116
        %v1133 = vunpack.c.l.b16 %v1117
        %v1134 = vunpack.c.l.b16 %v1118
        %v1135 = vunpack.c.l.b16 %v1119
        %v1136 = vunpack.c.l.b16 %v1120
        %v1137 = vunpack.c.l.b16 %v1121
        %v1138 = vunpack.c.l.b16 %v1122
        %v1139 = vunpack.c.l.b16 %v1123
        %v1140 = vpack.c.b16 %v1133, %v1132
        %v1141 = vpack.c.b16 %v1135, %v1134
        %v1142 = vpack.c.b16 %v1137, %v1136
        %v1143 = vpack.c.b16 %v1139, %v1138
        %v1149 = vsel %vm597, %v1115, 0
        %1151 = vmatprep.subr.bf16.mxu0 0
        %1152 = vmatpush1.bf16.msra.mxu0 0
        %1153 = vmatprep.subr.bf16.mxu0 0
        %1154 = vmatpush1.bf16.msra.mxu0 0
        %1155 = vmatprep.subr.bf16.mxu0 0
        %1156 = vmatpush1.bf16.msra.mxu0 0
        %1157 = vmatprep.subr.bf16.mxu0 0
        %1158 = vmatpush1.bf16.msra.mxu0 0
        %1159 = vmatprep.subr.bf16.mxu0 0
        %1160 = vmatpush1.bf16.msra.mxu0 %v1143
        %1161 = vmatprep.subr.bf16.mxu0 0
        %1162 = vmatpush1.bf16.msra.mxu0 %v1142
        %1163 = vmatprep.subr.bf16.mxu0 0
        %1164 = vmatpush1.bf16.msra.mxu0 %v1141
        %1165 = vmatprep.subr.bf16.mxu0 0
        %1166 = vmatpush1.bf16.msra.mxu0 %v1140
        %1167 = vmatprep.subr.bf16.mxu0 0
        %1168 = vmatpush2.bf16.msra.mxu0 0
        %1169 = vmatprep.subr.bf16.mxu0 0
        %1170 = vmatpush2.bf16.msra.mxu0 0
        %1171 = vmatprep.subr.bf16.mxu0 0
        %1172 = vmatpush2.bf16.msra.mxu0 0
        %1173 = vmatprep.subr.bf16.mxu0 0
        %1174 = vmatpush2.bf16.msra.mxu0 0
        %1175 = vmatprep.subr.bf16.mxu0 0
        %1176 = vmatpush2.bf16.msra.mxu0 0
        %1177 = vmatprep.subr.bf16.mxu0 0
        %1178 = vmatpush2.bf16.msra.mxu0 0
        %1179 = vmatprep.subr.bf16.mxu0 0
        %1180 = vmatpush2.bf16.msra.mxu0 0
        %1181 = vmatprep.subr.bf16.mxu0 0
        %1182 = vmatpush2.bf16.msra.mxu0 0
        %1183 = vmatprep.mubr.bf16.mxu0 0
        %1184 = vmatmul.mubr.bf16.gmra.mxu0 %v1149
        %v1185 = vpop.f32.mrf.mxu0
        %v1186 = vadd.f32 %v476, %v1185
        %v1187 = vpop.f32.mrf.mxu0
        %v1188 = vpop.f32.mrf.mxu0
        %v1189 = vpop.f32.mrf.mxu0
        %1190 = vdwg.mxu0
        %v1191 = vld [vmem:[#allocation5 + $0x20] ss:$0 sm:$0xff]
        %v1192 = vadd.f32 %v1186, %v1191
        %v1193 = vld [vmem:[#allocation5 + $0x21] ss:$0 sm:$0xff]
        %v1194 = vld [vmem:[#allocation5 + $0x22] ss:$0 sm:$0xff]
        %v1195 = vsel %vm597, %v1192, 0.0
        %1196 = vadd.xlane.f32.xlu0 %v1195
        %v1197 = vpop.xlane.xlu0 %1196
        %v1198 = vmul.f32 %v1192, %v1192
        %v1199 = vsel %vm597, %v1198, 0.0
        %1200 = vadd.xlane.f32.xlu0 %v1199
        %v1201 = vpop.xlane.xlu0 %1200
        %v1202 = vmul.f32 %v1197, 0.015625
        %v1203 = vmul.f32 %v1201, 0.015625
        %v1204 = vmul.f32 %v1202, %v1202
        %v1205 = vsub.f32 %v1203, %v1204
        %v1206 = vmax.f32 %v1205, 0.0
        %v1207 = vsub.f32 %v1192, %v1202
        %v1208 = vadd.f32 %v1206, 1e-05
        %v1209 = vrsqrt.pop %v1208
        %v1210 = vmul.f32 %v1207, %v1209
        %v1211 = vmul.f32 %v1210, %v1193
        %v1212 = vadd.f32 %v1211, %v1194
        %v1213 = vmax.f32 %v1212, 0.0
        %v1214 = vpack.c.bf16 %v1213, %v1213
        %v1215 = vld [vmem:[%s3 + $0xe0] sm:$0xf]
        %v1216 = vld [vmem:[%s3 + $0xe4] sm:$0xf]
        %v1217 = vld [vmem:[%s3 + $0xe8] sm:$0xf]
        %v1218 = vld [vmem:[%s3 + $0xec] sm:$0xf]
        %v1219 = vld [vmem:[%s3 + $0xf0] sm:$0xf]
        %v1220 = vld [vmem:[%s3 + $0xf4] sm:$0xf]
        %v1221 = vld [vmem:[%s3 + $0xf8] sm:$0xf]
        %v1222 = vld [vmem:[%s3 + $0xfc] sm:$0xf]
        %v1223 = vld [vmem:[#allocation5 + $0x23] ss:$0 sm:$0xff]
        %v1232 = vunpack.c.l.b16 %v1215
        %v1233 = vunpack.c.l.b16 %v1216
        %v1234 = vunpack.c.l.b16 %v1217
        %v1235 = vunpack.c.l.b16 %v1218
        %v1236 = vunpack.c.l.b16 %v1219
        %v1237 = vunpack.c.l.b16 %v1220
        %v1238 = vunpack.c.l.b16 %v1221
        %v1239 = vunpack.c.l.b16 %v1222
        %v1240 = vpack.c.b16 %v1233, %v1232
        %v1241 = vpack.c.b16 %v1235, %v1234
        %v1242 = vpack.c.b16 %v1237, %v1236
        %v1243 = vpack.c.b16 %v1239, %v1238
        %v1249 = vsel %vm597, %v1214, 0
        %1251 = vmatprep.subr.bf16.mxu0 0
        %1252 = vmatpush1.bf16.msra.mxu0 0
        %1253 = vmatprep.subr.bf16.mxu0 0
        %1254 = vmatpush1.bf16.msra.mxu0 0
        %1255 = vmatprep.subr.bf16.mxu0 0
        %1256 = vmatpush1.bf16.msra.mxu0 0
        %1257 = vmatprep.subr.bf16.mxu0 0
        %1258 = vmatpush1.bf16.msra.mxu0 0
        %1259 = vmatprep.subr.bf16.mxu0 0
        %1260 = vmatpush1.bf16.msra.mxu0 %v1243
        %1261 = vmatprep.subr.bf16.mxu0 0
        %1262 = vmatpush1.bf16.msra.mxu0 %v1242
        %1263 = vmatprep.subr.bf16.mxu0 0
        %1264 = vmatpush1.bf16.msra.mxu0 %v1241
        %1265 = vmatprep.subr.bf16.mxu0 0
        %1266 = vmatpush1.bf16.msra.mxu0 %v1240
        %1267 = vmatprep.subr.bf16.mxu0 0
        %1268 = vmatpush2.bf16.msra.mxu0 0
        %1269 = vmatprep.subr.bf16.mxu0 0
        %1270 = vmatpush2.bf16.msra.mxu0 0
        %1271 = vmatprep.subr.bf16.mxu0 0
        %1272 = vmatpush2.bf16.msra.mxu0 0
        %1273 = vmatprep.subr.bf16.mxu0 0
        %1274 = vmatpush2.bf16.msra.mxu0 0
        %1275 = vmatprep.subr.bf16.mxu0 0
        %1276 = vmatpush2.bf16.msra.mxu0 0
        %1277 = vmatprep.subr.bf16.mxu0 0
        %1278 = vmatpush2.bf16.msra.mxu0 0
        %1279 = vmatprep.subr.bf16.mxu0 0
        %1280 = vmatpush2.bf16.msra.mxu0 0
        %1281 = vmatprep.subr.bf16.mxu0 0
        %1282 = vmatpush2.bf16.msra.mxu0 0
        %1283 = vmatprep.mubr.bf16.mxu0 0
        %1284 = vmatmul.mubr.bf16.gmra.mxu0 %v1249
        %v1285 = vpop.f32.mrf.mxu0
        %v1286 = vadd.f32 %v1223, %v1285
        %v1287 = vpop.f32.mrf.mxu0
        %v1288 = vpop.f32.mrf.mxu0
        %v1289 = vpop.f32.mrf.mxu0
        %1290 = vdwg.mxu0
        %v1291 = vld [vmem:[#allocation5 + $0x24] ss:$0 sm:$0xff]
        %v1292 = vld [vmem:[#allocation5 + $0x25] ss:$0 sm:$0xff]
        %v1293 = vsel %vm597, %v1286, 0.0
        %1294 = vadd.xlane.f32.xlu0 %v1293
        %v1295 = vpop.xlane.xlu0 %1294
        %v1296 = vmul.f32 %v1286, %v1286
        %v1297 = vsel %vm597, %v1296, 0.0
        %1298 = vadd.xlane.f32.xlu0 %v1297
        %v1299 = vpop.xlane.xlu0 %1298
        %v1300 = vmul.f32 %v1295, 0.015625
        %v1301 = vmul.f32 %v1299, 0.015625
        %v1302 = vmul.f32 %v1300, %v1300
        %v1303 = vsub.f32 %v1301, %v1302
        %v1304 = vmax.f32 %v1303, 0.0
        %v1305 = vsub.f32 %v1286, %v1300
        %v1306 = vadd.f32 %v1304, 1e-05
        %v1307 = vrsqrt.pop %v1306
        %v1308 = vmul.f32 %v1305, %v1307
        %v1309 = vmul.f32 %v1308, %v1291
        %v1310 = vadd.f32 %v1309, %v1292
        %v1311 = vmax.f32 %v1310, 0.0
        %v1312 = vpack.c.bf16 %v1311, %v1311
        %v1313 = vld [vmem:[%s3 + $0x100] sm:$0xf]
        %v1314 = vld [vmem:[%s3 + $0x104] sm:$0xf]
        %v1315 = vld [vmem:[%s3 + $0x108] sm:$0xf]
        %v1316 = vld [vmem:[%s3 + $0x10c] sm:$0xf]
        %v1317 = vld [vmem:[%s3 + $0x110] sm:$0xf]
        %v1318 = vld [vmem:[%s3 + $0x114] sm:$0xf]
        %v1319 = vld [vmem:[%s3 + $0x118] sm:$0xf]
        %v1320 = vld [vmem:[%s3 + $0x11c] sm:$0xf]
        %v1321 = vld [vmem:[#allocation5 + $0x26] ss:$0 sm:$0xff]
        %v1330 = vunpack.c.l.b16 %v1313
        %v1331 = vunpack.c.l.b16 %v1314
        %v1332 = vunpack.c.l.b16 %v1315
        %v1333 = vunpack.c.l.b16 %v1316
        %v1334 = vunpack.c.l.b16 %v1317
        %v1335 = vunpack.c.l.b16 %v1318
        %v1336 = vunpack.c.l.b16 %v1319
        %v1337 = vunpack.c.l.b16 %v1320
        %v1338 = vpack.c.b16 %v1331, %v1330
        %v1339 = vpack.c.b16 %v1333, %v1332
        %v1340 = vpack.c.b16 %v1335, %v1334
        %v1341 = vpack.c.b16 %v1337, %v1336
        %v1347 = vsel %vm597, %v1312, 0
        %1349 = vmatprep.subr.bf16.mxu0 0
        %1350 = vmatpush1.bf16.msra.mxu0 0
        %1351 = vmatprep.subr.bf16.mxu0 0
        %1352 = vmatpush1.bf16.msra.mxu0 0
        %1353 = vmatprep.subr.bf16.mxu0 0
        %1354 = vmatpush1.bf16.msra.mxu0 0
        %1355 = vmatprep.subr.bf16.mxu0 0
        %1356 = vmatpush1.bf16.msra.mxu0 0
        %1357 = vmatprep.subr.bf16.mxu0 0
        %1358 = vmatpush1.bf16.msra.mxu0 %v1341
        %1359 = vmatprep.subr.bf16.mxu0 0
        %1360 = vmatpush1.bf16.msra.mxu0 %v1340
        %1361 = vmatprep.subr.bf16.mxu0 0
        %1362 = vmatpush1.bf16.msra.mxu0 %v1339
        %1363 = vmatprep.subr.bf16.mxu0 0
        %1364 = vmatpush1.bf16.msra.mxu0 %v1338
        %1365 = vmatprep.subr.bf16.mxu0 0
        %1366 = vmatpush2.bf16.msra.mxu0 0
        %1367 = vmatprep.subr.bf16.mxu0 0
        %1368 = vmatpush2.bf16.msra.mxu0 0
        %1369 = vmatprep.subr.bf16.mxu0 0
        %1370 = vmatpush2.bf16.msra.mxu0 0
        %1371 = vmatprep.subr.bf16.mxu0 0
        %1372 = vmatpush2.bf16.msra.mxu0 0
        %1373 = vmatprep.subr.bf16.mxu0 0
        %1374 = vmatpush2.bf16.msra.mxu0 0
        %1375 = vmatprep.subr.bf16.mxu0 0
        %1376 = vmatpush2.bf16.msra.mxu0 0
        %1377 = vmatprep.subr.bf16.mxu0 0
        %1378 = vmatpush2.bf16.msra.mxu0 0
        %1379 = vmatprep.subr.bf16.mxu0 0
        %1380 = vmatpush2.bf16.msra.mxu0 0
        %1381 = vmatprep.mubr.bf16.mxu0 0
        %1382 = vmatmul.mubr.bf16.gmra.mxu0 %v1347
        %v1383 = vpop.f32.mrf.mxu0
        %v1384 = vadd.f32 %v1321, %v1383
        %v1385 = vpop.f32.mrf.mxu0
        %v1386 = vpop.f32.mrf.mxu0
        %v1387 = vpop.f32.mrf.mxu0
        %1388 = vdwg.mxu0
        %v1389 = vadd.f32 %v1114, %v1384
        %v1390 = vpack.c.bf16 %v1389, %v1389
        %v1391 = vld [vmem:[%s3 + $0x120] sm:$0xf]
        %v1392 = vld [vmem:[%s3 + $0x124] sm:$0xf]
        %v1393 = vld [vmem:[%s3 + $0x128] sm:$0xf]
        %v1394 = vld [vmem:[%s3 + $0x12c] sm:$0xf]
        %v1395 = vld [vmem:[%s3 + $0x130] sm:$0xf]
        %v1396 = vld [vmem:[%s3 + $0x134] sm:$0xf]
        %v1397 = vld [vmem:[%s3 + $0x138] sm:$0xf]
        %v1398 = vld [vmem:[%s3 + $0x13c] sm:$0xf]
        %v1407 = vunpack.c.l.b16 %v1391
        %v1408 = vunpack.c.l.b16 %v1392
        %v1409 = vunpack.c.l.b16 %v1393
        %v1410 = vunpack.c.l.b16 %v1394
        %v1411 = vunpack.c.l.b16 %v1395
        %v1412 = vunpack.c.l.b16 %v1396
        %v1413 = vunpack.c.l.b16 %v1397
        %v1414 = vunpack.c.l.b16 %v1398
        %v1415 = vpack.c.b16 %v1408, %v1407
        %v1416 = vpack.c.b16 %v1410, %v1409
        %v1417 = vpack.c.b16 %v1412, %v1411
        %v1418 = vpack.c.b16 %v1414, %v1413
        %v1424 = vsel %vm597, %v1390, 0
        %1426 = vmatprep.subr.bf16.mxu0 0
        %1427 = vmatpush1.bf16.msra.mxu0 0
        %1428 = vmatprep.subr.bf16.mxu0 0
        %1429 = vmatpush1.bf16.msra.mxu0 0
        %1430 = vmatprep.subr.bf16.mxu0 0
        %1431 = vmatpush1.bf16.msra.mxu0 0
        %1432 = vmatprep.subr.bf16.mxu0 0
        %1433 = vmatpush1.bf16.msra.mxu0 0
        %1434 = vmatprep.subr.bf16.mxu0 0
        %1435 = vmatpush1.bf16.msra.mxu0 %v1418
        %1436 = vmatprep.subr.bf16.mxu0 0
        %1437 = vmatpush1.bf16.msra.mxu0 %v1417
        %1438 = vmatprep.subr.bf16.mxu0 0
        %1439 = vmatpush1.bf16.msra.mxu0 %v1416
        %1440 = vmatprep.subr.bf16.mxu0 0
        %1441 = vmatpush1.bf16.msra.mxu0 %v1415
        %1442 = vmatprep.subr.bf16.mxu0 0
        %1443 = vmatpush2.bf16.msra.mxu0 0
        %1444 = vmatprep.subr.bf16.mxu0 0
        %1445 = vmatpush2.bf16.msra.mxu0 0
        %1446 = vmatprep.subr.bf16.mxu0 0
        %1447 = vmatpush2.bf16.msra.mxu0 0
        %1448 = vmatprep.subr.bf16.mxu0 0
        %1449 = vmatpush2.bf16.msra.mxu0 0
        %1450 = vmatprep.subr.bf16.mxu0 0
        %1451 = vmatpush2.bf16.msra.mxu0 0
        %1452 = vmatprep.subr.bf16.mxu0 0
        %1453 = vmatpush2.bf16.msra.mxu0 0
        %1454 = vmatprep.subr.bf16.mxu0 0
        %1455 = vmatpush2.bf16.msra.mxu0 0
        %1456 = vmatprep.subr.bf16.mxu0 0
        %1457 = vmatpush2.bf16.msra.mxu0 0
        %1458 = vmatprep.mubr.bf16.mxu0 0
        %1459 = vmatmul.mubr.bf16.gmra.mxu0 %v1424
        %v1460 = vpop.f32.mrf.mxu0
        %v1461 = vadd.f32 %v478, %v1460
        %v1462 = vpop.f32.mrf.mxu0
        %v1463 = vpop.f32.mrf.mxu0
        %v1464 = vpop.f32.mrf.mxu0
        %1465 = vdwg.mxu0
        %v1466 = vld [vmem:[#allocation5 + $0x30] ss:$0 sm:$0xff]
        %v1467 = vadd.f32 %v1461, %v1466
        %v1468 = vld [vmem:[#allocation5 + $0x31] ss:$0 sm:$0xff]
        %v1469 = vld [vmem:[#allocation5 + $0x32] ss:$0 sm:$0xff]
        %v1470 = vsel %vm597, %v1467, 0.0
        %1471 = vadd.xlane.f32.xlu0 %v1470
        %v1472 = vpop.xlane.xlu0 %1471
        %v1473 = vmul.f32 %v1467, %v1467
        %v1474 = vsel %vm597, %v1473, 0.0
        %1475 = vadd.xlane.f32.xlu0 %v1474
        %v1476 = vpop.xlane.xlu0 %1475
        %v1477 = vmul.f32 %v1472, 0.015625
        %v1478 = vmul.f32 %v1476, 0.015625
        %v1479 = vmul.f32 %v1477, %v1477
        %v1480 = vsub.f32 %v1478, %v1479
        %v1481 = vmax.f32 %v1480, 0.0
        %v1482 = vsub.f32 %v1467, %v1477
        %v1483 = vadd.f32 %v1481, 1e-05
        %v1484 = vrsqrt.pop %v1483
        %v1485 = vmul.f32 %v1482, %v1484
        %v1486 = vmul.f32 %v1485, %v1468
        %v1487 = vadd.f32 %v1486, %v1469
        %v1488 = vmax.f32 %v1487, 0.0
        %v1489 = vpack.c.bf16 %v1488, %v1488
        %v1490 = vld [vmem:[%s3 + $0x140] sm:$0xf]
        %v1491 = vld [vmem:[%s3 + $0x144] sm:$0xf]
        %v1492 = vld [vmem:[%s3 + $0x148] sm:$0xf]
        %v1493 = vld [vmem:[%s3 + $0x14c] sm:$0xf]
        %v1494 = vld [vmem:[%s3 + $0x150] sm:$0xf]
        %v1495 = vld [vmem:[%s3 + $0x154] sm:$0xf]
        %v1496 = vld [vmem:[%s3 + $0x158] sm:$0xf]
        %v1497 = vld [vmem:[%s3 + $0x15c] sm:$0xf]
        %v1498 = vld [vmem:[#allocation5 + $0x33] ss:$0 sm:$0xff]
        %v1507 = vunpack.c.l.b16 %v1490
        %v1508 = vunpack.c.l.b16 %v1491
        %v1509 = vunpack.c.l.b16 %v1492
        %v1510 = vunpack.c.l.b16 %v1493
        %v1511 = vunpack.c.l.b16 %v1494
        %v1512 = vunpack.c.l.b16 %v1495
        %v1513 = vunpack.c.l.b16 %v1496
        %v1514 = vunpack.c.l.b16 %v1497
        %v1515 = vpack.c.b16 %v1508, %v1507
        %v1516 = vpack.c.b16 %v1510, %v1509
        %v1517 = vpack.c.b16 %v1512, %v1511
        %v1518 = vpack.c.b16 %v1514, %v1513
        %v1524 = vsel %vm597, %v1489, 0
        %1526 = vmatprep.subr.bf16.mxu0 0
        %1527 = vmatpush1.bf16.msra.mxu0 0
        %1528 = vmatprep.subr.bf16.mxu0 0
        %1529 = vmatpush1.bf16.msra.mxu0 0
        %1530 = vmatprep.subr.bf16.mxu0 0
        %1531 = vmatpush1.bf16.msra.mxu0 0
        %1532 = vmatprep.subr.bf16.mxu0 0
        %1533 = vmatpush1.bf16.msra.mxu0 0
        %1534 = vmatprep.subr.bf16.mxu0 0
        %1535 = vmatpush1.bf16.msra.mxu0 %v1518
        %1536 = vmatprep.subr.bf16.mxu0 0
        %1537 = vmatpush1.bf16.msra.mxu0 %v1517
        %1538 = vmatprep.subr.bf16.mxu0 0
        %1539 = vmatpush1.bf16.msra.mxu0 %v1516
        %1540 = vmatprep.subr.bf16.mxu0 0
        %1541 = vmatpush1.bf16.msra.mxu0 %v1515
        %1542 = vmatprep.subr.bf16.mxu0 0
        %1543 = vmatpush2.bf16.msra.mxu0 0
        %1544 = vmatprep.subr.bf16.mxu0 0
        %1545 = vmatpush2.bf16.msra.mxu0 0
        %1546 = vmatprep.subr.bf16.mxu0 0
        %1547 = vmatpush2.bf16.msra.mxu0 0
        %1548 = vmatprep.subr.bf16.mxu0 0
        %1549 = vmatpush2.bf16.msra.mxu0 0
        %1550 = vmatprep.subr.bf16.mxu0 0
        %1551 = vmatpush2.bf16.msra.mxu0 0
        %1552 = vmatprep.subr.bf16.mxu0 0
        %1553 = vmatpush2.bf16.msra.mxu0 0
        %1554 = vmatprep.subr.bf16.mxu0 0
        %1555 = vmatpush2.bf16.msra.mxu0 0
        %1556 = vmatprep.subr.bf16.mxu0 0
        %1557 = vmatpush2.bf16.msra.mxu0 0
        %1558 = vmatprep.mubr.bf16.mxu0 0
        %1559 = vmatmul.mubr.bf16.gmra.mxu0 %v1524
        %v1560 = vpop.f32.mrf.mxu0
        %v1561 = vadd.f32 %v1498, %v1560
        %v1562 = vpop.f32.mrf.mxu0
        %v1563 = vpop.f32.mrf.mxu0
        %v1564 = vpop.f32.mrf.mxu0
        %1565 = vdwg.mxu0
        %v1566 = vld [vmem:[#allocation5 + $0x34] ss:$0 sm:$0xff]
        %v1567 = vld [vmem:[#allocation5 + $0x35] ss:$0 sm:$0xff]
        %v1568 = vsel %vm597, %v1561, 0.0
        %1569 = vadd.xlane.f32.xlu0 %v1568
        %v1570 = vpop.xlane.xlu0 %1569
        %v1571 = vmul.f32 %v1561, %v1561
        %v1572 = vsel %vm597, %v1571, 0.0
        %1573 = vadd.xlane.f32.xlu0 %v1572
        %v1574 = vpop.xlane.xlu0 %1573
        %v1575 = vmul.f32 %v1570, 0.015625
        %v1576 = vmul.f32 %v1574, 0.015625
        %v1577 = vmul.f32 %v1575, %v1575
        %v1578 = vsub.f32 %v1576, %v1577
        %v1579 = vmax.f32 %v1578, 0.0
        %v1580 = vsub.f32 %v1561, %v1575
        %v1581 = vadd.f32 %v1579, 1e-05
        %v1582 = vrsqrt.pop %v1581
        %v1583 = vmul.f32 %v1580, %v1582
        %v1584 = vmul.f32 %v1583, %v1566
        %v1585 = vadd.f32 %v1584, %v1567
        %v1586 = vmax.f32 %v1585, 0.0
        %v1587 = vpack.c.bf16 %v1586, %v1586
        %v1588 = vld [vmem:[%s3 + $0x160] sm:$0xf]
        %v1589 = vld [vmem:[%s3 + $0x164] sm:$0xf]
        %v1590 = vld [vmem:[%s3 + $0x168] sm:$0xf]
        %v1591 = vld [vmem:[%s3 + $0x16c] sm:$0xf]
        %v1592 = vld [vmem:[%s3 + $0x170] sm:$0xf]
        %v1593 = vld [vmem:[%s3 + $0x174] sm:$0xf]
        %v1594 = vld [vmem:[%s3 + $0x178] sm:$0xf]
        %v1595 = vld [vmem:[%s3 + $0x17c] sm:$0xf]
        %v1596 = vld [vmem:[#allocation5 + $0x36] ss:$0 sm:$0xff]
        %v1605 = vunpack.c.l.b16 %v1588
        %v1606 = vunpack.c.l.b16 %v1589
        %v1607 = vunpack.c.l.b16 %v1590
        %v1608 = vunpack.c.l.b16 %v1591
        %v1609 = vunpack.c.l.b16 %v1592
        %v1610 = vunpack.c.l.b16 %v1593
        %v1611 = vunpack.c.l.b16 %v1594
        %v1612 = vunpack.c.l.b16 %v1595
        %v1613 = vpack.c.b16 %v1606, %v1605
        %v1614 = vpack.c.b16 %v1608, %v1607
        %v1615 = vpack.c.b16 %v1610, %v1609
        %v1616 = vpack.c.b16 %v1612, %v1611
        %v1622 = vsel %vm597, %v1587, 0
        %1624 = vmatprep.subr.bf16.mxu0 0
        %1625 = vmatpush1.bf16.msra.mxu0 0
        %1626 = vmatprep.subr.bf16.mxu0 0
        %1627 = vmatpush1.bf16.msra.mxu0 0
        %1628 = vmatprep.subr.bf16.mxu0 0
        %1629 = vmatpush1.bf16.msra.mxu0 0
        %1630 = vmatprep.subr.bf16.mxu0 0
        %1631 = vmatpush1.bf16.msra.mxu0 0
        %1632 = vmatprep.subr.bf16.mxu0 0
        %1633 = vmatpush1.bf16.msra.mxu0 %v1616
        %1634 = vmatprep.subr.bf16.mxu0 0
        %1635 = vmatpush1.bf16.msra.mxu0 %v1615
        %1636 = vmatprep.subr.bf16.mxu0 0
        %1637 = vmatpush1.bf16.msra.mxu0 %v1614
        %1638 = vmatprep.subr.bf16.mxu0 0
        %1639 = vmatpush1.bf16.msra.mxu0 %v1613
        %1640 = vmatprep.subr.bf16.mxu0 0
        %1641 = vmatpush2.bf16.msra.mxu0 0
        %1642 = vmatprep.subr.bf16.mxu0 0
        %1643 = vmatpush2.bf16.msra.mxu0 0
        %1644 = vmatprep.subr.bf16.mxu0 0
        %1645 = vmatpush2.bf16.msra.mxu0 0
        %1646 = vmatprep.subr.bf16.mxu0 0
        %1647 = vmatpush2.bf16.msra.mxu0 0
        %1648 = vmatprep.subr.bf16.mxu0 0
        %1649 = vmatpush2.bf16.msra.mxu0 0
        %1650 = vmatprep.subr.bf16.mxu0 0
        %1651 = vmatpush2.bf16.msra.mxu0 0
        %1652 = vmatprep.subr.bf16.mxu0 0
        %1653 = vmatpush2.bf16.msra.mxu0 0
        %1654 = vmatprep.subr.bf16.mxu0 0
        %1655 = vmatpush2.bf16.msra.mxu0 0
        %1656 = vmatprep.mubr.bf16.mxu0 0
        %1657 = vmatmul.mubr.bf16.gmra.mxu0 %v1622
        %v1658 = vpop.f32.mrf.mxu0
        %v1659 = vadd.f32 %v1596, %v1658
        %v1660 = vpop.f32.mrf.mxu0
        %v1661 = vpop.f32.mrf.mxu0
        %v1662 = vpop.f32.mrf.mxu0
        %1663 = vdwg.mxu0
        %v1664 = vadd.f32 %v1389, %v1659
        %s1665 = scalar_lea.vmem [#allocation5], 64
        %v1666 = vld [vmem:[%s1665] ss:$8 sm:$0x3]
        %v1668 = vlaneseq
        %v1669 = vshrl.u32 %v1668, 7
        %v1670 = vsub.s32 0, %v1669
        %v1671 = vrot.slane %v1666, %v1670
        %v1672 = vlaneseq
        %v1673 = vshrl.u32 %v1672, 7
        %v1674 = vsub.s32 1, %v1673
        %v1675 = vrot.slane %v1666, %v1674
        %v1678 = vadd.f32 %v517, %v1671
        %v1679 = vadd.f32 %v519, %v1675
        %v1680 = vmax.f32 %v1678, 0.0
        %v1681 = vmax.f32 %v1679, 0.0
        %s1682 = scalar_lea.vmem [#allocation5], 65
        %v1683 = vld [vmem:[%s1682] ss:$8 sm:$0x3]
        %v1685 = vlaneseq
        %v1686 = vshrl.u32 %v1685, 7
        %v1687 = vsub.s32 0, %v1686
        %v1688 = vrot.slane %v1683, %v1687
        %v1689 = vlaneseq
        %v1690 = vshrl.u32 %v1689, 7
        %v1691 = vsub.s32 1, %v1690
        %v1692 = vrot.slane %v1683, %v1691
        %v1695 = vadd.f32 %v558, %v1688
        %v1696 = vadd.f32 %v560, %v1692
        %v1697 = vmax.f32 %v1695, 0.0
        %v1698 = vmax.f32 %v1696, 0.0
        %v1699 = vpack.c.bf16 %v1680, %v1680
        %v1700 = vpack.c.bf16 %v1681, %v1681
        %v1701 = vld [vmem:[%s4] sm:$0xff]
        %v1702 = vld [vmem:[%s4 + $0x8] sm:$0xff]
        %v1703 = vld [vmem:[%s4 + $0x10] sm:$0xff]
        %v1704 = vld [vmem:[%s4 + $0x18] sm:$0xff]
        %v1705 = vld [vmem:[%s4 + $0x20] sm:$0xff]
        %v1706 = vld [vmem:[%s4 + $0x28] sm:$0xff]
        %v1707 = vld [vmem:[%s4 + $0x30] sm:$0xff]
        %v1708 = vld [vmem:[%s4 + $0x38] sm:$0xff]
        %v1709 = vld [vmem:[%s4 + $0x40] sm:$0xff]
        %v1710 = vld [vmem:[%s4 + $0x48] sm:$0xff]
        %v1711 = vld [vmem:[%s4 + $0x50] sm:$0xff]
        %v1712 = vld [vmem:[%s4 + $0x58] sm:$0xff]
        %v1713 = vld [vmem:[%s4 + $0x60] sm:$0xff]
        %v1714 = vld [vmem:[%s4 + $0x68] sm:$0xff]
        %v1715 = vld [vmem:[%s4 + $0x70] sm:$0xff]
        %v1716 = vld [vmem:[%s4 + $0x78] sm:$0xff]
        %v1717 = vld [vmem:[%s4 + $0x80] sm:$0xff]
        %v1718 = vld [vmem:[%s4 + $0x88] sm:$0xff]
        %v1719 = vld [vmem:[%s4 + $0x90] sm:$0xff]
        %v1720 = vld [vmem:[%s4 + $0x98] sm:$0xff]
        %v1721 = vld [vmem:[%s4 + $0xa0] sm:$0xff]
        %v1722 = vld [vmem:[%s4 + $0xa8] sm:$0xff]
        %v1723 = vld [vmem:[%s4 + $0xb0] sm:$0xff]
        %v1724 = vld [vmem:[%s4 + $0xb8] sm:$0xff]
        %v1725 = vld [vmem:[%s4 + $0xc0] sm:$0xff]
        %v1726 = vld [vmem:[%s4 + $0xc8] sm:$0xff]
        %v1727 = vld [vmem:[%s4 + $0xd0] sm:$0xff]
        %v1728 = vld [vmem:[%s4 + $0xd8] sm:$0xff]
        %v1729 = vld [vmem:[%s4 + $0xe0] sm:$0xff]
        %v1730 = vld [vmem:[%s4 + $0xe8] sm:$0xff]
        %v1731 = vld [vmem:[%s4 + $0xf0] sm:$0xff]
        %v1732 = vld [vmem:[%s4 + $0xf8] sm:$0xff]
        %s1733 = scalar_lea.vmem [#allocation5], 66
        %v1734 = vld [vmem:[%s1733] ss:$8 sm:$0x3]
        %v1736 = vlaneseq
        %v1737 = vshrl.u32 %v1736, 7
        %v1738 = vsub.s32 0, %v1737
        %v1739 = vrot.slane %v1734, %v1738
        %v1740 = vlaneseq
        %v1741 = vshrl.u32 %v1740, 7
        %v1742 = vsub.s32 1, %v1741
        %v1743 = vrot.slane %v1734, %v1742
        %v1778 = vunpack.c.l.b16 %v1701
        %v1779 = vunpack.c.h.b16 %v1701
        %v1780 = vunpack.c.l.b16 %v1702
        %v1781 = vunpack.c.h.b16 %v1702
        %v1782 = vunpack.c.l.b16 %v1703
        %v1783 = vunpack.c.h.b16 %v1703
        %v1784 = vunpack.c.l.b16 %v1704
        %v1785 = vunpack.c.h.b16 %v1704
        %v1786 = vunpack.c.l.b16 %v1705
        %v1787 = vunpack.c.h.b16 %v1705
        %v1788 = vunpack.c.l.b16 %v1706
        %v1789 = vunpack.c.h.b16 %v1706
        %v1790 = vunpack.c.l.b16 %v1707
        %v1791 = vunpack.c.h.b16 %v1707
        %v1792 = vunpack.c.l.b16 %v1708
        %v1793 = vunpack.c.h.b16 %v1708
        %v1794 = vunpack.c.l.b16 %v1709
        %v1795 = vunpack.c.h.b16 %v1709
        %v1796 = vunpack.c.l.b16 %v1710
        %v1797 = vunpack.c.h.b16 %v1710
        %v1798 = vunpack.c.l.b16 %v1711
        %v1799 = vunpack.c.h.b16 %v1711
        %v1800 = vunpack.c.l.b16 %v1712
        %v1801 = vunpack.c.h.b16 %v1712
        %v1802 = vunpack.c.l.b16 %v1713
        %v1803 = vunpack.c.h.b16 %v1713
        %v1804 = vunpack.c.l.b16 %v1714
        %v1805 = vunpack.c.h.b16 %v1714
        %v1806 = vunpack.c.l.b16 %v1715
        %v1807 = vunpack.c.h.b16 %v1715
        %v1808 = vunpack.c.l.b16 %v1716
        %v1809 = vunpack.c.h.b16 %v1716
        %v1810 = vunpack.c.l.b16 %v1717
        %v1811 = vunpack.c.h.b16 %v1717
        %v1812 = vunpack.c.l.b16 %v1718
        %v1813 = vunpack.c.h.b16 %v1718
        %v1814 = vunpack.c.l.b16 %v1719
        %v1815 = vunpack.c.h.b16 %v1719
        %v1816 = vunpack.c.l.b16 %v1720
        %v1817 = vunpack.c.h.b16 %v1720
        %v1818 = vunpack.c.l.b16 %v1721
        %v1819 = vunpack.c.h.b16 %v1721
        %v1820 = vunpack.c.l.b16 %v1722
        %v1821 = vunpack.c.h.b16 %v1722
        %v1822 = vunpack.c.l.b16 %v1723
        %v1823 = vunpack.c.h.b16 %v1723
        %v1824 = vunpack.c.l.b16 %v1724
        %v1825 = vunpack.c.h.b16 %v1724
        %v1826 = vunpack.c.l.b16 %v1725
        %v1827 = vunpack.c.h.b16 %v1725
        %v1828 = vunpack.c.l.b16 %v1726
        %v1829 = vunpack.c.h.b16 %v1726
        %v1830 = vunpack.c.l.b16 %v1727
        %v1831 = vunpack.c.h.b16 %v1727
        %v1832 = vunpack.c.l.b16 %v1728
        %v1833 = vunpack.c.h.b16 %v1728
        %v1834 = vunpack.c.l.b16 %v1729
        %v1835 = vunpack.c.h.b16 %v1729
        %v1836 = vunpack.c.l.b16 %v1730
        %v1837 = vunpack.c.h.b16 %v1730
        %v1838 = vunpack.c.l.b16 %v1731
        %v1839 = vunpack.c.h.b16 %v1731
        %v1840 = vunpack.c.l.b16 %v1732
        %v1841 = vunpack.c.h.b16 %v1732
        %v1842 = vpack.c.b16 %v1780, %v1778
        %v1843 = vpack.c.b16 %v1781, %v1779
        %v1844 = vpack.c.b16 %v1784, %v1782
        %v1845 = vpack.c.b16 %v1785, %v1783
        %v1846 = vpack.c.b16 %v1788, %v1786
        %v1847 = vpack.c.b16 %v1789, %v1787
        %v1848 = vpack.c.b16 %v1792, %v1790
        %v1849 = vpack.c.b16 %v1793, %v1791
        %v1850 = vpack.c.b16 %v1796, %v1794
        %v1851 = vpack.c.b16 %v1797, %v1795
        %v1852 = vpack.c.b16 %v1800, %v1798
        %v1853 = vpack.c.b16 %v1801, %v1799
        %v1854 = vpack.c.b16 %v1804, %v1802
        %v1855 = vpack.c.b16 %v1805, %v1803
        %v1856 = vpack.c.b16 %v1808, %v1806
        %v1857 = vpack.c.b16 %v1809, %v1807
        %v1858 = vpack.c.b16 %v1812, %v1810
        %v1859 = vpack.c.b16 %v1813, %v1811
        %v1860 = vpack.c.b16 %v1816, %v1814
        %v1861 = vpack.c.b16 %v1817, %v1815
        %v1862 = vpack.c.b16 %v1820, %v1818
        %v1863 = vpack.c.b16 %v1821, %v1819
        %v1864 = vpack.c.b16 %v1824, %v1822
        %v1865 = vpack.c.b16 %v1825, %v1823
        %v1866 = vpack.c.b16 %v1828, %v1826
        %v1867 = vpack.c.b16 %v1829, %v1827
        %v1868 = vpack.c.b16 %v1832, %v1830
        %v1869 = vpack.c.b16 %v1833, %v1831
        %v1870 = vpack.c.b16 %v1836, %v1834
        %v1871 = vpack.c.b16 %v1837, %v1835
        %v1872 = vpack.c.b16 %v1840, %v1838
        %v1873 = vpack.c.b16 %v1841, %v1839
        %1906 = vmatprep.subr.bf16.mxu0 %v1857
        %1907 = vmatpush1.bf16.msra.mxu0 %v1856
        %1908 = vmatprep.subr.bf16.mxu0 %v1855
        %1909 = vmatpush1.bf16.msra.mxu0 %v1854
        %1910 = vmatprep.subr.bf16.mxu0 %v1853
        %1911 = vmatpush1.bf16.msra.mxu0 %v1852
        %1912 = vmatprep.subr.bf16.mxu0 %v1851
        %1913 = vmatpush1.bf16.msra.mxu0 %v1850
        %1914 = vmatprep.subr.bf16.mxu0 %v1849
        %1915 = vmatpush1.bf16.msra.mxu0 %v1848
        %1916 = vmatprep.subr.bf16.mxu0 %v1847
        %1917 = vmatpush1.bf16.msra.mxu0 %v1846
        %1918 = vmatprep.subr.bf16.mxu0 %v1845
        %1919 = vmatpush1.bf16.msra.mxu0 %v1844
        %1920 = vmatprep.subr.bf16.mxu0 %v1843
        %1921 = vmatpush1.bf16.msra.mxu0 %v1842
        %1922 = vmatprep.subr.bf16.mxu0 %v1873
        %1923 = vmatpush2.bf16.msra.mxu0 %v1872
        %1924 = vmatprep.subr.bf16.mxu0 %v1871
        %1925 = vmatpush2.bf16.msra.mxu0 %v1870
        %1926 = vmatprep.subr.bf16.mxu0 %v1869
        %1927 = vmatpush2.bf16.msra.mxu0 %v1868
        %1928 = vmatprep.subr.bf16.mxu0 %v1867
        %1929 = vmatpush2.bf16.msra.mxu0 %v1866
        %1930 = vmatprep.subr.bf16.mxu0 %v1865
        %1931 = vmatpush2.bf16.msra.mxu0 %v1864
        %1932 = vmatprep.subr.bf16.mxu0 %v1863
        %1933 = vmatpush2.bf16.msra.mxu0 %v1862
        %1934 = vmatprep.subr.bf16.mxu0 %v1861
        %1935 = vmatpush2.bf16.msra.mxu0 %v1860
        %1936 = vmatprep.subr.bf16.mxu0 %v1859
        %1937 = vmatpush2.bf16.msra.mxu0 %v1858
        %1938 = vmatprep.mubr.bf16.mxu0 %v1700
        %1939 = vmatmul.mubr.bf16.gmra.mxu0 %v1699
        %v1940 = vpop.f32.mrf.mxu0
        %v1941 = vadd.f32 %v1739, %v1940
        %v1942 = vpop.f32.mrf.mxu0
        %v1943 = vadd.f32 %v1743, %v1942
        %v1944 = vpop.f32.mrf.mxu0
        %v1945 = vpop.f32.mrf.mxu0
        %1946 = vdwg.mxu0
        %v1947 = vmax.f32 %v1941, 0.0
        %v1948 = vmax.f32 %v1943, 0.0
        %v1949 = vpack.c.bf16 %v1697, %v1697
        %v1950 = vpack.c.bf16 %v1698, %v1698
        %v1951 = vld [vmem:[%s4 + $0x100] sm:$0xff]
        %v1952 = vld [vmem:[%s4 + $0x108] sm:$0xff]
        %v1953 = vld [vmem:[%s4 + $0x110] sm:$0xff]
        %v1954 = vld [vmem:[%s4 + $0x118] sm:$0xff]
        %v1955 = vld [vmem:[%s4 + $0x120] sm:$0xff]
        %v1956 = vld [vmem:[%s4 + $0x128] sm:$0xff]
        %v1957 = vld [vmem:[%s4 + $0x130] sm:$0xff]
        %v1958 = vld [vmem:[%s4 + $0x138] sm:$0xff]
        %v1959 = vld [vmem:[%s4 + $0x140] sm:$0xff]
        %v1960 = vld [vmem:[%s4 + $0x148] sm:$0xff]
        %v1961 = vld [vmem:[%s4 + $0x150] sm:$0xff]
        %v1962 = vld [vmem:[%s4 + $0x158] sm:$0xff]
        %v1963 = vld [vmem:[%s4 + $0x160] sm:$0xff]
        %v1964 = vld [vmem:[%s4 + $0x168] sm:$0xff]
        %v1965 = vld [vmem:[%s4 + $0x170] sm:$0xff]
        %v1966 = vld [vmem:[%s4 + $0x178] sm:$0xff]
        %v1967 = vld [vmem:[%s4 + $0x180] sm:$0xff]
        %v1968 = vld [vmem:[%s4 + $0x188] sm:$0xff]
        %v1969 = vld [vmem:[%s4 + $0x190] sm:$0xff]
        %v1970 = vld [vmem:[%s4 + $0x198] sm:$0xff]
        %v1971 = vld [vmem:[%s4 + $0x1a0] sm:$0xff]
        %v1972 = vld [vmem:[%s4 + $0x1a8] sm:$0xff]
        %v1973 = vld [vmem:[%s4 + $0x1b0] sm:$0xff]
        %v1974 = vld [vmem:[%s4 + $0x1b8] sm:$0xff]
        %v1975 = vld [vmem:[%s4 + $0x1c0] sm:$0xff]
        %v1976 = vld [vmem:[%s4 + $0x1c8] sm:$0xff]
        %v1977 = vld [vmem:[%s4 + $0x1d0] sm:$0xff]
        %v1978 = vld [vmem:[%s4 + $0x1d8] sm:$0xff]
        %v1979 = vld [vmem:[%s4 + $0x1e0] sm:$0xff]
        %v1980 = vld [vmem:[%s4 + $0x1e8] sm:$0xff]
        %v1981 = vld [vmem:[%s4 + $0x1f0] sm:$0xff]
        %v1982 = vld [vmem:[%s4 + $0x1f8] sm:$0xff]
        %s1983 = scalar_lea.vmem [#allocation5], 67
        %v1984 = vld [vmem:[%s1983] ss:$8 sm:$0x3]
        %v1986 = vlaneseq
        %v1987 = vshrl.u32 %v1986, 7
        %v1988 = vsub.s32 0, %v1987
        %v1989 = vrot.slane %v1984, %v1988
        %v1990 = vlaneseq
        %v1991 = vshrl.u32 %v1990, 7
        %v1992 = vsub.s32 1, %v1991
        %v1993 = vrot.slane %v1984, %v1992
        %v2028 = vunpack.c.l.b16 %v1951
        %v2029 = vunpack.c.h.b16 %v1951
        %v2030 = vunpack.c.l.b16 %v1952
        %v2031 = vunpack.c.h.b16 %v1952
        %v2032 = vunpack.c.l.b16 %v1953
        %v2033 = vunpack.c.h.b16 %v1953
        %v2034 = vunpack.c.l.b16 %v1954
        %v2035 = vunpack.c.h.b16 %v1954
        %v2036 = vunpack.c.l.b16 %v1955
        %v2037 = vunpack.c.h.b16 %v1955
        %v2038 = vunpack.c.l.b16 %v1956
        %v2039 = vunpack.c.h.b16 %v1956
        %v2040 = vunpack.c.l.b16 %v1957
        %v2041 = vunpack.c.h.b16 %v1957
        %v2042 = vunpack.c.l.b16 %v1958
        %v2043 = vunpack.c.h.b16 %v1958
        %v2044 = vunpack.c.l.b16 %v1959
        %v2045 = vunpack.c.h.b16 %v1959
        %v2046 = vunpack.c.l.b16 %v1960
        %v2047 = vunpack.c.h.b16 %v1960
        %v2048 = vunpack.c.l.b16 %v1961
        %v2049 = vunpack.c.h.b16 %v1961
        %v2050 = vunpack.c.l.b16 %v1962
        %v2051 = vunpack.c.h.b16 %v1962
        %v2052 = vunpack.c.l.b16 %v1963
        %v2053 = vunpack.c.h.b16 %v1963
        %v2054 = vunpack.c.l.b16 %v1964
        %v2055 = vunpack.c.h.b16 %v1964
        %v2056 = vunpack.c.l.b16 %v1965
        %v2057 = vunpack.c.h.b16 %v1965
        %v2058 = vunpack.c.l.b16 %v1966
        %v2059 = vunpack.c.h.b16 %v1966
        %v2060 = vunpack.c.l.b16 %v1967
        %v2061 = vunpack.c.h.b16 %v1967
        %v2062 = vunpack.c.l.b16 %v1968
        %v2063 = vunpack.c.h.b16 %v1968
        %v2064 = vunpack.c.l.b16 %v1969
        %v2065 = vunpack.c.h.b16 %v1969
        %v2066 = vunpack.c.l.b16 %v1970
        %v2067 = vunpack.c.h.b16 %v1970
        %v2068 = vunpack.c.l.b16 %v1971
        %v2069 = vunpack.c.h.b16 %v1971
        %v2070 = vunpack.c.l.b16 %v1972
        %v2071 = vunpack.c.h.b16 %v1972
        %v2072 = vunpack.c.l.b16 %v1973
        %v2073 = vunpack.c.h.b16 %v1973
        %v2074 = vunpack.c.l.b16 %v1974
        %v2075 = vunpack.c.h.b16 %v1974
        %v2076 = vunpack.c.l.b16 %v1975
        %v2077 = vunpack.c.h.b16 %v1975
        %v2078 = vunpack.c.l.b16 %v1976
        %v2079 = vunpack.c.h.b16 %v1976
        %v2080 = vunpack.c.l.b16 %v1977
        %v2081 = vunpack.c.h.b16 %v1977
        %v2082 = vunpack.c.l.b16 %v1978
        %v2083 = vunpack.c.h.b16 %v1978
        %v2084 = vunpack.c.l.b16 %v1979
        %v2085 = vunpack.c.h.b16 %v1979
        %v2086 = vunpack.c.l.b16 %v1980
        %v2087 = vunpack.c.h.b16 %v1980
        %v2088 = vunpack.c.l.b16 %v1981
        %v2089 = vunpack.c.h.b16 %v1981
        %v2090 = vunpack.c.l.b16 %v1982
        %v2091 = vunpack.c.h.b16 %v1982
        %v2092 = vpack.c.b16 %v2030, %v2028
        %v2093 = vpack.c.b16 %v2031, %v2029
        %v2094 = vpack.c.b16 %v2034, %v2032
        %v2095 = vpack.c.b16 %v2035, %v2033
        %v2096 = vpack.c.b16 %v2038, %v2036
        %v2097 = vpack.c.b16 %v2039, %v2037
        %v2098 = vpack.c.b16 %v2042, %v2040
        %v2099 = vpack.c.b16 %v2043, %v2041
        %v2100 = vpack.c.b16 %v2046, %v2044
        %v2101 = vpack.c.b16 %v2047, %v2045
        %v2102 = vpack.c.b16 %v2050, %v2048
        %v2103 = vpack.c.b16 %v2051, %v2049
        %v2104 = vpack.c.b16 %v2054, %v2052
        %v2105 = vpack.c.b16 %v2055, %v2053
        %v2106 = vpack.c.b16 %v2058, %v2056
        %v2107 = vpack.c.b16 %v2059, %v2057
        %v2108 = vpack.c.b16 %v2062, %v2060
        %v2109 = vpack.c.b16 %v2063, %v2061
        %v2110 = vpack.c.b16 %v2066, %v2064
        %v2111 = vpack.c.b16 %v2067, %v2065
        %v2112 = vpack.c.b16 %v2070, %v2068
        %v2113 = vpack.c.b16 %v2071, %v2069
        %v2114 = vpack.c.b16 %v2074, %v2072
        %v2115 = vpack.c.b16 %v2075, %v2073
        %v2116 = vpack.c.b16 %v2078, %v2076
        %v2117 = vpack.c.b16 %v2079, %v2077
        %v2118 = vpack.c.b16 %v2082, %v2080
        %v2119 = vpack.c.b16 %v2083, %v2081
        %v2120 = vpack.c.b16 %v2086, %v2084
        %v2121 = vpack.c.b16 %v2087, %v2085
        %v2122 = vpack.c.b16 %v2090, %v2088
        %v2123 = vpack.c.b16 %v2091, %v2089
        %2156 = vmatprep.subr.bf16.mxu0 %v2107
        %2157 = vmatpush1.bf16.msra.mxu0 %v2106
        %2158 = vmatprep.subr.bf16.mxu0 %v2105
        %2159 = vmatpush1.bf16.msra.mxu0 %v2104
        %2160 = vmatprep.subr.bf16.mxu0 %v2103
        %2161 = vmatpush1.bf16.msra.mxu0 %v2102
        %2162 = vmatprep.subr.bf16.mxu0 %v2101
        %2163 = vmatpush1.bf16.msra.mxu0 %v2100
        %2164 = vmatprep.subr.bf16.mxu0 %v2099
        %2165 = vmatpush1.bf16.msra.mxu0 %v2098
        %2166 = vmatprep.subr.bf16.mxu0 %v2097
        %2167 = vmatpush1.bf16.msra.mxu0 %v2096
        %2168 = vmatprep.subr.bf16.mxu0 %v2095
        %2169 = vmatpush1.bf16.msra.mxu0 %v2094
        %2170 = vmatprep.subr.bf16.mxu0 %v2093
        %2171 = vmatpush1.bf16.msra.mxu0 %v2092
        %2172 = vmatprep.subr.bf16.mxu0 %v2123
        %2173 = vmatpush2.bf16.msra.mxu0 %v2122
        %2174 = vmatprep.subr.bf16.mxu0 %v2121
        %2175 = vmatpush2.bf16.msra.mxu0 %v2120
        %2176 = vmatprep.subr.bf16.mxu0 %v2119
        %2177 = vmatpush2.bf16.msra.mxu0 %v2118
        %2178 = vmatprep.subr.bf16.mxu0 %v2117
        %2179 = vmatpush2.bf16.msra.mxu0 %v2116
        %2180 = vmatprep.subr.bf16.mxu0 %v2115
        %2181 = vmatpush2.bf16.msra.mxu0 %v2114
        %2182 = vmatprep.subr.bf16.mxu0 %v2113
        %2183 = vmatpush2.bf16.msra.mxu0 %v2112
        %2184 = vmatprep.subr.bf16.mxu0 %v2111
        %2185 = vmatpush2.bf16.msra.mxu0 %v2110
        %2186 = vmatprep.subr.bf16.mxu0 %v2109
        %2187 = vmatpush2.bf16.msra.mxu0 %v2108
        %2188 = vmatprep.mubr.bf16.mxu0 %v1950
        %2189 = vmatmul.mubr.bf16.gmra.mxu0 %v1949
        %v2190 = vpop.f32.mrf.mxu0
        %v2191 = vadd.f32 %v1989, %v2190
        %v2192 = vpop.f32.mrf.mxu0
        %v2193 = vadd.f32 %v1993, %v2192
        %v2194 = vpop.f32.mrf.mxu0
        %v2195 = vpop.f32.mrf.mxu0
        %2196 = vdwg.mxu0
        %v2197 = vmax.f32 %v2191, 0.0
        %v2198 = vmax.f32 %v2193, 0.0
        %s2199 = scalar_lea.vmem [#allocation5], 68
        %v2200 = vld [vmem:[%s2199] ss:$8 sm:$0x3]
        %v2202 = vlaneseq
        %v2203 = vshrl.u32 %v2202, 7
        %v2204 = vsub.s32 0, %v2203
        %v2205 = vrot.slane %v2200, %v2204
        %v2206 = vlaneseq
        %v2207 = vshrl.u32 %v2206, 7
        %v2208 = vsub.s32 1, %v2207
        %v2209 = vrot.slane %v2200, %v2208
        %v2212 = vmul.f32 %v1947, %v2205
        %v2213 = vmul.f32 %v1948, %v2209
        %v2214 = vadd.f32 %v2212, %v2213
        %2215 = vadd.xlane.f32.xlu0 %v2214
        %v2216 = vpop.xlane.xlu0 %2215
        %s2217 = scalar_lea.vmem [#allocation5], 69
        %v2218 = vld [vmem:[%s2217] ss:$8 sm:$0x3]
        %v2220 = vlaneseq
        %v2221 = vshrl.u32 %v2220, 7
        %v2222 = vsub.s32 0, %v2221
        %v2223 = vrot.slane %v2218, %v2222
        %v2224 = vlaneseq
        %v2225 = vshrl.u32 %v2224, 7
        %v2226 = vsub.s32 1, %v2225
        %v2227 = vrot.slane %v2218, %v2226
        %v2230 = vmul.f32 %v2197, %v2223
        %v2231 = vmul.f32 %v2198, %v2227
        %v2232 = vadd.f32 %v2230, %v2231
        %2233 = vadd.xlane.f32.xlu0 %v2232
        %v2234 = vpop.xlane.xlu0 %2233
        %v2235 = vsub.f32 %v2216, %v2234
        %v2236 = vld [vmem:[#allocation5 + $0x46] ss:$0 sm:$0xff]
        %v2237 = vadd.f32 %v2235, %v2236
        %v2238 = vsub.f32 0.0, %v2237
        %v2239 = vtanh.pop %v1664
        %v2240 = vsub.f32 0.6931472, %v1664
        %v2241 = vmul.f32 %v1664, -2.0
        %v2242 = vmax.f32 %v2241, 0.0
        %v2243 = vand.u32 2147483647, %v2241
        %v2244 = vsub.f32 0.0, %v2243
        %v2245 = vmul.f32 %v2244, 1.442695
        %v2246 = vpow.pop %v2245
        %v2247 = vadd.f32 %v2246, 1.0
        %v2248 = vlog2.pop %v2247
        %v2249 = vmul.f32 %v2248, 0.6931472
        %v2250 = vadd.f32 %v2242, %v2249
        %v2251 = vsub.f32 %v2240, %v2250
        %v2252 = vmul.f32 %v2251, 2.0
        %vm2253 = vcmask 48128
        %v2254 = vsel %vm2253, %v2252, 0.0
        %2255 = vadd.xlane.f32.xlu0 %v2254
        %v2256 = vpop.xlane.xlu0 %2255
        %v2257 = vsub.f32 %v2238, %v2256
        %2259 = vrot.lane.b32.xlu0 %v2257, 64
        %v2260 = vpop.permute.xlu0 %2259
        %v2262 = vsel %vm597, %v2239, %v2260
        %vm2263 = vcmask 531456
        %v2264 = vsel %vm2263, %v2262, 0.0
        %2265 = vst [vmem:[%s285] sm:$0xff] %v2264
        %s2266 = sand.u32 %s166, 1
        %s2267 = scalar_lea.sflag [#allocation4], %s2266
        %s2268 = sand.u32 %s166, 1
        %s2269 = smul.addr %s2268, 8
        %s2270 = scalar_lea.vmem [#allocation7], %s2269
        // Predicated region
        $region53: #{tpu_custom_call.1} parent=43 // pred_check
          %p2271 = pneg %p176
        $region54: #{tpu_custom_call.1} parent=43 // pred_check_branch
          %2273 = sbr.rel (%p2271) target = $region56
        $region55: #{tpu_custom_call.1} parent=43 // pred_region
          %s2275 = ssub.s32 128, 128
          %2276 = vsyncadd %s2267, %s2275
          %s2277 = smul.addr %s22, 128
          %s2278 = scalar_lea.hbm %s6, %s2277
          %s2280 = sshll.u32 %s2270, 4
          %s2281 = int_to_ptr.vmem [resolvable:$true] %s2280
          %2283 = dma.vmem_to_hbm [thread:$0]  %s2281, 128, %s2278, %s2267
        $region56: #{tpu_custom_call.1} parent=43 // pred_fallthru
          _
      $region44: #{tpu_custom_call.1} parent=5 // pred_fallthru
        _
      %p2284 = scmp.le.s32.totalorder 2, %s17
      // Predicated region
      $region57: #{tpu_custom_call.1} parent=5 // pred_check
        %p2285 = pneg %p2284
      $region58: #{tpu_custom_call.1} parent=5 // pred_check_branch
        %2287 = sbr.rel (%p2285) target = $region60
      $region59: #{tpu_custom_call.1} parent=5 // pred_region
        %s2288 = ssub.s32 %s17, 2
        // Predicated region
        $region61: #{tpu_custom_call.1} parent=59 // pred_check
          %p2289 = pneg %p182
        $region62: #{tpu_custom_call.1} parent=59 // pred_check_branch
          %2291 = sbr.rel (%p2289) target = $region64
        $region63: #{tpu_custom_call.1} parent=59 // pred_region
          %s2292 = sand.u32 %s167, 1
          %s2293 = scalar_lea.sflag [#allocation4], %s2292
          %s2294 = sand.u32 %s167, 1
          %s2295 = smul.addr %s2294, 8
          %s2296 = scalar_lea.vmem [#allocation7], %s2295
          %2297 = dma.done %s2293, 128
        $region64: #{tpu_custom_call.1} parent=59 // pred_fallthru
          _
      $region60: #{tpu_custom_call.1} parent=5 // pred_fallthru
        _
    $region6: #{tpu_custom_call.1} parent=1 // loop_footer
      %s21 = sadd.s32 1, %s17
    $region7: #{tpu_custom_call.1} parent=1 // loop_footer_branch
      %16 = sbr.rel target = $region3
    $region8: #{tpu_custom_call.1} parent=1 // loop_exit
      _
    %2298 = vsyncpa [#allocation3], 1
    %s2299 = scalar_lea.sflag [#allocation3], 1
    %2300 = vsyncpa %s2299, 1
    %2301 = vsyncpa [#allocation6], 1
    %2302 = vsyncpa [#allocation4], 1
    %s2303 = scalar_lea.sflag [#allocation4], 1
    %2304 = vsyncpa %s2303, 1

// kernel: tpu_custom_call.1
$region0: #{tpu_custom_call.1}
  #allocation0 [shape = 'u32[]', space=smem, size = 0x4, offset = 0x4, fixed_abs, tag = 'smem constant byte address 0x4 - core index']
  #allocation1 [shape = 'u32[144,128]{1,0:T(1,128)}', space=vmem, size = 0x12000, scoped, tag = 'internal scratch']
  %s0 = inlined_call_operand.vmem [shape: bf16[16,17], index: 0, kind: input, shape index: {}]
  %s1 = inlined_call_operand.vmem [shape: f32[16,64], index: 1, kind: input, shape index: {}]
  %s2 = inlined_call_operand.hbm [shape: bf16[17,1024], index: 2, kind: input, shape index: {}]
  %s3 = inlined_call_operand.vmem [shape: bf16[768,64], index: 3, kind: input, shape index: {}]
  %s4 = inlined_call_operand.vmem [shape: bf16[512,256], index: 4, kind: input, shape index: {}]
  %s5 = inlined_call_operand.hbm [shape: f32[40,256], index: 5, kind: input, shape index: {}]
  %s6 = inlined_call_operand.hbm [shape: f32[16,128], index: 6, kind: output, shape index: {}]
  %s7 = sld [smem:[#allocation0]]
  $region65: #{tpu_custom_call.1} parent=0
    _
  %s9 = ssub.s32 1, %s7
  %s10 = scalar_select 0, %s9, %s7
  $region1: #{tpu_custom_call.1} parent=0
    #allocation2 [shape = 'u8[49152]{0}', space=vmem, size = 0xc000, scoped, tag = 'input window, operand 2, single buffered']
    #allocation3 [shape = 's32[2]{0}', space=sflag, size = 0x8, scoped, tag = 'scoped memory for tpu_custom_call.1']
    #allocation4 [shape = 's32[2]{0}', space=sflag, size = 0x8, scoped, tag = 'scoped memory for tpu_custom_call.1']
    #allocation5 [shape = 'u8[40960]{0}', space=vmem, size = 0xa000, scoped, tag = 'input window, operand 5, single buffered']
    #allocation6 [shape = 's32[1]{0}', space=sflag, size = 0x4, scoped, tag = 'scoped memory for tpu_custom_call.1']
    #allocation7 [shape = 'u8[8192]{0}', space=vmem, size = 0x2000, scoped, tag = 'output window, operand 0']
    %11 = vsyncpa [#allocation3], 0
    %12 = vsyncpa [#allocation6], 0
    %13 = vsyncpa [#allocation4], 0
    %s14 = scalar_lea.sflag [#allocation4], 1
    %15 = vsyncpa %s14, 0
    loop: start=0, step=1, limit=4
    $region2: #{tpu_custom_call.1} parent=1 // loop_pre_header
      _
    $region3: #{tpu_custom_call.1} parent=1 // loop_header
      %s17 = sphi 0, %s21
      %p18 = scmp.ge.s32.totalorder %s17, 4
      %s27 = sphi 0, %s29
      %s30 = sphi 0, %s27
      %s31 = sphi 0, %s30
      %s47 = sphi 0, %s31
      %s53 = sphi 0, %s55
      %s56 = sphi 0, %s53
      %s57 = sphi 0, %s56
      %s73 = sphi 0, %s57
      %s77 = sphi 0, %s77
      %s79 = sphi 0, %s77
      %s80 = sphi 0, %s79
      %s94 = sphi 0, %s80
      %s98 = sphi 0, %s98
      %s100 = sphi 0, %s98
      %s101 = sphi 0, %s100
      %s115 = sphi 0, %s101
      %s119 = sphi 0, %s119
      %s121 = sphi 0, %s119
      %s122 = sphi 0, %s121
      %s136 = sphi 0, %s122
      %s140 = sphi 0, %s140
      %s142 = sphi 0, %s140
      %s143 = sphi 0, %s142
      %s157 = sphi 0, %s143
      %s163 = sphi 0, %s165
      %s166 = sphi 0, %s163
      %s167 = sphi 0, %s166
      %s183 = sphi 0, %s167
    $region4: #{tpu_custom_call.1} parent=1 // loop_header_branch
      %20 = sbr.rel (%p18) target = $region8
    $region5: #{tpu_custom_call.1} parent=1 // loop_body
      %s22 = ssub.s32 %s17, 1
      %s23 = ssub.s32 %s17, 2
      %s24 = sadd.s32 %s17, 1
      %s25 = ssub.s32 %s17, %s24
      %p26 = scmp.eq.s32.totalorder %s25, 0
      %s28 = sadd.s32 %s27, 1
      %s29 = scalar_select %p26, %s27, %s28
      %p32 = pneg %p26
      %p33 = scmp.eq.s32.totalorder %s17, 1
      %p34 = por %p32, %p33
      %p35 = scmp.ne.s32.totalorder %s27, %s30
      %p36 = scmp.eq.s32.totalorder %s17, 0
      %p37 = por %p35, %p36
      %p38 = scmp.ne.s32.totalorder %s27, %s30
      %p39 = scmp.eq.s32.totalorder %s22, 1
      %p40 = por %p38, %p39
      %p41 = scmp.ne.s32.totalorder %s30, %s31
      %p42 = scmp.eq.s32.totalorder %s22, 0
      %p43 = por %p41, %p42
      %p44 = scmp.ne.s32.totalorder %s30, %s31
      %p45 = scmp.eq.s32.totalorder %s23, 1
      %p46 = por %p44, %p45
      %p48 = scmp.ne.s32.totalorder %s31, %s47
      %p49 = scmp.eq.s32.totalorder %s23, 0
      %p50 = por %p48, %p49
      %s51 = ssub.s32 %s17, %s24
      %p52 = scmp.eq.s32.totalorder %s51, 0
      %s54 = sadd.s32 %s53, 1
      %s55 = scalar_select %p52, %s53, %s54
      %p58 = pneg %p52
      %p59 = scmp.eq.s32.totalorder %s17, 1
      %p60 = por %p58, %p59
      %p61 = scmp.ne.s32.totalorder %s53, %s56
      %p62 = scmp.eq.s32.totalorder %s17, 0
      %p63 = por %p61, %p62
      %p64 = scmp.ne.s32.totalorder %s53, %s56
      %p65 = scmp.eq.s32.totalorder %s22, 1
      %p66 = por %p64, %p65
      %p67 = scmp.ne.s32.totalorder %s56, %s57
      %p68 = scmp.eq.s32.totalorder %s22, 0
      %p69 = por %p67, %p68
      %p70 = scmp.ne.s32.totalorder %s56, %s57
      %p71 = scmp.eq.s32.totalorder %s23, 1
      %p72 = por %p70, %p71
      %p74 = scmp.ne.s32.totalorder %s57, %s73
      %p75 = scmp.eq.s32.totalorder %s23, 0
      %p76 = por %p74, %p75
      %s78 = sadd.s32 %s77, 1
      %p81 = scmp.eq.s32.totalorder %s17, 1
      %p82 = scmp.ne.s32.totalorder %s77, %s79
      %p83 = scmp.eq.s32.totalorder %s17, 0
      %p84 = por %p82, %p83
      %p85 = scmp.ne.s32.totalorder %s77, %s79
      %p86 = scmp.eq.s32.totalorder %s22, 1
      %p87 = por %p85, %p86
      %p88 = scmp.ne.s32.totalorder %s79, %s80
      %p89 = scmp.eq.s32.totalorder %s22, 0
      %p90 = por %p88, %p89
      %p91 = scmp.ne.s32.totalorder %s79, %s80
      %p92 = scmp.eq.s32.totalorder %s23, 1
      %p93 = por %p91, %p92
      %p95 = scmp.ne.s32.totalorder %s80, %s94
      %p96 = scmp.eq.s32.totalorder %s23, 0
      %p97 = por %p95, %p96
      %s99 = sadd.s32 %s98, 1
      %p102 = scmp.eq.s32.totalorder %s17, 1
      %p103 = scmp.ne.s32.totalorder %s98, %s100
      %p104 = scmp.eq.s32.totalorder %s17, 0
      %p105 = por %p103, %p104
      %p106 = scmp.ne.s32.totalorder %s98, %s100
      %p107 = scmp.eq.s32.totalorder %s22, 1
      %p108 = por %p106, %p107
      %p109 = scmp.ne.s32.totalorder %s100, %s101
      %p110 = scmp.eq.s32.totalorder %s22, 0
      %p111 = por %p109, %p110
      %p112 = scmp.ne.s32.totalorder %s100, %s101
      %p113 = scmp.eq.s32.totalorder %s23, 1
      %p114 = por %p112, %p113
      %p116 = scmp.ne.s32.totalorder %s101, %s115
      %p117 = scmp.eq.s32.totalorder %s23, 0
      %p118 = por %p116, %p117
      %s120 = sadd.s32 %s119, 1
      %p123 = scmp.eq.s32.totalorder %s17, 1
      %p124 = scmp.ne.s32.totalorder %s119, %s121
      %p125 = scmp.eq.s32.totalorder %s17, 0
      %p126 = por %p124, %p125
      %p127 = scmp.ne.s32.totalorder %s119, %s121
      %p128 = scmp.eq.s32.totalorder %s22, 1
      %p129 = por %p127, %p128
      %p130 = scmp.ne.s32.totalorder %s121, %s122
      %p131 = scmp.eq.s32.totalorder %s22, 0
      %p132 = por %p130, %p131
      %p133 = scmp.ne.s32.totalorder %s121, %s122
      %p134 = scmp.eq.s32.totalorder %s23, 1
      %p135 = por %p133, %p134
      %p137 = scmp.ne.s32.totalorder %s122, %s136
      %p138 = scmp.eq.s32.totalorder %s23, 0
      %p139 = por %p137, %p138
      %s141 = sadd.s32 %s140, 1
      %p144 = scmp.eq.s32.totalorder %s17, 1
      %p145 = scmp.ne.s32.totalorder %s140, %s142
      %p146 = scmp.eq.s32.totalorder %s17, 0
      %p147 = por %p145, %p146
      %p148 = scmp.ne.s32.totalorder %s140, %s142
      %p149 = scmp.eq.s32.totalorder %s22, 1
      %p150 = por %p148, %p149
      %p151 = scmp.ne.s32.totalorder %s142, %s143
      %p152 = scmp.eq.s32.totalorder %s22, 0
      %p153 = por %p151, %p152
      %p154 = scmp.ne.s32.totalorder %s142, %s143
      %p155 = scmp.eq.s32.totalorder %s23, 1
      %p156 = por %p154, %p155
      %p158 = scmp.ne.s32.totalorder %s143, %s157
      %p159 = scmp.eq.s32.totalorder %s23, 0
      %p160 = por %p158, %p159
      %s161 = ssub.s32 %s17, %s24
      %p162 = scmp.eq.s32.totalorder %s161, 0
      %s164 = sadd.s32 %s163, 1
      %s165 = scalar_select %p162, %s163, %s164
      %p168 = pneg %p162
      %p169 = scmp.eq.s32.totalorder %s17, 1
      %p170 = por %p168, %p169
      %p171 = scmp.ne.s32.totalorder %s163, %s166
      %p172 = scmp.eq.s32.totalorder %s17, 0
      %p173 = por %p171, %p172
      %p174 = scmp.ne.s32.totalorder %s163, %s166
      %p175 = scmp.eq.s32.totalorder %s22, 1
      %p176 = por %p174, %p175
      %p177 = scmp.ne.s32.totalorder %s166, %s167
      %p178 = scmp.eq.s32.totalorder %s22, 0
      %p179 = por %p177, %p178
      %p180 = scmp.ne.s32.totalorder %s166, %s167
      %p181 = scmp.eq.s32.totalorder %s23, 1
      %p182 = por %p180, %p181
      %p184 = scmp.ne.s32.totalorder %s167, %s183
      %p185 = scmp.eq.s32.totalorder %s23, 0
      %p186 = por %p184, %p185
      %p187 = scmp.le.s32.totalorder 1, %s17
      %p188 = scmp.lt.s32.totalorder %s17, 3
      %p189 = pnand %p187, %p188
      %p190 = pneg %p189
      // Predicated region
      $region9: #{tpu_custom_call.1} parent=5 // pred_check
        _
      $region10: #{tpu_custom_call.1} parent=5 // pred_check_branch
        %192 = sbr.rel (%p189) target = $region12
      $region11: #{tpu_custom_call.1} parent=5 // pred_region
        %s193 = ssub.s32 %s17, 1
        // Predicated region
        $region13: #{tpu_custom_call.1} parent=11 // pred_check
          %p194 = pneg %p90
        $region14: #{tpu_custom_call.1} parent=11 // pred_check_branch
          %196 = sbr.rel (%p194) target = $region16
        $region15: #{tpu_custom_call.1} parent=11 // pred_region
          %s198 = ssub.s32 1536, 1536
          %199 = vsyncadd [#allocation3], %s198
          %s200 = sshll.u32 [#allocation2], 4
          %s201 = int_to_ptr.vmem [resolvable:$true] %s200
          %206 = dma.hbm_to_vmem [thread:$0]  %s2, 1536, %s201, [#allocation3], 512, 512, 32
        $region16: #{tpu_custom_call.1} parent=11 // pred_fallthru
          _
        // Predicated region
        $region17: #{tpu_custom_call.1} parent=11 // pred_check
          %p207 = pneg %p111
        $region18: #{tpu_custom_call.1} parent=11 // pred_check_branch
          %209 = sbr.rel (%p207) target = $region20
        $region19: #{tpu_custom_call.1} parent=11 // pred_region
          _
        $region20: #{tpu_custom_call.1} parent=11 // pred_fallthru
          _
        // Predicated region
        $region21: #{tpu_custom_call.1} parent=11 // pred_check
          %p210 = pneg %p132
        $region22: #{tpu_custom_call.1} parent=11 // pred_check_branch
          %212 = sbr.rel (%p210) target = $region24
        $region23: #{tpu_custom_call.1} parent=11 // pred_region
          _
        $region24: #{tpu_custom_call.1} parent=11 // pred_fallthru
          _
        // Predicated region
        $region25: #{tpu_custom_call.1} parent=11 // pred_check
          %p213 = pneg %p153
        $region26: #{tpu_custom_call.1} parent=11 // pred_check_branch
          %215 = sbr.rel (%p213) target = $region28
        $region27: #{tpu_custom_call.1} parent=11 // pred_region
          %s217 = ssub.s32 1280, 1280
          %218 = vsyncadd [#allocation6], %s217
          %s219 = sshll.u32 [#allocation5], 4
          %s220 = int_to_ptr.vmem [resolvable:$true] %s219
          %225 = dma.hbm_to_vmem [thread:$0]  %s5, 1280, %s220, [#allocation6], 256, 256, 16
        $region28: #{tpu_custom_call.1} parent=11 // pred_fallthru
          _
      $region12: #{tpu_custom_call.1} parent=5 // pred_fallthru
        _
      %p226 = scmp.lt.s32.totalorder %s17, 2
      // Predicated region
      $region29: #{tpu_custom_call.1} parent=5 // pred_check
        %p227 = pneg %p226
      $region30: #{tpu_custom_call.1} parent=5 // pred_check_branch
        %229 = sbr.rel (%p227) target = $region32
      $region31: #{tpu_custom_call.1} parent=5 // pred_region
        // Predicated region
        $region33: #{tpu_custom_call.1} parent=31 // pred_check
          %p230 = pneg %p37
        $region34: #{tpu_custom_call.1} parent=31 // pred_check_branch
          %232 = sbr.rel (%p230) target = $region36
        $region35: #{tpu_custom_call.1} parent=31 // pred_region
          %p233 = scmp.lt.s32.totalorder %s17, 1
          %s234 = scalar_select %p233, %s17, 1
          %s235 = smul.addr %s234, 4
          %s236 = scalar_lea.vmem %s0, %s235
        $region36: #{tpu_custom_call.1} parent=31 // pred_fallthru
          _
        // Predicated region
        $region37: #{tpu_custom_call.1} parent=31 // pred_check
          %p237 = pneg %p63
        $region38: #{tpu_custom_call.1} parent=31 // pred_check_branch
          %239 = sbr.rel (%p237) target = $region40
        $region39: #{tpu_custom_call.1} parent=31 // pred_region
          %p240 = scmp.lt.s32.totalorder %s17, 1
          %s241 = scalar_select %p240, %s17, 1
          %s242 = smul.addr %s241, 8
          %s243 = scalar_lea.vmem %s1, %s242
        $region40: #{tpu_custom_call.1} parent=31 // pred_fallthru
          _
      $region32: #{tpu_custom_call.1} parent=5 // pred_fallthru
        _
      %p244 = scmp.le.s32.totalorder 1, %s17
      %p245 = scmp.lt.s32.totalorder %s17, 3
      %p246 = pnand %p244, %p245
      %p247 = pneg %p246
      // Predicated region
      $region41: #{tpu_custom_call.1} parent=5 // pred_check
        _
      $region42: #{tpu_custom_call.1} parent=5 // pred_check_branch
        %249 = sbr.rel (%p246) target = $region44
      $region43: #{tpu_custom_call.1} parent=5 // pred_region
        %s250 = ssub.s32 %s17, 1
        // Predicated region
        $region45: #{tpu_custom_call.1} parent=43 // pred_check
          %p251 = pneg %p90
        $region46: #{tpu_custom_call.1} parent=43 // pred_check_branch
          %253 = sbr.rel (%p251) target = $region48
        $region47: #{tpu_custom_call.1} parent=43 // pred_region
          %254 = dma.done [#allocation3], 1536
        $region48: #{tpu_custom_call.1} parent=43 // pred_fallthru
          _
        // Predicated region
        $region49: #{tpu_custom_call.1} parent=43 // pred_check
          %p255 = pneg %p153
        $region50: #{tpu_custom_call.1} parent=43 // pred_check_branch
          %257 = sbr.rel (%p255) target = $region52
        $region51: #{tpu_custom_call.1} parent=43 // pred_region
          %258 = dma.done [#allocation6], 1280
        $region52: #{tpu_custom_call.1} parent=43 // pred_fallthru
          _
        %p259 = scmp.lt.s32.totalorder %s22, 1
        %s260 = scalar_select %p259, %s22, 1
        %s261 = smul.addr %s260, 4
        %s262 = scalar_lea.vmem %s0, %s261
        %p263 = pneg %p43
        %p264 = pneg %p40
        %p265 = scmp.lt.s32.totalorder %s22, 1
        %s266 = scalar_select %p265, %s22, 1
        %s267 = smul.addr %s266, 8
        %s268 = scalar_lea.vmem %s1, %s267
        %p269 = pneg %p69
        %p270 = pneg %p66
        %p271 = pneg %p90
        %p272 = pneg %p87
        %p273 = pneg %p111
        %p274 = pneg %p108
        %p275 = pneg %p132
        %p276 = pneg %p129
        %p277 = pneg %p153
        %p278 = pneg %p150
        %p279 = pneg %p179
        %p280 = pneg %p176
        %s281 = sand.u32 %s166, 1
        %s282 = scalar_lea.sflag [#allocation4], %s281
        %s283 = sand.u32 %s166, 1
        %s284 = smul.addr %s283, 8
        %s285 = scalar_lea.vmem [#allocation7], %s284
        %p286 = scmp.lt.s32.totalorder %s22, 1
        %s287 = scalar_select %p286, %s22, 1
        %s288 = smul.addr %s287, 4
        %s289 = scalar_lea.vmem %s0, %s288
        %p290 = scmp.lt.s32.totalorder %s22, 1
        %s291 = scalar_select %p290, %s22, 1
        %s292 = smul.addr %s291, 8
        %s293 = scalar_lea.vmem %s1, %s292
        %v295 = vld [vmem:[%s289] sm:$0xf]
        %v296 = vld [vmem:[%s293] sm:$0xff]
        %v297 = vld [vmem:[#allocation2] sm:$0xff]
        %v298 = vld [vmem:[#allocation2 + $0x8] sm:$0xff]
        %v299 = vld [vmem:[#allocation2 + $0x10] sm:$0xff]
        %v300 = vld [vmem:[#allocation2 + $0x18] sm:$0xff]
        %v301 = vld [vmem:[#allocation2 + $0x20] sm:$0xff]
        %v302 = vld [vmem:[#allocation2 + $0x28] sm:$0xff]
        %v303 = vld [vmem:[#allocation2 + $0x30] sm:$0xff]
        %v304 = vld [vmem:[#allocation2 + $0x38] sm:$0xff]
        %v305 = vld [vmem:[#allocation2 + $0x40] sm:$0x11]
        %v306 = vld [vmem:[#allocation2 + $0x48] sm:$0x11]
        %v307 = vld [vmem:[#allocation2 + $0x50] sm:$0x11]
        %v308 = vld [vmem:[#allocation2 + $0x58] sm:$0x11]
        %v321 = vunpack.c.l.b16 %v297
        %v322 = vunpack.c.h.b16 %v297
        %v323 = vunpack.c.l.b16 %v298
        %v324 = vunpack.c.h.b16 %v298
        %v325 = vunpack.c.l.b16 %v299
        %v326 = vunpack.c.h.b16 %v299
        %v327 = vunpack.c.l.b16 %v300
        %v328 = vunpack.c.h.b16 %v300
        %v329 = vunpack.c.l.b16 %v301
        %v330 = vunpack.c.h.b16 %v301
        %v331 = vunpack.c.l.b16 %v302
        %v332 = vunpack.c.h.b16 %v302
        %v333 = vunpack.c.l.b16 %v303
        %v334 = vunpack.c.h.b16 %v303
        %v335 = vunpack.c.l.b16 %v304
        %v336 = vunpack.c.h.b16 %v304
        %v337 = vunpack.c.l.b16 %v305
        %v338 = vunpack.c.h.b16 %v305
        %v339 = vunpack.c.l.b16 %v306
        %v340 = vunpack.c.h.b16 %v306
        %v341 = vunpack.c.l.b16 %v307
        %v342 = vunpack.c.h.b16 %v307
        %v343 = vunpack.c.l.b16 %v308
        %v344 = vunpack.c.h.b16 %v308
        %v345 = vpack.c.b16 %v329, %v321
        %v346 = vpack.c.b16 %v330, %v322
        %v347 = vpack.c.b16 %v331, %v323
        %v348 = vpack.c.b16 %v332, %v324
        %v349 = vpack.c.b16 %v333, %v325
        %v350 = vpack.c.b16 %v334, %v326
        %v351 = vpack.c.b16 %v335, %v327
        %v352 = vpack.c.b16 %v336, %v328
        %v353 = vpack.c.b16 %v337, %v337
        %v354 = vpack.c.b16 %v338, %v338
        %v355 = vpack.c.b16 %v339, %v339
        %v356 = vpack.c.b16 %v340, %v340
        %v357 = vpack.c.b16 %v341, %v341
        %v358 = vpack.c.b16 %v342, %v342
        %v359 = vpack.c.b16 %v343, %v343
        %v360 = vpack.c.b16 %v344, %v344
        %vm369 = vcmask 138240
        %v371 = vsel %vm369, %v295, 0
        %vm373 = vcmask 1040384
        %v374 = vsel 0, 4294967295, 65535
        %v375 = vsel %vm373, %v374, 0
        %v377 = vand.u32 %v353, %v375
        %v380 = vand.u32 %v354, %v375
        %v383 = vand.u32 %v355, %v375
        %v386 = vand.u32 %v356, %v375
        %v389 = vand.u32 %v357, %v375
        %v392 = vand.u32 %v358, %v375
        %v395 = vand.u32 %v359, %v375
        %v398 = vand.u32 %v360, %v375
        %400 = vmatprep.subr.bf16.mxu0 0
        %401 = vmatpush1.bf16.msra.mxu0 0
        %402 = vmatprep.subr.bf16.mxu0 0
        %403 = vmatpush1.bf16.msra.mxu0 0
        %404 = vmatprep.subr.bf16.mxu0 0
        %405 = vmatpush1.bf16.msra.mxu0 0
        %406 = vmatprep.subr.bf16.mxu0 0
        %407 = vmatpush1.bf16.msra.mxu0 0
        %408 = vmatprep.subr.bf16.mxu0 0
        %409 = vmatpush1.bf16.msra.mxu0 0
        %410 = vmatprep.subr.bf16.mxu0 0
        %411 = vmatpush1.bf16.msra.mxu0 0
        %412 = vmatprep.subr.bf16.mxu0 %v380
        %413 = vmatpush1.bf16.msra.mxu0 %v377
        %414 = vmatprep.subr.bf16.mxu0 %v346
        %415 = vmatpush1.bf16.msra.mxu0 %v345
        %416 = vmatprep.subr.bf16.mxu0 0
        %417 = vmatpush2.bf16.msra.mxu0 0
        %418 = vmatprep.subr.bf16.mxu0 0
        %419 = vmatpush2.bf16.msra.mxu0 0
        %420 = vmatprep.subr.bf16.mxu0 0
        %421 = vmatpush2.bf16.msra.mxu0 0
        %422 = vmatprep.subr.bf16.mxu0 0
        %423 = vmatpush2.bf16.msra.mxu0 0
        %424 = vmatprep.subr.bf16.mxu0 0
        %425 = vmatpush2.bf16.msra.mxu0 0
        %426 = vmatprep.subr.bf16.mxu0 0
        %427 = vmatpush2.bf16.msra.mxu0 0
        %428 = vmatprep.subr.bf16.mxu0 0
        %429 = vmatpush2.bf16.msra.mxu0 0
        %430 = vmatprep.subr.bf16.mxu0 0
        %431 = vmatpush2.bf16.msra.mxu0 0
        %432 = vmatprep.mubr.bf16.mxu0 0
        %433 = vmatmul.mubr.bf16.gmra.mxu0 %v371
        %v434 = vpop.f32.mrf.mxu0
        %v435 = vadd.f32 0.0, %v434
        %v436 = vpop.f32.mrf.mxu0
        %v437 = vadd.f32 0.0, %v436
        %v438 = vpop.f32.mrf.mxu0
        %v439 = vpop.f32.mrf.mxu0
        %440 = vdwg.mxu0
        %441 = vmatprep.subr.bf16.mxu0 0
        %442 = vmatpush1.bf16.msra.mxu0 0
        %443 = vmatprep.subr.bf16.mxu0 0
        %444 = vmatpush1.bf16.msra.mxu0 0
        %445 = vmatprep.subr.bf16.mxu0 0
        %446 = vmatpush1.bf16.msra.mxu0 0
        %447 = vmatprep.subr.bf16.mxu0 0
        %448 = vmatpush1.bf16.msra.mxu0 0
        %449 = vmatprep.subr.bf16.mxu0 0
        %450 = vmatpush1.bf16.msra.mxu0 0
        %451 = vmatprep.subr.bf16.mxu0 0
        %452 = vmatpush1.bf16.msra.mxu0 0
        %453 = vmatprep.subr.bf16.mxu0 %v386
        %454 = vmatpush1.bf16.msra.mxu0 %v383
        %455 = vmatprep.subr.bf16.mxu0 %v348
        %456 = vmatpush1.bf16.msra.mxu0 %v347
        %457 = vmatprep.subr.bf16.mxu0 0
        %458 = vmatpush2.bf16.msra.mxu0 0
        %459 = vmatprep.subr.bf16.mxu0 0
        %460 = vmatpush2.bf16.msra.mxu0 0
        %461 = vmatprep.subr.bf16.mxu0 0
        %462 = vmatpush2.bf16.msra.mxu0 0
        %463 = vmatprep.subr.bf16.mxu0 0
        %464 = vmatpush2.bf16.msra.mxu0 0
        %465 = vmatprep.subr.bf16.mxu0 0
        %466 = vmatpush2.bf16.msra.mxu0 0
        %467 = vmatprep.subr.bf16.mxu0 0
        %468 = vmatpush2.bf16.msra.mxu0 0
        %469 = vmatprep.subr.bf16.mxu0 0
        %470 = vmatpush2.bf16.msra.mxu0 0
        %471 = vmatprep.subr.bf16.mxu0 0
        %472 = vmatpush2.bf16.msra.mxu0 0
        %473 = vmatprep.mubr.bf16.mxu0 0
        %474 = vmatmul.mubr.bf16.gmra.mxu0 %v371
        %v475 = vpop.f32.mrf.mxu0
        %v476 = vadd.f32 0.0, %v475
        %v477 = vpop.f32.mrf.mxu0
        %v478 = vadd.f32 0.0, %v477
        %v479 = vpop.f32.mrf.mxu0
        %v480 = vpop.f32.mrf.mxu0
        %481 = vdwg.mxu0
        %482 = vmatprep.subr.bf16.mxu0 0
        %483 = vmatpush1.bf16.msra.mxu0 0
        %484 = vmatprep.subr.bf16.mxu0 0
        %485 = vmatpush1.bf16.msra.mxu0 0
        %486 = vmatprep.subr.bf16.mxu0 0
        %487 = vmatpush1.bf16.msra.mxu0 0
        %488 = vmatprep.subr.bf16.mxu0 0
        %489 = vmatpush1.bf16.msra.mxu0 0
        %490 = vmatprep.subr.bf16.mxu0 0
        %491 = vmatpush1.bf16.msra.mxu0 0
        %492 = vmatprep.subr.bf16.mxu0 0
        %493 = vmatpush1.bf16.msra.mxu0 0
        %494 = vmatprep.subr.bf16.mxu0 %v392
        %495 = vmatpush1.bf16.msra.mxu0 %v389
        %496 = vmatprep.subr.bf16.mxu0 %v350
        %497 = vmatpush1.bf16.msra.mxu0 %v349
        %498 = vmatprep.subr.bf16.mxu0 0
        %499 = vmatpush2.bf16.msra.mxu0 0
        %500 = vmatprep.subr.bf16.mxu0 0
        %501 = vmatpush2.bf16.msra.mxu0 0
        %502 = vmatprep.subr.bf16.mxu0 0
        %503 = vmatpush2.bf16.msra.mxu0 0
        %504 = vmatprep.subr.bf16.mxu0 0
        %505 = vmatpush2.bf16.msra.mxu0 0
        %506 = vmatprep.subr.bf16.mxu0 0
        %507 = vmatpush2.bf16.msra.mxu0 0
        %508 = vmatprep.subr.bf16.mxu0 0
        %509 = vmatpush2.bf16.msra.mxu0 0
        %510 = vmatprep.subr.bf16.mxu0 0
        %511 = vmatpush2.bf16.msra.mxu0 0
        %512 = vmatprep.subr.bf16.mxu0 0
        %513 = vmatpush2.bf16.msra.mxu0 0
        %514 = vmatprep.mubr.bf16.mxu0 0
        %515 = vmatmul.mubr.bf16.gmra.mxu0 %v371
        %v516 = vpop.f32.mrf.mxu0
        %v517 = vadd.f32 0.0, %v516
        %v518 = vpop.f32.mrf.mxu0
        %v519 = vadd.f32 0.0, %v518
        %v520 = vpop.f32.mrf.mxu0
        %v521 = vpop.f32.mrf.mxu0
        %522 = vdwg.mxu0
        %523 = vmatprep.subr.bf16.mxu0 0
        %524 = vmatpush1.bf16.msra.mxu0 0
        %525 = vmatprep.subr.bf16.mxu0 0
        %526 = vmatpush1.bf16.msra.mxu0 0
        %527 = vmatprep.subr.bf16.mxu0 0
        %528 = vmatpush1.bf16.msra.mxu0 0
        %529 = vmatprep.subr.bf16.mxu0 0
        %530 = vmatpush1.bf16.msra.mxu0 0
        %531 = vmatprep.subr.bf16.mxu0 0
        %532 = vmatpush1.bf16.msra.mxu0 0
        %533 = vmatprep.subr.bf16.mxu0 0
        %534 = vmatpush1.bf16.msra.mxu0 0
        %535 = vmatprep.subr.bf16.mxu0 %v398
        %536 = vmatpush1.bf16.msra.mxu0 %v395
        %537 = vmatprep.subr.bf16.mxu0 %v352
        %538 = vmatpush1.bf16.msra.mxu0 %v351
        %539 = vmatprep.subr.bf16.mxu0 0
        %540 = vmatpush2.bf16.msra.mxu0 0
        %541 = vmatprep.subr.bf16.mxu0 0
        %542 = vmatpush2.bf16.msra.mxu0 0
        %543 = vmatprep.subr.bf16.mxu0 0
        %544 = vmatpush2.bf16.msra.mxu0 0
        %545 = vmatprep.subr.bf16.mxu0 0
        %546 = vmatpush2.bf16.msra.mxu0 0
        %547 = vmatprep.subr.bf16.mxu0 0
        %548 = vmatpush2.bf16.msra.mxu0 0
        %549 = vmatprep.subr.bf16.mxu0 0
        %550 = vmatpush2.bf16.msra.mxu0 0
        %551 = vmatprep.subr.bf16.mxu0 0
        %552 = vmatpush2.bf16.msra.mxu0 0
        %553 = vmatprep.subr.bf16.mxu0 0
        %554 = vmatpush2.bf16.msra.mxu0 0
        %555 = vmatprep.mubr.bf16.mxu0 0
        %556 = vmatmul.mubr.bf16.gmra.mxu0 %v371
        %v557 = vpop.f32.mrf.mxu0
        %v558 = vadd.f32 0.0, %v557
        %v559 = vpop.f32.mrf.mxu0
        %v560 = vadd.f32 0.0, %v559
        %v561 = vpop.f32.mrf.mxu0
        %v562 = vpop.f32.mrf.mxu0
        %563 = vdwg.mxu0
        %v564 = vpack.c.bf16 %v296, %v296
        %v565 = vld [vmem:[%s3] sm:$0xf]
        %v566 = vld [vmem:[%s3 + $0x4] sm:$0xf]
        %v567 = vld [vmem:[%s3 + $0x8] sm:$0xf]
        %v568 = vld [vmem:[%s3 + $0xc] sm:$0xf]
        %v569 = vld [vmem:[%s3 + $0x10] sm:$0xf]
        %v570 = vld [vmem:[%s3 + $0x14] sm:$0xf]
        %v571 = vld [vmem:[%s3 + $0x18] sm:$0xf]
        %v572 = vld [vmem:[%s3 + $0x1c] sm:$0xf]
        %v581 = vunpack.c.l.b16 %v565
        %v582 = vunpack.c.l.b16 %v566
        %v583 = vunpack.c.l.b16 %v567
        %v584 = vunpack.c.l.b16 %v568
        %v585 = vunpack.c.l.b16 %v569
        %v586 = vunpack.c.l.b16 %v570
        %v587 = vunpack.c.l.b16 %v571
        %v588 = vunpack.c.l.b16 %v572
        %v589 = vpack.c.b16 %v582, %v581
        %v590 = vpack.c.b16 %v584, %v583
        %v591 = vpack.c.b16 %v586, %v585
        %v592 = vpack.c.b16 %v588, %v587
        %vm597 = vcmask 523264
        %v599 = vsel %vm597, %v564, 0
        %601 = vmatprep.subr.bf16.mxu0 0
        %602 = vmatpush1.bf16.msra.mxu0 0
        %603 = vmatprep.subr.bf16.mxu0 0
        %604 = vmatpush1.bf16.msra.mxu0 0
        %605 = vmatprep.subr.bf16.mxu0 0
        %606 = vmatpush1.bf16.msra.mxu0 0
        %607 = vmatprep.subr.bf16.mxu0 0
        %608 = vmatpush1.bf16.msra.mxu0 0
        %609 = vmatprep.subr.bf16.mxu0 0
        %610 = vmatpush1.bf16.msra.mxu0 %v592
        %611 = vmatprep.subr.bf16.mxu0 0
        %612 = vmatpush1.bf16.msra.mxu0 %v591
        %613 = vmatprep.subr.bf16.mxu0 0
        %614 = vmatpush1.bf16.msra.mxu0 %v590
        %615 = vmatprep.subr.bf16.mxu0 0
        %616 = vmatpush1.bf16.msra.mxu0 %v589
        %617 = vmatprep.subr.bf16.mxu0 0
        %618 = vmatpush2.bf16.msra.mxu0 0
        %619 = vmatprep.subr.bf16.mxu0 0
        %620 = vmatpush2.bf16.msra.mxu0 0
        %621 = vmatprep.subr.bf16.mxu0 0
        %622 = vmatpush2.bf16.msra.mxu0 0
        %623 = vmatprep.subr.bf16.mxu0 0
        %624 = vmatpush2.bf16.msra.mxu0 0
        %625 = vmatprep.subr.bf16.mxu0 0
        %626 = vmatpush2.bf16.msra.mxu0 0
        %627 = vmatprep.subr.bf16.mxu0 0
        %628 = vmatpush2.bf16.msra.mxu0 0
        %629 = vmatprep.subr.bf16.mxu0 0
        %630 = vmatpush2.bf16.msra.mxu0 0
        %631 = vmatprep.subr.bf16.mxu0 0
        %632 = vmatpush2.bf16.msra.mxu0 0
        %633 = vmatprep.mubr.bf16.mxu0 0
        %634 = vmatmul.mubr.bf16.gmra.mxu0 %v599
        %v635 = vpop.f32.mrf.mxu0
        %v636 = vadd.f32 %v435, %v635
        %v637 = vpop.f32.mrf.mxu0
        %v638 = vpop.f32.mrf.mxu0
        %v639 = vpop.f32.mrf.mxu0
        %640 = vdwg.mxu0
        %v641 = vld [vmem:[#allocation5] ss:$0 sm:$0xff]
        %v642 = vadd.f32 %v636, %v641
        %v643 = vld [vmem:[#allocation5 + $0x1] ss:$0 sm:$0xff]
        %v644 = vld [vmem:[#allocation5 + $0x2] ss:$0 sm:$0xff]
        %v645 = vsel %vm597, %v642, 0.0
        %646 = vadd.xlane.f32.xlu0 %v645
        %v647 = vpop.xlane.xlu0 %646
        %v648 = vmul.f32 %v642, %v642
        %v649 = vsel %vm597, %v648, 0.0
        %650 = vadd.xlane.f32.xlu0 %v649
        %v651 = vpop.xlane.xlu0 %650
        %v652 = vmul.f32 %v647, 0.015625
        %v653 = vmul.f32 %v651, 0.015625
        %v654 = vmul.f32 %v652, %v652
        %v655 = vsub.f32 %v653, %v654
        %v656 = vmax.f32 %v655, 0.0
        %v657 = vsub.f32 %v642, %v652
        %v658 = vadd.f32 %v656, 1e-05
        %v659 = vrsqrt.pop %v658
        %v660 = vmul.f32 %v657, %v659
        %v661 = vmul.f32 %v660, %v643
        %v662 = vadd.f32 %v661, %v644
        %v663 = vmax.f32 %v662, 0.0
        %v664 = vpack.c.bf16 %v663, %v663
        %v665 = vld [vmem:[%s3 + $0x20] sm:$0xf]
        %v666 = vld [vmem:[%s3 + $0x24] sm:$0xf]
        %v667 = vld [vmem:[%s3 + $0x28] sm:$0xf]
        %v668 = vld [vmem:[%s3 + $0x2c] sm:$0xf]
        %v669 = vld [vmem:[%s3 + $0x30] sm:$0xf]
        %v670 = vld [vmem:[%s3 + $0x34] sm:$0xf]
        %v671 = vld [vmem:[%s3 + $0x38] sm:$0xf]
        %v672 = vld [vmem:[%s3 + $0x3c] sm:$0xf]
        %v673 = vld [vmem:[#allocation5 + $0x3] ss:$0 sm:$0xff]
        %v682 = vunpack.c.l.b16 %v665
        %v683 = vunpack.c.l.b16 %v666
        %v684 = vunpack.c.l.b16 %v667
        %v685 = vunpack.c.l.b16 %v668
        %v686 = vunpack.c.l.b16 %v669
        %v687 = vunpack.c.l.b16 %v670
        %v688 = vunpack.c.l.b16 %v671
        %v689 = vunpack.c.l.b16 %v672
        %v690 = vpack.c.b16 %v683, %v682
        %v691 = vpack.c.b16 %v685, %v684
        %v692 = vpack.c.b16 %v687, %v686
        %v693 = vpack.c.b16 %v689, %v688
        %v699 = vsel %vm597, %v664, 0
        %701 = vmatprep.subr.bf16.mxu0 0
        %702 = vmatpush1.bf16.msra.mxu0 0
        %703 = vmatprep.subr.bf16.mxu0 0
        %704 = vmatpush1.bf16.msra.mxu0 0
        %705 = vmatprep.subr.bf16.mxu0 0
        %706 = vmatpush1.bf16.msra.mxu0 0
        %707 = vmatprep.subr.bf16.mxu0 0
        %708 = vmatpush1.bf16.msra.mxu0 0
        %709 = vmatprep.subr.bf16.mxu0 0
        %710 = vmatpush1.bf16.msra.mxu0 %v693
        %711 = vmatprep.subr.bf16.mxu0 0
        %712 = vmatpush1.bf16.msra.mxu0 %v692
        %713 = vmatprep.subr.bf16.mxu0 0
        %714 = vmatpush1.bf16.msra.mxu0 %v691
        %715 = vmatprep.subr.bf16.mxu0 0
        %716 = vmatpush1.bf16.msra.mxu0 %v690
        %717 = vmatprep.subr.bf16.mxu0 0
        %718 = vmatpush2.bf16.msra.mxu0 0
        %719 = vmatprep.subr.bf16.mxu0 0
        %720 = vmatpush2.bf16.msra.mxu0 0
        %721 = vmatprep.subr.bf16.mxu0 0
        %722 = vmatpush2.bf16.msra.mxu0 0
        %723 = vmatprep.subr.bf16.mxu0 0
        %724 = vmatpush2.bf16.msra.mxu0 0
        %725 = vmatprep.subr.bf16.mxu0 0
        %726 = vmatpush2.bf16.msra.mxu0 0
        %727 = vmatprep.subr.bf16.mxu0 0
        %728 = vmatpush2.bf16.msra.mxu0 0
        %729 = vmatprep.subr.bf16.mxu0 0
        %730 = vmatpush2.bf16.msra.mxu0 0
        %731 = vmatprep.subr.bf16.mxu0 0
        %732 = vmatpush2.bf16.msra.mxu0 0
        %733 = vmatprep.mubr.bf16.mxu0 0
        %734 = vmatmul.mubr.bf16.gmra.mxu0 %v699
        %v735 = vpop.f32.mrf.mxu0
        %v736 = vadd.f32 %v673, %v735
        %v737 = vpop.f32.mrf.mxu0
        %v738 = vpop.f32.mrf.mxu0
        %v739 = vpop.f32.mrf.mxu0
        %740 = vdwg.mxu0
        %v741 = vld [vmem:[#allocation5 + $0x4] ss:$0 sm:$0xff]
        %v742 = vld [vmem:[#allocation5 + $0x5] ss:$0 sm:$0xff]
        %v743 = vsel %vm597, %v736, 0.0
        %744 = vadd.xlane.f32.xlu0 %v743
        %v745 = vpop.xlane.xlu0 %744
        %v746 = vmul.f32 %v736, %v736
        %v747 = vsel %vm597, %v746, 0.0
        %748 = vadd.xlane.f32.xlu0 %v747
        %v749 = vpop.xlane.xlu0 %748
        %v750 = vmul.f32 %v745, 0.015625
        %v751 = vmul.f32 %v749, 0.015625
        %v752 = vmul.f32 %v750, %v750
        %v753 = vsub.f32 %v751, %v752
        %v754 = vmax.f32 %v753, 0.0
        %v755 = vsub.f32 %v736, %v750
        %v756 = vadd.f32 %v754, 1e-05
        %v757 = vrsqrt.pop %v756
        %v758 = vmul.f32 %v755, %v757
        %v759 = vmul.f32 %v758, %v741
        %v760 = vadd.f32 %v759, %v742
        %v761 = vmax.f32 %v760, 0.0
        %v762 = vpack.c.bf16 %v761, %v761
        %v763 = vld [vmem:[%s3 + $0x40] sm:$0xf]
        %v764 = vld [vmem:[%s3 + $0x44] sm:$0xf]
        %v765 = vld [vmem:[%s3 + $0x48] sm:$0xf]
        %v766 = vld [vmem:[%s3 + $0x4c] sm:$0xf]
        %v767 = vld [vmem:[%s3 + $0x50] sm:$0xf]
        %v768 = vld [vmem:[%s3 + $0x54] sm:$0xf]
        %v769 = vld [vmem:[%s3 + $0x58] sm:$0xf]
        %v770 = vld [vmem:[%s3 + $0x5c] sm:$0xf]
        %v771 = vld [vmem:[#allocation5 + $0x6] ss:$0 sm:$0xff]
        %v780 = vunpack.c.l.b16 %v763
        %v781 = vunpack.c.l.b16 %v764
        %v782 = vunpack.c.l.b16 %v765
        %v783 = vunpack.c.l.b16 %v766
        %v784 = vunpack.c.l.b16 %v767
        %v785 = vunpack.c.l.b16 %v768
        %v786 = vunpack.c.l.b16 %v769
        %v787 = vunpack.c.l.b16 %v770
        %v788 = vpack.c.b16 %v781, %v780
        %v789 = vpack.c.b16 %v783, %v782
        %v790 = vpack.c.b16 %v785, %v784
        %v791 = vpack.c.b16 %v787, %v786
        %v797 = vsel %vm597, %v762, 0
        %799 = vmatprep.subr.bf16.mxu0 0
        %800 = vmatpush1.bf16.msra.mxu0 0
        %801 = vmatprep.subr.bf16.mxu0 0
        %802 = vmatpush1.bf16.msra.mxu0 0
        %803 = vmatprep.subr.bf16.mxu0 0
        %804 = vmatpush1.bf16.msra.mxu0 0
        %805 = vmatprep.subr.bf16.mxu0 0
        %806 = vmatpush1.bf16.msra.mxu0 0
        %807 = vmatprep.subr.bf16.mxu0 0
        %808 = vmatpush1.bf16.msra.mxu0 %v791
        %809 = vmatprep.subr.bf16.mxu0 0
        %810 = vmatpush1.bf16.msra.mxu0 %v790
        %811 = vmatprep.subr.bf16.mxu0 0
        %812 = vmatpush1.bf16.msra.mxu0 %v789
        %813 = vmatprep.subr.bf16.mxu0 0
        %814 = vmatpush1.bf16.msra.mxu0 %v788
        %815 = vmatprep.subr.bf16.mxu0 0
        %816 = vmatpush2.bf16.msra.mxu0 0
        %817 = vmatprep.subr.bf16.mxu0 0
        %818 = vmatpush2.bf16.msra.mxu0 0
        %819 = vmatprep.subr.bf16.mxu0 0
        %820 = vmatpush2.bf16.msra.mxu0 0
        %821 = vmatprep.subr.bf16.mxu0 0
        %822 = vmatpush2.bf16.msra.mxu0 0
        %823 = vmatprep.subr.bf16.mxu0 0
        %824 = vmatpush2.bf16.msra.mxu0 0
        %825 = vmatprep.subr.bf16.mxu0 0
        %826 = vmatpush2.bf16.msra.mxu0 0
        %827 = vmatprep.subr.bf16.mxu0 0
        %828 = vmatpush2.bf16.msra.mxu0 0
        %829 = vmatprep.subr.bf16.mxu0 0
        %830 = vmatpush2.bf16.msra.mxu0 0
        %831 = vmatprep.mubr.bf16.mxu0 0
        %832 = vmatmul.mubr.bf16.gmra.mxu0 %v797
        %v833 = vpop.f32.mrf.mxu0
        %v834 = vadd.f32 %v771, %v833
        %v835 = vpop.f32.mrf.mxu0
        %v836 = vpop.f32.mrf.mxu0
        %v837 = vpop.f32.mrf.mxu0
        %838 = vdwg.mxu0
        %v839 = vadd.f32 %v296, %v834
        %v840 = vpack.c.bf16 %v839, %v839
        %v841 = vld [vmem:[%s3 + $0x60] sm:$0xf]
        %v842 = vld [vmem:[%s3 + $0x64] sm:$0xf]
        %v843 = vld [vmem:[%s3 + $0x68] sm:$0xf]
        %v844 = vld [vmem:[%s3 + $0x6c] sm:$0xf]
        %v845 = vld [vmem:[%s3 + $0x70] sm:$0xf]
        %v846 = vld [vmem:[%s3 + $0x74] sm:$0xf]
        %v847 = vld [vmem:[%s3 + $0x78] sm:$0xf]
        %v848 = vld [vmem:[%s3 + $0x7c] sm:$0xf]
        %v857 = vunpack.c.l.b16 %v841
        %v858 = vunpack.c.l.b16 %v842
        %v859 = vunpack.c.l.b16 %v843
        %v860 = vunpack.c.l.b16 %v844
        %v861 = vunpack.c.l.b16 %v845
        %v862 = vunpack.c.l.b16 %v846
        %v863 = vunpack.c.l.b16 %v847
        %v864 = vunpack.c.l.b16 %v848
        %v865 = vpack.c.b16 %v858, %v857
        %v866 = vpack.c.b16 %v860, %v859
        %v867 = vpack.c.b16 %v862, %v861
        %v868 = vpack.c.b16 %v864, %v863
        %v874 = vsel %vm597, %v840, 0
        %876 = vmatprep.subr.bf16.mxu0 0
        %877 = vmatpush1.bf16.msra.mxu0 0
        %878 = vmatprep.subr.bf16.mxu0 0
        %879 = vmatpush1.bf16.msra.mxu0 0
        %880 = vmatprep.subr.bf16.mxu0 0
        %881 = vmatpush1.bf16.msra.mxu0 0
        %882 = vmatprep.subr.bf16.mxu0 0
        %883 = vmatpush1.bf16.msra.mxu0 0
        %884 = vmatprep.subr.bf16.mxu0 0
        %885 = vmatpush1.bf16.msra.mxu0 %v868
        %886 = vmatprep.subr.bf16.mxu0 0
        %887 = vmatpush1.bf16.msra.mxu0 %v867
        %888 = vmatprep.subr.bf16.mxu0 0
        %889 = vmatpush1.bf16.msra.mxu0 %v866
        %890 = vmatprep.subr.bf16.mxu0 0
        %891 = vmatpush1.bf16.msra.mxu0 %v865
        %892 = vmatprep.subr.bf16.mxu0 0
        %893 = vmatpush2.bf16.msra.mxu0 0
        %894 = vmatprep.subr.bf16.mxu0 0
        %895 = vmatpush2.bf16.msra.mxu0 0
        %896 = vmatprep.subr.bf16.mxu0 0
        %897 = vmatpush2.bf16.msra.mxu0 0
        %898 = vmatprep.subr.bf16.mxu0 0
        %899 = vmatpush2.bf16.msra.mxu0 0
        %900 = vmatprep.subr.bf16.mxu0 0
        %901 = vmatpush2.bf16.msra.mxu0 0
        %902 = vmatprep.subr.bf16.mxu0 0
        %903 = vmatpush2.bf16.msra.mxu0 0
        %904 = vmatprep.subr.bf16.mxu0 0
        %905 = vmatpush2.bf16.msra.mxu0 0
        %906 = vmatprep.subr.bf16.mxu0 0
        %907 = vmatpush2.bf16.msra.mxu0 0
        %908 = vmatprep.mubr.bf16.mxu0 0
        %909 = vmatmul.mubr.bf16.gmra.mxu0 %v874
        %v910 = vpop.f32.mrf.mxu0
        %v911 = vadd.f32 %v437, %v910
        %v912 = vpop.f32.mrf.mxu0
        %v913 = vpop.f32.mrf.mxu0
        %v914 = vpop.f32.mrf.mxu0
        %915 = vdwg.mxu0
        %v916 = vld [vmem:[#allocation5 + $0x10] ss:$0 sm:$0xff]
        %v917 = vadd.f32 %v911, %v916
        %v918 = vld [vmem:[#allocation5 + $0x11] ss:$0 sm:$0xff]
        %v919 = vld [vmem:[#allocation5 + $0x12] ss:$0 sm:$0xff]
        %v920 = vsel %vm597, %v917, 0.0
        %921 = vadd.xlane.f32.xlu0 %v920
        %v922 = vpop.xlane.xlu0 %921
        %v923 = vmul.f32 %v917, %v917
        %v924 = vsel %vm597, %v923, 0.0
        %925 = vadd.xlane.f32.xlu0 %v924
        %v926 = vpop.xlane.xlu0 %925
        %v927 = vmul.f32 %v922, 0.015625
        %v928 = vmul.f32 %v926, 0.015625
        %v929 = vmul.f32 %v927, %v927
        %v930 = vsub.f32 %v928, %v929
        %v931 = vmax.f32 %v930, 0.0
        %v932 = vsub.f32 %v917, %v927
        %v933 = vadd.f32 %v931, 1e-05
        %v934 = vrsqrt.pop %v933
        %v935 = vmul.f32 %v932, %v934
        %v936 = vmul.f32 %v935, %v918
        %v937 = vadd.f32 %v936, %v919
        %v938 = vmax.f32 %v937, 0.0
        %v939 = vpack.c.bf16 %v938, %v938
        %v940 = vld [vmem:[%s3 + $0x80] sm:$0xf]
        %v941 = vld [vmem:[%s3 + $0x84] sm:$0xf]
        %v942 = vld [vmem:[%s3 + $0x88] sm:$0xf]
        %v943 = vld [vmem:[%s3 + $0x8c] sm:$0xf]
        %v944 = vld [vmem:[%s3 + $0x90] sm:$0xf]
        %v945 = vld [vmem:[%s3 + $0x94] sm:$0xf]
        %v946 = vld [vmem:[%s3 + $0x98] sm:$0xf]
        %v947 = vld [vmem:[%s3 + $0x9c] sm:$0xf]
        %v948 = vld [vmem:[#allocation5 + $0x13] ss:$0 sm:$0xff]
        %v957 = vunpack.c.l.b16 %v940
        %v958 = vunpack.c.l.b16 %v941
        %v959 = vunpack.c.l.b16 %v942
        %v960 = vunpack.c.l.b16 %v943
        %v961 = vunpack.c.l.b16 %v944
        %v962 = vunpack.c.l.b16 %v945
        %v963 = vunpack.c.l.b16 %v946
        %v964 = vunpack.c.l.b16 %v947
        %v965 = vpack.c.b16 %v958, %v957
        %v966 = vpack.c.b16 %v960, %v959
        %v967 = vpack.c.b16 %v962, %v961
        %v968 = vpack.c.b16 %v964, %v963
        %v974 = vsel %vm597, %v939, 0
        %976 = vmatprep.subr.bf16.mxu0 0
        %977 = vmatpush1.bf16.msra.mxu0 0
        %978 = vmatprep.subr.bf16.mxu0 0
        %979 = vmatpush1.bf16.msra.mxu0 0
        %980 = vmatprep.subr.bf16.mxu0 0
        %981 = vmatpush1.bf16.msra.mxu0 0
        %982 = vmatprep.subr.bf16.mxu0 0
        %983 = vmatpush1.bf16.msra.mxu0 0
        %984 = vmatprep.subr.bf16.mxu0 0
        %985 = vmatpush1.bf16.msra.mxu0 %v968
        %986 = vmatprep.subr.bf16.mxu0 0
        %987 = vmatpush1.bf16.msra.mxu0 %v967
        %988 = vmatprep.subr.bf16.mxu0 0
        %989 = vmatpush1.bf16.msra.mxu0 %v966
        %990 = vmatprep.subr.bf16.mxu0 0
        %991 = vmatpush1.bf16.msra.mxu0 %v965
        %992 = vmatprep.subr.bf16.mxu0 0
        %993 = vmatpush2.bf16.msra.mxu0 0
        %994 = vmatprep.subr.bf16.mxu0 0
        %995 = vmatpush2.bf16.msra.mxu0 0
        %996 = vmatprep.subr.bf16.mxu0 0
        %997 = vmatpush2.bf16.msra.mxu0 0
        %998 = vmatprep.subr.bf16.mxu0 0
        %999 = vmatpush2.bf16.msra.mxu0 0
        %1000 = vmatprep.subr.bf16.mxu0 0
        %1001 = vmatpush2.bf16.msra.mxu0 0
        %1002 = vmatprep.subr.bf16.mxu0 0
        %1003 = vmatpush2.bf16.msra.mxu0 0
        %1004 = vmatprep.subr.bf16.mxu0 0
        %1005 = vmatpush2.bf16.msra.mxu0 0
        %1006 = vmatprep.subr.bf16.mxu0 0
        %1007 = vmatpush2.bf16.msra.mxu0 0
        %1008 = vmatprep.mubr.bf16.mxu0 0
        %1009 = vmatmul.mubr.bf16.gmra.mxu0 %v974
        %v1010 = vpop.f32.mrf.mxu0
        %v1011 = vadd.f32 %v948, %v1010
        %v1012 = vpop.f32.mrf.mxu0
        %v1013 = vpop.f32.mrf.mxu0
        %v1014 = vpop.f32.mrf.mxu0
        %1015 = vdwg.mxu0
        %v1016 = vld [vmem:[#allocation5 + $0x14] ss:$0 sm:$0xff]
        %v1017 = vld [vmem:[#allocation5 + $0x15] ss:$0 sm:$0xff]
        %v1018 = vsel %vm597, %v1011, 0.0
        %1019 = vadd.xlane.f32.xlu0 %v1018
        %v1020 = vpop.xlane.xlu0 %1019
        %v1021 = vmul.f32 %v1011, %v1011
        %v1022 = vsel %vm597, %v1021, 0.0
        %1023 = vadd.xlane.f32.xlu0 %v1022
        %v1024 = vpop.xlane.xlu0 %1023
        %v1025 = vmul.f32 %v1020, 0.015625
        %v1026 = vmul.f32 %v1024, 0.015625
        %v1027 = vmul.f32 %v1025, %v1025
        %v1028 = vsub.f32 %v1026, %v1027
        %v1029 = vmax.f32 %v1028, 0.0
        %v1030 = vsub.f32 %v1011, %v1025
        %v1031 = vadd.f32 %v1029, 1e-05
        %v1032 = vrsqrt.pop %v1031
        %v1033 = vmul.f32 %v1030, %v1032
        %v1034 = vmul.f32 %v1033, %v1016
        %v1035 = vadd.f32 %v1034, %v1017
        %v1036 = vmax.f32 %v1035, 0.0
        %v1037 = vpack.c.bf16 %v1036, %v1036
        %v1038 = vld [vmem:[%s3 + $0xa0] sm:$0xf]
        %v1039 = vld [vmem:[%s3 + $0xa4] sm:$0xf]
        %v1040 = vld [vmem:[%s3 + $0xa8] sm:$0xf]
        %v1041 = vld [vmem:[%s3 + $0xac] sm:$0xf]
        %v1042 = vld [vmem:[%s3 + $0xb0] sm:$0xf]
        %v1043 = vld [vmem:[%s3 + $0xb4] sm:$0xf]
        %v1044 = vld [vmem:[%s3 + $0xb8] sm:$0xf]
        %v1045 = vld [vmem:[%s3 + $0xbc] sm:$0xf]
        %v1046 = vld [vmem:[#allocation5 + $0x16] ss:$0 sm:$0xff]
        %v1055 = vunpack.c.l.b16 %v1038
        %v1056 = vunpack.c.l.b16 %v1039
        %v1057 = vunpack.c.l.b16 %v1040
        %v1058 = vunpack.c.l.b16 %v1041
        %v1059 = vunpack.c.l.b16 %v1042
        %v1060 = vunpack.c.l.b16 %v1043
        %v1061 = vunpack.c.l.b16 %v1044
        %v1062 = vunpack.c.l.b16 %v1045
        %v1063 = vpack.c.b16 %v1056, %v1055
        %v1064 = vpack.c.b16 %v1058, %v1057
        %v1065 = vpack.c.b16 %v1060, %v1059
        %v1066 = vpack.c.b16 %v1062, %v1061
        %v1072 = vsel %vm597, %v1037, 0
        %1074 = vmatprep.subr.bf16.mxu0 0
        %1075 = vmatpush1.bf16.msra.mxu0 0
        %1076 = vmatprep.subr.bf16.mxu0 0
        %1077 = vmatpush1.bf16.msra.mxu0 0
        %1078 = vmatprep.subr.bf16.mxu0 0
        %1079 = vmatpush1.bf16.msra.mxu0 0
        %1080 = vmatprep.subr.bf16.mxu0 0
        %1081 = vmatpush1.bf16.msra.mxu0 0
        %1082 = vmatprep.subr.bf16.mxu0 0
        %1083 = vmatpush1.bf16.msra.mxu0 %v1066
        %1084 = vmatprep.subr.bf16.mxu0 0
        %1085 = vmatpush1.bf16.msra.mxu0 %v1065
        %1086 = vmatprep.subr.bf16.mxu0 0
        %1087 = vmatpush1.bf16.msra.mxu0 %v1064
        %1088 = vmatprep.subr.bf16.mxu0 0
        %1089 = vmatpush1.bf16.msra.mxu0 %v1063
        %1090 = vmatprep.subr.bf16.mxu0 0
        %1091 = vmatpush2.bf16.msra.mxu0 0
        %1092 = vmatprep.subr.bf16.mxu0 0
        %1093 = vmatpush2.bf16.msra.mxu0 0
        %1094 = vmatprep.subr.bf16.mxu0 0
        %1095 = vmatpush2.bf16.msra.mxu0 0
        %1096 = vmatprep.subr.bf16.mxu0 0
        %1097 = vmatpush2.bf16.msra.mxu0 0
        %1098 = vmatprep.subr.bf16.mxu0 0
        %1099 = vmatpush2.bf16.msra.mxu0 0
        %1100 = vmatprep.subr.bf16.mxu0 0
        %1101 = vmatpush2.bf16.msra.mxu0 0
        %1102 = vmatprep.subr.bf16.mxu0 0
        %1103 = vmatpush2.bf16.msra.mxu0 0
        %1104 = vmatprep.subr.bf16.mxu0 0
        %1105 = vmatpush2.bf16.msra.mxu0 0
        %1106 = vmatprep.mubr.bf16.mxu0 0
        %1107 = vmatmul.mubr.bf16.gmra.mxu0 %v1072
        %v1108 = vpop.f32.mrf.mxu0
        %v1109 = vadd.f32 %v1046, %v1108
        %v1110 = vpop.f32.mrf.mxu0
        %v1111 = vpop.f32.mrf.mxu0
        %v1112 = vpop.f32.mrf.mxu0
        %1113 = vdwg.mxu0
        %v1114 = vadd.f32 %v839, %v1109
        %v1115 = vpack.c.bf16 %v1114, %v1114
        %v1116 = vld [vmem:[%s3 + $0xc0] sm:$0xf]
        %v1117 = vld [vmem:[%s3 + $0xc4] sm:$0xf]
        %v1118 = vld [vmem:[%s3 + $0xc8] sm:$0xf]
        %v1119 = vld [vmem:[%s3 + $0xcc] sm:$0xf]
        %v1120 = vld [vmem:[%s3 + $0xd0] sm:$0xf]
        %v1121 = vld [vmem:[%s3 + $0xd4] sm:$0xf]
        %v1122 = vld [vmem:[%s3 + $0xd8] sm:$0xf]
        %v1123 = vld [vmem:[%s3 + $0xdc] sm:$0xf]
        %v1132 = vunpack.c.l.b16 %v1116
        %v1133 = vunpack.c.l.b16 %v1117
        %v1134 = vunpack.c.l.b16 %v1118
        %v1135 = vunpack.c.l.b16 %v1119
        %v1136 = vunpack.c.l.b16 %v1120
        %v1137 = vunpack.c.l.b16 %v1121
        %v1138 = vunpack.c.l.b16 %v1122
        %v1139 = vunpack.c.l.b16 %v1123
        %v1140 = vpack.c.b16 %v1133, %v1132
        %v1141 = vpack.c.b16 %v1135, %v1134
        %v1142 = vpack.c.b16 %v1137, %v1136
        %v1143 = vpack.c.b16 %v1139, %v1138
        %v1149 = vsel %vm597, %v1115, 0
        %1151 = vmatprep.subr.bf16.mxu0 0
        %1152 = vmatpush1.bf16.msra.mxu0 0
        %1153 = vmatprep.subr.bf16.mxu0 0
        %1154 = vmatpush1.bf16.msra.mxu0 0
        %1155 = vmatprep.subr.bf16.mxu0 0
        %1156 = vmatpush1.bf16.msra.mxu0 0
        %1157 = vmatprep.subr.bf16.mxu0 0
        %1158 = vmatpush1.bf16.msra.mxu0 0
        %1159 = vmatprep.subr.bf16.mxu0 0
        %1160 = vmatpush1.bf16.msra.mxu0 %v1143
        %1161 = vmatprep.subr.bf16.mxu0 0
        %1162 = vmatpush1.bf16.msra.mxu0 %v1142
        %1163 = vmatprep.subr.bf16.mxu0 0
        %1164 = vmatpush1.bf16.msra.mxu0 %v1141
        %1165 = vmatprep.subr.bf16.mxu0 0
        %1166 = vmatpush1.bf16.msra.mxu0 %v1140
        %1167 = vmatprep.subr.bf16.mxu0 0
        %1168 = vmatpush2.bf16.msra.mxu0 0
        %1169 = vmatprep.subr.bf16.mxu0 0
        %1170 = vmatpush2.bf16.msra.mxu0 0
        %1171 = vmatprep.subr.bf16.mxu0 0
        %1172 = vmatpush2.bf16.msra.mxu0 0
        %1173 = vmatprep.subr.bf16.mxu0 0
        %1174 = vmatpush2.bf16.msra.mxu0 0
        %1175 = vmatprep.subr.bf16.mxu0 0
        %1176 = vmatpush2.bf16.msra.mxu0 0
        %1177 = vmatprep.subr.bf16.mxu0 0
        %1178 = vmatpush2.bf16.msra.mxu0 0
        %1179 = vmatprep.subr.bf16.mxu0 0
        %1180 = vmatpush2.bf16.msra.mxu0 0
        %1181 = vmatprep.subr.bf16.mxu0 0
        %1182 = vmatpush2.bf16.msra.mxu0 0
        %1183 = vmatprep.mubr.bf16.mxu0 0
        %1184 = vmatmul.mubr.bf16.gmra.mxu0 %v1149
        %v1185 = vpop.f32.mrf.mxu0
        %v1186 = vadd.f32 %v476, %v1185
        %v1187 = vpop.f32.mrf.mxu0
        %v1188 = vpop.f32.mrf.mxu0
        %v1189 = vpop.f32.mrf.mxu0
        %1190 = vdwg.mxu0
        %v1191 = vld [vmem:[#allocation5 + $0x20] ss:$0 sm:$0xff]
        %v1192 = vadd.f32 %v1186, %v1191
        %v1193 = vld [vmem:[#allocation5 + $0x21] ss:$0 sm:$0xff]
        %v1194 = vld [vmem:[#allocation5 + $0x22] ss:$0 sm:$0xff]
        %v1195 = vsel %vm597, %v1192, 0.0
        %1196 = vadd.xlane.f32.xlu0 %v1195
        %v1197 = vpop.xlane.xlu0 %1196
        %v1198 = vmul.f32 %v1192, %v1192
        %v1199 = vsel %vm597, %v1198, 0.0
        %1200 = vadd.xlane.f32.xlu0 %v1199
        %v1201 = vpop.xlane.xlu0 %1200
        %v1202 = vmul.f32 %v1197, 0.015625
        %v1203 = vmul.f32 %v1201, 0.015625
        %v1204 = vmul.f32 %v1202, %v1202
        %v1205 = vsub.f32 %v1203, %v1204
        %v1206 = vmax.f32 %v1205, 0.0
        %v1207 = vsub.f32 %v1192, %v1202
        %v1208 = vadd.f32 %v1206, 1e-05
        %v1209 = vrsqrt.pop %v1208
        %v1210 = vmul.f32 %v1207, %v1209
        %v1211 = vmul.f32 %v1210, %v1193
        %v1212 = vadd.f32 %v1211, %v1194
        %v1213 = vmax.f32 %v1212, 0.0
        %v1214 = vpack.c.bf16 %v1213, %v1213
        %v1215 = vld [vmem:[%s3 + $0xe0] sm:$0xf]
        %v1216 = vld [vmem:[%s3 + $0xe4] sm:$0xf]
        %v1217 = vld [vmem:[%s3 + $0xe8] sm:$0xf]
        %v1218 = vld [vmem:[%s3 + $0xec] sm:$0xf]
        %v1219 = vld [vmem:[%s3 + $0xf0] sm:$0xf]
        %v1220 = vld [vmem:[%s3 + $0xf4] sm:$0xf]
        %v1221 = vld [vmem:[%s3 + $0xf8] sm:$0xf]
        %v1222 = vld [vmem:[%s3 + $0xfc] sm:$0xf]
        %v1223 = vld [vmem:[#allocation5 + $0x23] ss:$0 sm:$0xff]
        %v1232 = vunpack.c.l.b16 %v1215
        %v1233 = vunpack.c.l.b16 %v1216
        %v1234 = vunpack.c.l.b16 %v1217
        %v1235 = vunpack.c.l.b16 %v1218
        %v1236 = vunpack.c.l.b16 %v1219
        %v1237 = vunpack.c.l.b16 %v1220
        %v1238 = vunpack.c.l.b16 %v1221
        %v1239 = vunpack.c.l.b16 %v1222
        %v1240 = vpack.c.b16 %v1233, %v1232
        %v1241 = vpack.c.b16 %v1235, %v1234
        %v1242 = vpack.c.b16 %v1237, %v1236
        %v1243 = vpack.c.b16 %v1239, %v1238
        %v1249 = vsel %vm597, %v1214, 0
        %1251 = vmatprep.subr.bf16.mxu0 0
        %1252 = vmatpush1.bf16.msra.mxu0 0
        %1253 = vmatprep.subr.bf16.mxu0 0
        %1254 = vmatpush1.bf16.msra.mxu0 0
        %1255 = vmatprep.subr.bf16.mxu0 0
        %1256 = vmatpush1.bf16.msra.mxu0 0
        %1257 = vmatprep.subr.bf16.mxu0 0
        %1258 = vmatpush1.bf16.msra.mxu0 0
        %1259 = vmatprep.subr.bf16.mxu0 0
        %1260 = vmatpush1.bf16.msra.mxu0 %v1243
        %1261 = vmatprep.subr.bf16.mxu0 0
        %1262 = vmatpush1.bf16.msra.mxu0 %v1242
        %1263 = vmatprep.subr.bf16.mxu0 0
        %1264 = vmatpush1.bf16.msra.mxu0 %v1241
        %1265 = vmatprep.subr.bf16.mxu0 0
        %1266 = vmatpush1.bf16.msra.mxu0 %v1240
        %1267 = vmatprep.subr.bf16.mxu0 0
        %1268 = vmatpush2.bf16.msra.mxu0 0
        %1269 = vmatprep.subr.bf16.mxu0 0
        %1270 = vmatpush2.bf16.msra.mxu0 0
        %1271 = vmatprep.subr.bf16.mxu0 0
        %1272 = vmatpush2.bf16.msra.mxu0 0
        %1273 = vmatprep.subr.bf16.mxu0 0
        %1274 = vmatpush2.bf16.msra.mxu0 0
        %1275 = vmatprep.subr.bf16.mxu0 0
        %1276 = vmatpush2.bf16.msra.mxu0 0
        %1277 = vmatprep.subr.bf16.mxu0 0
        %1278 = vmatpush2.bf16.msra.mxu0 0
        %1279 = vmatprep.subr.bf16.mxu0 0
        %1280 = vmatpush2.bf16.msra.mxu0 0
        %1281 = vmatprep.subr.bf16.mxu0 0
        %1282 = vmatpush2.bf16.msra.mxu0 0
        %1283 = vmatprep.mubr.bf16.mxu0 0
        %1284 = vmatmul.mubr.bf16.gmra.mxu0 %v1249
        %v1285 = vpop.f32.mrf.mxu0
        %v1286 = vadd.f32 %v1223, %v1285
        %v1287 = vpop.f32.mrf.mxu0
        %v1288 = vpop.f32.mrf.mxu0
        %v1289 = vpop.f32.mrf.mxu0
        %1290 = vdwg.mxu0
        %v1291 = vld [vmem:[#allocation5 + $0x24] ss:$0 sm:$0xff]
        %v1292 = vld [vmem:[#allocation5 + $0x25] ss:$0 sm:$0xff]
        %v1293 = vsel %vm597, %v1286, 0.0
        %1294 = vadd.xlane.f32.xlu0 %v1293
        %v1295 = vpop.xlane.xlu0 %1294
        %v1296 = vmul.f32 %v1286, %v1286
        %v1297 = vsel %vm597, %v1296, 0.0
        %1298 = vadd.xlane.f32.xlu0 %v1297
        %v1299 = vpop.xlane.xlu0 %1298
        %v1300 = vmul.f32 %v1295, 0.015625
        %v1301 = vmul.f32 %v1299, 0.015625
        %v1302 = vmul.f32 %v1300, %v1300
        %v1303 = vsub.f32 %v1301, %v1302
        %v1304 = vmax.f32 %v1303, 0.0
        %v1305 = vsub.f32 %v1286, %v1300
        %v1306 = vadd.f32 %v1304, 1e-05
        %v1307 = vrsqrt.pop %v1306
        %v1308 = vmul.f32 %v1305, %v1307
        %v1309 = vmul.f32 %v1308, %v1291
        %v1310 = vadd.f32 %v1309, %v1292
        %v1311 = vmax.f32 %v1310, 0.0
        %v1312 = vpack.c.bf16 %v1311, %v1311
        %v1313 = vld [vmem:[%s3 + $0x100] sm:$0xf]
        %v1314 = vld [vmem:[%s3 + $0x104] sm:$0xf]
        %v1315 = vld [vmem:[%s3 + $0x108] sm:$0xf]
        %v1316 = vld [vmem:[%s3 + $0x10c] sm:$0xf]
        %v1317 = vld [vmem:[%s3 + $0x110] sm:$0xf]
        %v1318 = vld [vmem:[%s3 + $0x114] sm:$0xf]
        %v1319 = vld [vmem:[%s3 + $0x118] sm:$0xf]
        %v1320 = vld [vmem:[%s3 + $0x11c] sm:$0xf]
        %v1321 = vld [vmem:[#allocation5 + $0x26] ss:$0 sm:$0xff]
        %v1330 = vunpack.c.l.b16 %v1313
        %v1331 = vunpack.c.l.b16 %v1314
        %v1332 = vunpack.c.l.b16 %v1315
        %v1333 = vunpack.c.l.b16 %v1316
        %v1334 = vunpack.c.l.b16 %v1317
        %v1335 = vunpack.c.l.b16 %v1318
        %v1336 = vunpack.c.l.b16 %v1319
        %v1337 = vunpack.c.l.b16 %v1320
        %v1338 = vpack.c.b16 %v1331, %v1330
        %v1339 = vpack.c.b16 %v1333, %v1332
        %v1340 = vpack.c.b16 %v1335, %v1334
        %v1341 = vpack.c.b16 %v1337, %v1336
        %v1347 = vsel %vm597, %v1312, 0
        %1349 = vmatprep.subr.bf16.mxu0 0
        %1350 = vmatpush1.bf16.msra.mxu0 0
        %1351 = vmatprep.subr.bf16.mxu0 0
        %1352 = vmatpush1.bf16.msra.mxu0 0
        %1353 = vmatprep.subr.bf16.mxu0 0
        %1354 = vmatpush1.bf16.msra.mxu0 0
        %1355 = vmatprep.subr.bf16.mxu0 0
        %1356 = vmatpush1.bf16.msra.mxu0 0
        %1357 = vmatprep.subr.bf16.mxu0 0
        %1358 = vmatpush1.bf16.msra.mxu0 %v1341
        %1359 = vmatprep.subr.bf16.mxu0 0
        %1360 = vmatpush1.bf16.msra.mxu0 %v1340
        %1361 = vmatprep.subr.bf16.mxu0 0
        %1362 = vmatpush1.bf16.msra.mxu0 %v1339
        %1363 = vmatprep.subr.bf16.mxu0 0
        %1364 = vmatpush1.bf16.msra.mxu0 %v1338
        %1365 = vmatprep.subr.bf16.mxu0 0
        %1366 = vmatpush2.bf16.msra.mxu0 0
        %1367 = vmatprep.subr.bf16.mxu0 0
        %1368 = vmatpush2.bf16.msra.mxu0 0
        %1369 = vmatprep.subr.bf16.mxu0 0
        %1370 = vmatpush2.bf16.msra.mxu0 0
        %1371 = vmatprep.subr.bf16.mxu0 0
        %1372 = vmatpush2.bf16.msra.mxu0 0
        %1373 = vmatprep.subr.bf16.mxu0 0
        %1374 = vmatpush2.bf16.msra.mxu0 0
        %1375 = vmatprep.subr.bf16.mxu0 0
        %1376 = vmatpush2.bf16.msra.mxu0 0
        %1377 = vmatprep.subr.bf16.mxu0 0
        %1378 = vmatpush2.bf16.msra.mxu0 0
        %1379 = vmatprep.subr.bf16.mxu0 0
        %1380 = vmatpush2.bf16.msra.mxu0 0
        %1381 = vmatprep.mubr.bf16.mxu0 0
        %1382 = vmatmul.mubr.bf16.gmra.mxu0 %v1347
        %v1383 = vpop.f32.mrf.mxu0
        %v1384 = vadd.f32 %v1321, %v1383
        %v1385 = vpop.f32.mrf.mxu0
        %v1386 = vpop.f32.mrf.mxu0
        %v1387 = vpop.f32.mrf.mxu0
        %1388 = vdwg.mxu0
        %v1389 = vadd.f32 %v1114, %v1384
        %v1390 = vpack.c.bf16 %v1389, %v1389
        %v1391 = vld [vmem:[%s3 + $0x120] sm:$0xf]
        %v1392 = vld [vmem:[%s3 + $0x124] sm:$0xf]
        %v1393 = vld [vmem:[%s3 + $0x128] sm:$0xf]
        %v1394 = vld [vmem:[%s3 + $0x12c] sm:$0xf]
        %v1395 = vld [vmem:[%s3 + $0x130] sm:$0xf]
        %v1396 = vld [vmem:[%s3 + $0x134] sm:$0xf]
        %v1397 = vld [vmem:[%s3 + $0x138] sm:$0xf]
        %v1398 = vld [vmem:[%s3 + $0x13c] sm:$0xf]
        %v1407 = vunpack.c.l.b16 %v1391
        %v1408 = vunpack.c.l.b16 %v1392
        %v1409 = vunpack.c.l.b16 %v1393
        %v1410 = vunpack.c.l.b16 %v1394
        %v1411 = vunpack.c.l.b16 %v1395
        %v1412 = vunpack.c.l.b16 %v1396
        %v1413 = vunpack.c.l.b16 %v1397
        %v1414 = vunpack.c.l.b16 %v1398
        %v1415 = vpack.c.b16 %v1408, %v1407
        %v1416 = vpack.c.b16 %v1410, %v1409
        %v1417 = vpack.c.b16 %v1412, %v1411
        %v1418 = vpack.c.b16 %v1414, %v1413
        %v1424 = vsel %vm597, %v1390, 0
        %1426 = vmatprep.subr.bf16.mxu0 0
        %1427 = vmatpush1.bf16.msra.mxu0 0
        %1428 = vmatprep.subr.bf16.mxu0 0
        %1429 = vmatpush1.bf16.msra.mxu0 0
        %1430 = vmatprep.subr.bf16.mxu0 0
        %1431 = vmatpush1.bf16.msra.mxu0 0
        %1432 = vmatprep.subr.bf16.mxu0 0
        %1433 = vmatpush1.bf16.msra.mxu0 0
        %1434 = vmatprep.subr.bf16.mxu0 0
        %1435 = vmatpush1.bf16.msra.mxu0 %v1418
        %1436 = vmatprep.subr.bf16.mxu0 0
        %1437 = vmatpush1.bf16.msra.mxu0 %v1417
        %1438 = vmatprep.subr.bf16.mxu0 0
        %1439 = vmatpush1.bf16.msra.mxu0 %v1416
        %1440 = vmatprep.subr.bf16.mxu0 0
        %1441 = vmatpush1.bf16.msra.mxu0 %v1415
        %1442 = vmatprep.subr.bf16.mxu0 0
        %1443 = vmatpush2.bf16.msra.mxu0 0
        %1444 = vmatprep.subr.bf16.mxu0 0
        %1445 = vmatpush2.bf16.msra.mxu0 0
        %1446 = vmatprep.subr.bf16.mxu0 0
        %1447 = vmatpush2.bf16.msra.mxu0 0
        %1448 = vmatprep.subr.bf16.mxu0 0
        %1449 = vmatpush2.bf16.msra.mxu0 0
        %1450 = vmatprep.subr.bf16.mxu0 0
        %1451 = vmatpush2.bf16.msra.mxu0 0
        %1452 = vmatprep.subr.bf16.mxu0 0
        %1453 = vmatpush2.bf16.msra.mxu0 0
        %1454 = vmatprep.subr.bf16.mxu0 0
        %1455 = vmatpush2.bf16.msra.mxu0 0
        %1456 = vmatprep.subr.bf16.mxu0 0
        %1457 = vmatpush2.bf16.msra.mxu0 0
        %1458 = vmatprep.mubr.bf16.mxu0 0
        %1459 = vmatmul.mubr.bf16.gmra.mxu0 %v1424
        %v1460 = vpop.f32.mrf.mxu0
        %v1461 = vadd.f32 %v478, %v1460
        %v1462 = vpop.f32.mrf.mxu0
        %v1463 = vpop.f32.mrf.mxu0
        %v1464 = vpop.f32.mrf.mxu0
        %1465 = vdwg.mxu0
        %v1466 = vld [vmem:[#allocation5 + $0x30] ss:$0 sm:$0xff]
        %v1467 = vadd.f32 %v1461, %v1466
        %v1468 = vld [vmem:[#allocation5 + $0x31] ss:$0 sm:$0xff]
        %v1469 = vld [vmem:[#allocation5 + $0x32] ss:$0 sm:$0xff]
        %v1470 = vsel %vm597, %v1467, 0.0
        %1471 = vadd.xlane.f32.xlu0 %v1470
        %v1472 = vpop.xlane.xlu0 %1471
        %v1473 = vmul.f32 %v1467, %v1467
        %v1474 = vsel %vm597, %v1473, 0.0
        %1475 = vadd.xlane.f32.xlu0 %v1474
        %v1476 = vpop.xlane.xlu0 %1475
        %v1477 = vmul.f32 %v1472, 0.015625
        %v1478 = vmul.f32 %v1476, 0.015625
        %v1479 = vmul.f32 %v1477, %v1477
        %v1480 = vsub.f32 %v1478, %v1479
        %v1481 = vmax.f32 %v1480, 0.0
        %v1482 = vsub.f32 %v1467, %v1477
        %v1483 = vadd.f32 %v1481, 1e-05
        %v1484 = vrsqrt.pop %v1483
        %v1485 = vmul.f32 %v1482, %v1484
        %v1486 = vmul.f32 %v1485, %v1468
        %v1487 = vadd.f32 %v1486, %v1469
        %v1488 = vmax.f32 %v1487, 0.0
        %v1489 = vpack.c.bf16 %v1488, %v1488
        %v1490 = vld [vmem:[%s3 + $0x140] sm:$0xf]
        %v1491 = vld [vmem:[%s3 + $0x144] sm:$0xf]
        %v1492 = vld [vmem:[%s3 + $0x148] sm:$0xf]
        %v1493 = vld [vmem:[%s3 + $0x14c] sm:$0xf]
        %v1494 = vld [vmem:[%s3 + $0x150] sm:$0xf]
        %v1495 = vld [vmem:[%s3 + $0x154] sm:$0xf]
        %v1496 = vld [vmem:[%s3 + $0x158] sm:$0xf]
        %v1497 = vld [vmem:[%s3 + $0x15c] sm:$0xf]
        %v1498 = vld [vmem:[#allocation5 + $0x33] ss:$0 sm:$0xff]
        %v1507 = vunpack.c.l.b16 %v1490
        %v1508 = vunpack.c.l.b16 %v1491
        %v1509 = vunpack.c.l.b16 %v1492
        %v1510 = vunpack.c.l.b16 %v1493
        %v1511 = vunpack.c.l.b16 %v1494
        %v1512 = vunpack.c.l.b16 %v1495
        %v1513 = vunpack.c.l.b16 %v1496
        %v1514 = vunpack.c.l.b16 %v1497
        %v1515 = vpack.c.b16 %v1508, %v1507
        %v1516 = vpack.c.b16 %v1510, %v1509
        %v1517 = vpack.c.b16 %v1512, %v1511
        %v1518 = vpack.c.b16 %v1514, %v1513
        %v1524 = vsel %vm597, %v1489, 0
        %1526 = vmatprep.subr.bf16.mxu0 0
        %1527 = vmatpush1.bf16.msra.mxu0 0
        %1528 = vmatprep.subr.bf16.mxu0 0
        %1529 = vmatpush1.bf16.msra.mxu0 0
        %1530 = vmatprep.subr.bf16.mxu0 0
        %1531 = vmatpush1.bf16.msra.mxu0 0
        %1532 = vmatprep.subr.bf16.mxu0 0
        %1533 = vmatpush1.bf16.msra.mxu0 0
        %1534 = vmatprep.subr.bf16.mxu0 0
        %1535 = vmatpush1.bf16.msra.mxu0 %v1518
        %1536 = vmatprep.subr.bf16.mxu0 0
        %1537 = vmatpush1.bf16.msra.mxu0 %v1517
        %1538 = vmatprep.subr.bf16.mxu0 0
        %1539 = vmatpush1.bf16.msra.mxu0 %v1516
        %1540 = vmatprep.subr.bf16.mxu0 0
        %1541 = vmatpush1.bf16.msra.mxu0 %v1515
        %1542 = vmatprep.subr.bf16.mxu0 0
        %1543 = vmatpush2.bf16.msra.mxu0 0
        %1544 = vmatprep.subr.bf16.mxu0 0
        %1545 = vmatpush2.bf16.msra.mxu0 0
        %1546 = vmatprep.subr.bf16.mxu0 0
        %1547 = vmatpush2.bf16.msra.mxu0 0
        %1548 = vmatprep.subr.bf16.mxu0 0
        %1549 = vmatpush2.bf16.msra.mxu0 0
        %1550 = vmatprep.subr.bf16.mxu0 0
        %1551 = vmatpush2.bf16.msra.mxu0 0
        %1552 = vmatprep.subr.bf16.mxu0 0
        %1553 = vmatpush2.bf16.msra.mxu0 0
        %1554 = vmatprep.subr.bf16.mxu0 0
        %1555 = vmatpush2.bf16.msra.mxu0 0
        %1556 = vmatprep.subr.bf16.mxu0 0
        %1557 = vmatpush2.bf16.msra.mxu0 0
        %1558 = vmatprep.mubr.bf16.mxu0 0
        %1559 = vmatmul.mubr.bf16.gmra.mxu0 %v1524
        %v1560 = vpop.f32.mrf.mxu0
        %v1561 = vadd.f32 %v1498, %v1560
        %v1562 = vpop.f32.mrf.mxu0
        %v1563 = vpop.f32.mrf.mxu0
        %v1564 = vpop.f32.mrf.mxu0
        %1565 = vdwg.mxu0
        %v1566 = vld [vmem:[#allocation5 + $0x34] ss:$0 sm:$0xff]
        %v1567 = vld [vmem:[#allocation5 + $0x35] ss:$0 sm:$0xff]
        %v1568 = vsel %vm597, %v1561, 0.0
        %1569 = vadd.xlane.f32.xlu0 %v1568
        %v1570 = vpop.xlane.xlu0 %1569
        %v1571 = vmul.f32 %v1561, %v1561
        %v1572 = vsel %vm597, %v1571, 0.0
        %1573 = vadd.xlane.f32.xlu0 %v1572
        %v1574 = vpop.xlane.xlu0 %1573
        %v1575 = vmul.f32 %v1570, 0.015625
        %v1576 = vmul.f32 %v1574, 0.015625
        %v1577 = vmul.f32 %v1575, %v1575
        %v1578 = vsub.f32 %v1576, %v1577
        %v1579 = vmax.f32 %v1578, 0.0
        %v1580 = vsub.f32 %v1561, %v1575
        %v1581 = vadd.f32 %v1579, 1e-05
        %v1582 = vrsqrt.pop %v1581
        %v1583 = vmul.f32 %v1580, %v1582
        %v1584 = vmul.f32 %v1583, %v1566
        %v1585 = vadd.f32 %v1584, %v1567
        %v1586 = vmax.f32 %v1585, 0.0
        %v1587 = vpack.c.bf16 %v1586, %v1586
        %v1588 = vld [vmem:[%s3 + $0x160] sm:$0xf]
        %v1589 = vld [vmem:[%s3 + $0x164] sm:$0xf]
        %v1590 = vld [vmem:[%s3 + $0x168] sm:$0xf]
        %v1591 = vld [vmem:[%s3 + $0x16c] sm:$0xf]
        %v1592 = vld [vmem:[%s3 + $0x170] sm:$0xf]
        %v1593 = vld [vmem:[%s3 + $0x174] sm:$0xf]
        %v1594 = vld [vmem:[%s3 + $0x178] sm:$0xf]
        %v1595 = vld [vmem:[%s3 + $0x17c] sm:$0xf]
        %v1596 = vld [vmem:[#allocation5 + $0x36] ss:$0 sm:$0xff]
        %v1605 = vunpack.c.l.b16 %v1588
        %v1606 = vunpack.c.l.b16 %v1589
        %v1607 = vunpack.c.l.b16 %v1590
        %v1608 = vunpack.c.l.b16 %v1591
        %v1609 = vunpack.c.l.b16 %v1592
        %v1610 = vunpack.c.l.b16 %v1593
        %v1611 = vunpack.c.l.b16 %v1594
        %v1612 = vunpack.c.l.b16 %v1595
        %v1613 = vpack.c.b16 %v1606, %v1605
        %v1614 = vpack.c.b16 %v1608, %v1607
        %v1615 = vpack.c.b16 %v1610, %v1609
        %v1616 = vpack.c.b16 %v1612, %v1611
        %v1622 = vsel %vm597, %v1587, 0
        %1624 = vmatprep.subr.bf16.mxu0 0
        %1625 = vmatpush1.bf16.msra.mxu0 0
        %1626 = vmatprep.subr.bf16.mxu0 0
        %1627 = vmatpush1.bf16.msra.mxu0 0
        %1628 = vmatprep.subr.bf16.mxu0 0
        %1629 = vmatpush1.bf16.msra.mxu0 0
        %1630 = vmatprep.subr.bf16.mxu0 0
        %1631 = vmatpush1.bf16.msra.mxu0 0
        %1632 = vmatprep.subr.bf16.mxu0 0
        %1633 = vmatpush1.bf16.msra.mxu0 %v1616
        %1634 = vmatprep.subr.bf16.mxu0 0
        %1635 = vmatpush1.bf16.msra.mxu0 %v1615
        %1636 = vmatprep.subr.bf16.mxu0 0
        %1637 = vmatpush1.bf16.msra.mxu0 %v1614
        %1638 = vmatprep.subr.bf16.mxu0 0
        %1639 = vmatpush1.bf16.msra.mxu0 %v1613
        %1640 = vmatprep.subr.bf16.mxu0 0
        %1641 = vmatpush2.bf16.msra.mxu0 0
        %1642 = vmatprep.subr.bf16.mxu0 0
        %1643 = vmatpush2.bf16.msra.mxu0 0
        %1644 = vmatprep.subr.bf16.mxu0 0
        %1645 = vmatpush2.bf16.msra.mxu0 0
        %1646 = vmatprep.subr.bf16.mxu0 0
        %1647 = vmatpush2.bf16.msra.mxu0 0
        %1648 = vmatprep.subr.bf16.mxu0 0
        %1649 = vmatpush2.bf16.msra.mxu0 0
        %1650 = vmatprep.subr.bf16.mxu0 0
        %1651 = vmatpush2.bf16.msra.mxu0 0
        %1652 = vmatprep.subr.bf16.mxu0 0
        %1653 = vmatpush2.bf16.msra.mxu0 0
        %1654 = vmatprep.subr.bf16.mxu0 0
        %1655 = vmatpush2.bf16.msra.mxu0 0
        %1656 = vmatprep.mubr.bf16.mxu0 0
        %1657 = vmatmul.mubr.bf16.gmra.mxu0 %v1622
        %v1658 = vpop.f32.mrf.mxu0
        %v1659 = vadd.f32 %v1596, %v1658
        %v1660 = vpop.f32.mrf.mxu0
        %v1661 = vpop.f32.mrf.mxu0
        %v1662 = vpop.f32.mrf.mxu0
        %1663 = vdwg.mxu0
        %v1664 = vadd.f32 %v1389, %v1659
        %s1665 = scalar_lea.vmem [#allocation5], 64
        %v1666 = vld [vmem:[%s1665] ss:$8 sm:$0x3]
        %v1668 = vlaneseq
        %v1669 = vshrl.u32 %v1668, 7
        %v1670 = vsub.s32 0, %v1669
        %v1671 = vrot.slane %v1666, %v1670
        %v1672 = vlaneseq
        %v1673 = vshrl.u32 %v1672, 7
        %v1674 = vsub.s32 1, %v1673
        %v1675 = vrot.slane %v1666, %v1674
        %v1678 = vadd.f32 %v517, %v1671
        %v1679 = vadd.f32 %v519, %v1675
        %v1680 = vmax.f32 %v1678, 0.0
        %v1681 = vmax.f32 %v1679, 0.0
        %s1682 = scalar_lea.vmem [#allocation5], 65
        %v1683 = vld [vmem:[%s1682] ss:$8 sm:$0x3]
        %v1685 = vlaneseq
        %v1686 = vshrl.u32 %v1685, 7
        %v1687 = vsub.s32 0, %v1686
        %v1688 = vrot.slane %v1683, %v1687
        %v1689 = vlaneseq
        %v1690 = vshrl.u32 %v1689, 7
        %v1691 = vsub.s32 1, %v1690
        %v1692 = vrot.slane %v1683, %v1691
        %v1695 = vadd.f32 %v558, %v1688
        %v1696 = vadd.f32 %v560, %v1692
        %v1697 = vmax.f32 %v1695, 0.0
        %v1698 = vmax.f32 %v1696, 0.0
        %v1699 = vpack.c.bf16 %v1680, %v1680
        %v1700 = vpack.c.bf16 %v1681, %v1681
        %v1701 = vld [vmem:[%s4] sm:$0xff]
        %v1702 = vld [vmem:[%s4 + $0x8] sm:$0xff]
        %v1703 = vld [vmem:[%s4 + $0x10] sm:$0xff]
        %v1704 = vld [vmem:[%s4 + $0x18] sm:$0xff]
        %v1705 = vld [vmem:[%s4 + $0x20] sm:$0xff]
        %v1706 = vld [vmem:[%s4 + $0x28] sm:$0xff]
        %v1707 = vld [vmem:[%s4 + $0x30] sm:$0xff]
        %v1708 = vld [vmem:[%s4 + $0x38] sm:$0xff]
        %v1709 = vld [vmem:[%s4 + $0x40] sm:$0xff]
        %v1710 = vld [vmem:[%s4 + $0x48] sm:$0xff]
        %v1711 = vld [vmem:[%s4 + $0x50] sm:$0xff]
        %v1712 = vld [vmem:[%s4 + $0x58] sm:$0xff]
        %v1713 = vld [vmem:[%s4 + $0x60] sm:$0xff]
        %v1714 = vld [vmem:[%s4 + $0x68] sm:$0xff]
        %v1715 = vld [vmem:[%s4 + $0x70] sm:$0xff]
        %v1716 = vld [vmem:[%s4 + $0x78] sm:$0xff]
        %v1717 = vld [vmem:[%s4 + $0x80] sm:$0xff]
        %v1718 = vld [vmem:[%s4 + $0x88] sm:$0xff]
        %v1719 = vld [vmem:[%s4 + $0x90] sm:$0xff]
        %v1720 = vld [vmem:[%s4 + $0x98] sm:$0xff]
        %v1721 = vld [vmem:[%s4 + $0xa0] sm:$0xff]
        %v1722 = vld [vmem:[%s4 + $0xa8] sm:$0xff]
        %v1723 = vld [vmem:[%s4 + $0xb0] sm:$0xff]
        %v1724 = vld [vmem:[%s4 + $0xb8] sm:$0xff]
        %v1725 = vld [vmem:[%s4 + $0xc0] sm:$0xff]
        %v1726 = vld [vmem:[%s4 + $0xc8] sm:$0xff]
        %v1727 = vld [vmem:[%s4 + $0xd0] sm:$0xff]
        %v1728 = vld [vmem:[%s4 + $0xd8] sm:$0xff]
        %v1729 = vld [vmem:[%s4 + $0xe0] sm:$0xff]
        %v1730 = vld [vmem:[%s4 + $0xe8] sm:$0xff]
        %v1731 = vld [vmem:[%s4 + $0xf0] sm:$0xff]
        %v1732 = vld [vmem:[%s4 + $0xf8] sm:$0xff]
        %s1733 = scalar_lea.vmem [#allocation5], 66
        %v1734 = vld [vmem:[%s1733] ss:$8 sm:$0x3]
        %v1736 = vlaneseq
        %v1737 = vshrl.u32 %v1736, 7
        %v1738 = vsub.s32 0, %v1737
        %v1739 = vrot.slane %v1734, %v1738
        %v1740 = vlaneseq
        %v1741 = vshrl.u32 %v1740, 7
        %v1742 = vsub.s32 1, %v1741
        %v1743 = vrot.slane %v1734, %v1742
        %v1778 = vunpack.c.l.b16 %v1701
        %v1779 = vunpack.c.h.b16 %v1701
        %v1780 = vunpack.c.l.b16 %v1702
        %v1781 = vunpack.c.h.b16 %v1702
        %v1782 = vunpack.c.l.b16 %v1703
        %v1783 = vunpack.c.h.b16 %v1703
        %v1784 = vunpack.c.l.b16 %v1704
        %v1785 = vunpack.c.h.b16 %v1704
        %v1786 = vunpack.c.l.b16 %v1705
        %v1787 = vunpack.c.h.b16 %v1705
        %v1788 = vunpack.c.l.b16 %v1706
        %v1789 = vunpack.c.h.b16 %v1706
        %v1790 = vunpack.c.l.b16 %v1707
        %v1791 = vunpack.c.h.b16 %v1707
        %v1792 = vunpack.c.l.b16 %v1708
        %v1793 = vunpack.c.h.b16 %v1708
        %v1794 = vunpack.c.l.b16 %v1709
        %v1795 = vunpack.c.h.b16 %v1709
        %v1796 = vunpack.c.l.b16 %v1710
        %v1797 = vunpack.c.h.b16 %v1710
        %v1798 = vunpack.c.l.b16 %v1711
        %v1799 = vunpack.c.h.b16 %v1711
        %v1800 = vunpack.c.l.b16 %v1712
        %v1801 = vunpack.c.h.b16 %v1712
        %v1802 = vunpack.c.l.b16 %v1713
        %v1803 = vunpack.c.h.b16 %v1713
        %v1804 = vunpack.c.l.b16 %v1714
        %v1805 = vunpack.c.h.b16 %v1714
        %v1806 = vunpack.c.l.b16 %v1715
        %v1807 = vunpack.c.h.b16 %v1715
        %v1808 = vunpack.c.l.b16 %v1716
        %v1809 = vunpack.c.h.b16 %v1716
        %v1810 = vunpack.c.l.b16 %v1717
        %v1811 = vunpack.c.h.b16 %v1717
        %v1812 = vunpack.c.l.b16 %v1718
        %v1813 = vunpack.c.h.b16 %v1718
        %v1814 = vunpack.c.l.b16 %v1719
        %v1815 = vunpack.c.h.b16 %v1719
        %v1816 = vunpack.c.l.b16 %v1720
        %v1817 = vunpack.c.h.b16 %v1720
        %v1818 = vunpack.c.l.b16 %v1721
        %v1819 = vunpack.c.h.b16 %v1721
        %v1820 = vunpack.c.l.b16 %v1722
        %v1821 = vunpack.c.h.b16 %v1722
        %v1822 = vunpack.c.l.b16 %v1723
        %v1823 = vunpack.c.h.b16 %v1723
        %v1824 = vunpack.c.l.b16 %v1724
        %v1825 = vunpack.c.h.b16 %v1724
        %v1826 = vunpack.c.l.b16 %v1725
        %v1827 = vunpack.c.h.b16 %v1725
        %v1828 = vunpack.c.l.b16 %v1726
        %v1829 = vunpack.c.h.b16 %v1726
        %v1830 = vunpack.c.l.b16 %v1727
        %v1831 = vunpack.c.h.b16 %v1727
        %v1832 = vunpack.c.l.b16 %v1728
        %v1833 = vunpack.c.h.b16 %v1728
        %v1834 = vunpack.c.l.b16 %v1729
        %v1835 = vunpack.c.h.b16 %v1729
        %v1836 = vunpack.c.l.b16 %v1730
        %v1837 = vunpack.c.h.b16 %v1730
        %v1838 = vunpack.c.l.b16 %v1731
        %v1839 = vunpack.c.h.b16 %v1731
        %v1840 = vunpack.c.l.b16 %v1732
        %v1841 = vunpack.c.h.b16 %v1732
        %v1842 = vpack.c.b16 %v1780, %v1778
        %v1843 = vpack.c.b16 %v1781, %v1779
        %v1844 = vpack.c.b16 %v1784, %v1782
        %v1845 = vpack.c.b16 %v1785, %v1783
        %v1846 = vpack.c.b16 %v1788, %v1786
        %v1847 = vpack.c.b16 %v1789, %v1787
        %v1848 = vpack.c.b16 %v1792, %v1790
        %v1849 = vpack.c.b16 %v1793, %v1791
        %v1850 = vpack.c.b16 %v1796, %v1794
        %v1851 = vpack.c.b16 %v1797, %v1795
        %v1852 = vpack.c.b16 %v1800, %v1798
        %v1853 = vpack.c.b16 %v1801, %v1799
        %v1854 = vpack.c.b16 %v1804, %v1802
        %v1855 = vpack.c.b16 %v1805, %v1803
        %v1856 = vpack.c.b16 %v1808, %v1806
        %v1857 = vpack.c.b16 %v1809, %v1807
        %v1858 = vpack.c.b16 %v1812, %v1810
        %v1859 = vpack.c.b16 %v1813, %v1811
        %v1860 = vpack.c.b16 %v1816, %v1814
        %v1861 = vpack.c.b16 %v1817, %v1815
        %v1862 = vpack.c.b16 %v1820, %v1818
        %v1863 = vpack.c.b16 %v1821, %v1819
        %v1864 = vpack.c.b16 %v1824, %v1822
        %v1865 = vpack.c.b16 %v1825, %v1823
        %v1866 = vpack.c.b16 %v1828, %v1826
        %v1867 = vpack.c.b16 %v1829, %v1827
        %v1868 = vpack.c.b16 %v1832, %v1830
        %v1869 = vpack.c.b16 %v1833, %v1831
        %v1870 = vpack.c.b16 %v1836, %v1834
        %v1871 = vpack.c.b16 %v1837, %v1835
        %v1872 = vpack.c.b16 %v1840, %v1838
        %v1873 = vpack.c.b16 %v1841, %v1839
        %1906 = vmatprep.subr.bf16.mxu0 %v1857
        %1907 = vmatpush1.bf16.msra.mxu0 %v1856
        %1908 = vmatprep.subr.bf16.mxu0 %v1855
        %1909 = vmatpush1.bf16.msra.mxu0 %v1854
        %1910 = vmatprep.subr.bf16.mxu0 %v1853
        %1911 = vmatpush1.bf16.msra.mxu0 %v1852
        %1912 = vmatprep.subr.bf16.mxu0 %v1851
        %1913 = vmatpush1.bf16.msra.mxu0 %v1850
        %1914 = vmatprep.subr.bf16.mxu0 %v1849
        %1915 = vmatpush1.bf16.msra.mxu0 %v1848
        %1916 = vmatprep.subr.bf16.mxu0 %v1847
        %1917 = vmatpush1.bf16.msra.mxu0 %v1846
        %1918 = vmatprep.subr.bf16.mxu0 %v1845
        %1919 = vmatpush1.bf16.msra.mxu0 %v1844
        %1920 = vmatprep.subr.bf16.mxu0 %v1843
        %1921 = vmatpush1.bf16.msra.mxu0 %v1842
        %1922 = vmatprep.subr.bf16.mxu0 %v1873
        %1923 = vmatpush2.bf16.msra.mxu0 %v1872
        %1924 = vmatprep.subr.bf16.mxu0 %v1871
        %1925 = vmatpush2.bf16.msra.mxu0 %v1870
        %1926 = vmatprep.subr.bf16.mxu0 %v1869
        %1927 = vmatpush2.bf16.msra.mxu0 %v1868
        %1928 = vmatprep.subr.bf16.mxu0 %v1867
        %1929 = vmatpush2.bf16.msra.mxu0 %v1866
        %1930 = vmatprep.subr.bf16.mxu0 %v1865
        %1931 = vmatpush2.bf16.msra.mxu0 %v1864
        %1932 = vmatprep.subr.bf16.mxu0 %v1863
        %1933 = vmatpush2.bf16.msra.mxu0 %v1862
        %1934 = vmatprep.subr.bf16.mxu0 %v1861
        %1935 = vmatpush2.bf16.msra.mxu0 %v1860
        %1936 = vmatprep.subr.bf16.mxu0 %v1859
        %1937 = vmatpush2.bf16.msra.mxu0 %v1858
        %1938 = vmatprep.mubr.bf16.mxu0 %v1700
        %1939 = vmatmul.mubr.bf16.gmra.mxu0 %v1699
        %v1940 = vpop.f32.mrf.mxu0
        %v1941 = vadd.f32 %v1739, %v1940
        %v1942 = vpop.f32.mrf.mxu0
        %v1943 = vadd.f32 %v1743, %v1942
        %v1944 = vpop.f32.mrf.mxu0
        %v1945 = vpop.f32.mrf.mxu0
        %1946 = vdwg.mxu0
        %v1947 = vmax.f32 %v1941, 0.0
        %v1948 = vmax.f32 %v1943, 0.0
        %v1949 = vpack.c.bf16 %v1697, %v1697
        %v1950 = vpack.c.bf16 %v1698, %v1698
        %v1951 = vld [vmem:[%s4 + $0x100] sm:$0xff]
        %v1952 = vld [vmem:[%s4 + $0x108] sm:$0xff]
        %v1953 = vld [vmem:[%s4 + $0x110] sm:$0xff]
        %v1954 = vld [vmem:[%s4 + $0x118] sm:$0xff]
        %v1955 = vld [vmem:[%s4 + $0x120] sm:$0xff]
        %v1956 = vld [vmem:[%s4 + $0x128] sm:$0xff]
        %v1957 = vld [vmem:[%s4 + $0x130] sm:$0xff]
        %v1958 = vld [vmem:[%s4 + $0x138] sm:$0xff]
        %v1959 = vld [vmem:[%s4 + $0x140] sm:$0xff]
        %v1960 = vld [vmem:[%s4 + $0x148] sm:$0xff]
        %v1961 = vld [vmem:[%s4 + $0x150] sm:$0xff]
        %v1962 = vld [vmem:[%s4 + $0x158] sm:$0xff]
        %v1963 = vld [vmem:[%s4 + $0x160] sm:$0xff]
        %v1964 = vld [vmem:[%s4 + $0x168] sm:$0xff]
        %v1965 = vld [vmem:[%s4 + $0x170] sm:$0xff]
        %v1966 = vld [vmem:[%s4 + $0x178] sm:$0xff]
        %v1967 = vld [vmem:[%s4 + $0x180] sm:$0xff]
        %v1968 = vld [vmem:[%s4 + $0x188] sm:$0xff]
        %v1969 = vld [vmem:[%s4 + $0x190] sm:$0xff]
        %v1970 = vld [vmem:[%s4 + $0x198] sm:$0xff]
        %v1971 = vld [vmem:[%s4 + $0x1a0] sm:$0xff]
        %v1972 = vld [vmem:[%s4 + $0x1a8] sm:$0xff]
        %v1973 = vld [vmem:[%s4 + $0x1b0] sm:$0xff]
        %v1974 = vld [vmem:[%s4 + $0x1b8] sm:$0xff]
        %v1975 = vld [vmem:[%s4 + $0x1c0] sm:$0xff]
        %v1976 = vld [vmem:[%s4 + $0x1c8] sm:$0xff]
        %v1977 = vld [vmem:[%s4 + $0x1d0] sm:$0xff]
        %v1978 = vld [vmem:[%s4 + $0x1d8] sm:$0xff]
        %v1979 = vld [vmem:[%s4 + $0x1e0] sm:$0xff]
        %v1980 = vld [vmem:[%s4 + $0x1e8] sm:$0xff]
        %v1981 = vld [vmem:[%s4 + $0x1f0] sm:$0xff]
        %v1982 = vld [vmem:[%s4 + $0x1f8] sm:$0xff]
        %s1983 = scalar_lea.vmem [#allocation5], 67
        %v1984 = vld [vmem:[%s1983] ss:$8 sm:$0x3]
        %v1986 = vlaneseq
        %v1987 = vshrl.u32 %v1986, 7
        %v1988 = vsub.s32 0, %v1987
        %v1989 = vrot.slane %v1984, %v1988
        %v1990 = vlaneseq
        %v1991 = vshrl.u32 %v1990, 7
        %v1992 = vsub.s32 1, %v1991
        %v1993 = vrot.slane %v1984, %v1992
        %v2028 = vunpack.c.l.b16 %v1951
        %v2029 = vunpack.c.h.b16 %v1951
        %v2030 = vunpack.c.l.b16 %v1952
        %v2031 = vunpack.c.h.b16 %v1952
        %v2032 = vunpack.c.l.b16 %v1953
        %v2033 = vunpack.c.h.b16 %v1953
        %v2034 = vunpack.c.l.b16 %v1954
        %v2035 = vunpack.c.h.b16 %v1954
        %v2036 = vunpack.c.l.b16 %v1955
        %v2037 = vunpack.c.h.b16 %v1955
        %v2038 = vunpack.c.l.b16 %v1956
        %v2039 = vunpack.c.h.b16 %v1956
        %v2040 = vunpack.c.l.b16 %v1957
        %v2041 = vunpack.c.h.b16 %v1957
        %v2042 = vunpack.c.l.b16 %v1958
        %v2043 = vunpack.c.h.b16 %v1958
        %v2044 = vunpack.c.l.b16 %v1959
        %v2045 = vunpack.c.h.b16 %v1959
        %v2046 = vunpack.c.l.b16 %v1960
        %v2047 = vunpack.c.h.b16 %v1960
        %v2048 = vunpack.c.l.b16 %v1961
        %v2049 = vunpack.c.h.b16 %v1961
        %v2050 = vunpack.c.l.b16 %v1962
        %v2051 = vunpack.c.h.b16 %v1962
        %v2052 = vunpack.c.l.b16 %v1963
        %v2053 = vunpack.c.h.b16 %v1963
        %v2054 = vunpack.c.l.b16 %v1964
        %v2055 = vunpack.c.h.b16 %v1964
        %v2056 = vunpack.c.l.b16 %v1965
        %v2057 = vunpack.c.h.b16 %v1965
        %v2058 = vunpack.c.l.b16 %v1966
        %v2059 = vunpack.c.h.b16 %v1966
        %v2060 = vunpack.c.l.b16 %v1967
        %v2061 = vunpack.c.h.b16 %v1967
        %v2062 = vunpack.c.l.b16 %v1968
        %v2063 = vunpack.c.h.b16 %v1968
        %v2064 = vunpack.c.l.b16 %v1969
        %v2065 = vunpack.c.h.b16 %v1969
        %v2066 = vunpack.c.l.b16 %v1970
        %v2067 = vunpack.c.h.b16 %v1970
        %v2068 = vunpack.c.l.b16 %v1971
        %v2069 = vunpack.c.h.b16 %v1971
        %v2070 = vunpack.c.l.b16 %v1972
        %v2071 = vunpack.c.h.b16 %v1972
        %v2072 = vunpack.c.l.b16 %v1973
        %v2073 = vunpack.c.h.b16 %v1973
        %v2074 = vunpack.c.l.b16 %v1974
        %v2075 = vunpack.c.h.b16 %v1974
        %v2076 = vunpack.c.l.b16 %v1975
        %v2077 = vunpack.c.h.b16 %v1975
        %v2078 = vunpack.c.l.b16 %v1976
        %v2079 = vunpack.c.h.b16 %v1976
        %v2080 = vunpack.c.l.b16 %v1977
        %v2081 = vunpack.c.h.b16 %v1977
        %v2082 = vunpack.c.l.b16 %v1978
        %v2083 = vunpack.c.h.b16 %v1978
        %v2084 = vunpack.c.l.b16 %v1979
        %v2085 = vunpack.c.h.b16 %v1979
        %v2086 = vunpack.c.l.b16 %v1980
        %v2087 = vunpack.c.h.b16 %v1980
        %v2088 = vunpack.c.l.b16 %v1981
        %v2089 = vunpack.c.h.b16 %v1981
        %v2090 = vunpack.c.l.b16 %v1982
        %v2091 = vunpack.c.h.b16 %v1982
        %v2092 = vpack.c.b16 %v2030, %v2028
        %v2093 = vpack.c.b16 %v2031, %v2029
        %v2094 = vpack.c.b16 %v2034, %v2032
        %v2095 = vpack.c.b16 %v2035, %v2033
        %v2096 = vpack.c.b16 %v2038, %v2036
        %v2097 = vpack.c.b16 %v2039, %v2037
        %v2098 = vpack.c.b16 %v2042, %v2040
        %v2099 = vpack.c.b16 %v2043, %v2041
        %v2100 = vpack.c.b16 %v2046, %v2044
        %v2101 = vpack.c.b16 %v2047, %v2045
        %v2102 = vpack.c.b16 %v2050, %v2048
        %v2103 = vpack.c.b16 %v2051, %v2049
        %v2104 = vpack.c.b16 %v2054, %v2052
        %v2105 = vpack.c.b16 %v2055, %v2053
        %v2106 = vpack.c.b16 %v2058, %v2056
        %v2107 = vpack.c.b16 %v2059, %v2057
        %v2108 = vpack.c.b16 %v2062, %v2060
        %v2109 = vpack.c.b16 %v2063, %v2061
        %v2110 = vpack.c.b16 %v2066, %v2064
        %v2111 = vpack.c.b16 %v2067, %v2065
        %v2112 = vpack.c.b16 %v2070, %v2068
        %v2113 = vpack.c.b16 %v2071, %v2069
        %v2114 = vpack.c.b16 %v2074, %v2072
        %v2115 = vpack.c.b16 %v2075, %v2073
        %v2116 = vpack.c.b16 %v2078, %v2076
        %v2117 = vpack.c.b16 %v2079, %v2077
        %v2118 = vpack.c.b16 %v2082, %v2080
        %v2119 = vpack.c.b16 %v2083, %v2081
        %v2120 = vpack.c.b16 %v2086, %v2084
        %v2121 = vpack.c.b16 %v2087, %v2085
        %v2122 = vpack.c.b16 %v2090, %v2088
        %v2123 = vpack.c.b16 %v2091, %v2089
        %2156 = vmatprep.subr.bf16.mxu0 %v2107
        %2157 = vmatpush1.bf16.msra.mxu0 %v2106
        %2158 = vmatprep.subr.bf16.mxu0 %v2105
        %2159 = vmatpush1.bf16.msra.mxu0 %v2104
        %2160 = vmatprep.subr.bf16.mxu0 %v2103
        %2161 = vmatpush1.bf16.msra.mxu0 %v2102
        %2162 = vmatprep.subr.bf16.mxu0 %v2101
        %2163 = vmatpush1.bf16.msra.mxu0 %v2100
        %2164 = vmatprep.subr.bf16.mxu0 %v2099
        %2165 = vmatpush1.bf16.msra.mxu0 %v2098
        %2166 = vmatprep.subr.bf16.mxu0 %v2097
        %2167 = vmatpush1.bf16.msra.mxu0 %v2096
        %2168 = vmatprep.subr.bf16.mxu0 %v2095
        %2169 = vmatpush1.bf16.msra.mxu0 %v2094
        %2170 = vmatprep.subr.bf16.mxu0 %v2093
        %2171 = vmatpush1.bf16.msra.mxu0 %v2092
        %2172 = vmatprep.subr.bf16.mxu0 %v2123
        %2173 = vmatpush2.bf16.msra.mxu0 %v2122
        %2174 = vmatprep.subr.bf16.mxu0 %v2121
        %2175 = vmatpush2.bf16.msra.mxu0 %v2120
        %2176 = vmatprep.subr.bf16.mxu0 %v2119
        %2177 = vmatpush2.bf16.msra.mxu0 %v2118
        %2178 = vmatprep.subr.bf16.mxu0 %v2117
        %2179 = vmatpush2.bf16.msra.mxu0 %v2116
        %2180 = vmatprep.subr.bf16.mxu0 %v2115
        %2181 = vmatpush2.bf16.msra.mxu0 %v2114
        %2182 = vmatprep.subr.bf16.mxu0 %v2113
        %2183 = vmatpush2.bf16.msra.mxu0 %v2112
        %2184 = vmatprep.subr.bf16.mxu0 %v2111
        %2185 = vmatpush2.bf16.msra.mxu0 %v2110
        %2186 = vmatprep.subr.bf16.mxu0 %v2109
        %2187 = vmatpush2.bf16.msra.mxu0 %v2108
        %2188 = vmatprep.mubr.bf16.mxu0 %v1950
        %2189 = vmatmul.mubr.bf16.gmra.mxu0 %v1949
        %v2190 = vpop.f32.mrf.mxu0
        %v2191 = vadd.f32 %v1989, %v2190
        %v2192 = vpop.f32.mrf.mxu0
        %v2193 = vadd.f32 %v1993, %v2192
        %v2194 = vpop.f32.mrf.mxu0
        %v2195 = vpop.f32.mrf.mxu0
        %2196 = vdwg.mxu0
        %v2197 = vmax.f32 %v2191, 0.0
        %v2198 = vmax.f32 %v2193, 0.0
        %s2199 = scalar_lea.vmem [#allocation5], 68
        %v2200 = vld [vmem:[%s2199] ss:$8 sm:$0x3]
        %v2202 = vlaneseq
        %v2203 = vshrl.u32 %v2202, 7
        %v2204 = vsub.s32 0, %v2203
        %v2205 = vrot.slane %v2200, %v2204
        %v2206 = vlaneseq
        %v2207 = vshrl.u32 %v2206, 7
        %v2208 = vsub.s32 1, %v2207
        %v2209 = vrot.slane %v2200, %v2208
        %v2212 = vmul.f32 %v1947, %v2205
        %v2213 = vmul.f32 %v1948, %v2209
        %v2214 = vadd.f32 %v2212, %v2213
        %2215 = vadd.xlane.f32.xlu0 %v2214
        %v2216 = vpop.xlane.xlu0 %2215
        %s2217 = scalar_lea.vmem [#allocation5], 69
        %v2218 = vld [vmem:[%s2217] ss:$8 sm:$0x3]
        %v2220 = vlaneseq
        %v2221 = vshrl.u32 %v2220, 7
        %v2222 = vsub.s32 0, %v2221
        %v2223 = vrot.slane %v2218, %v2222
        %v2224 = vlaneseq
        %v2225 = vshrl.u32 %v2224, 7
        %v2226 = vsub.s32 1, %v2225
        %v2227 = vrot.slane %v2218, %v2226
        %v2230 = vmul.f32 %v2197, %v2223
        %v2231 = vmul.f32 %v2198, %v2227
        %v2232 = vadd.f32 %v2230, %v2231
        %2233 = vadd.xlane.f32.xlu0 %v2232
        %v2234 = vpop.xlane.xlu0 %2233
        %v2235 = vsub.f32 %v2216, %v2234
        %v2236 = vld [vmem:[#allocation5 + $0x46] ss:$0 sm:$0xff]
        %v2237 = vadd.f32 %v2235, %v2236
        %v2238 = vsub.f32 0.0, %v2237
        %v2239 = vtanh.pop %v1664
        %v2240 = vsub.f32 0.6931472, %v1664
        %v2241 = vmul.f32 %v1664, -2.0
        %v2242 = vmax.f32 %v2241, 0.0
        %v2243 = vand.u32 2147483647, %v2241
        %v2244 = vsub.f32 0.0, %v2243
        %v2245 = vmul.f32 %v2244, 1.442695
        %v2246 = vpow.pop %v2245
        %v2247 = vadd.f32 %v2246, 1.0
        %v2248 = vlog2.pop %v2247
        %v2249 = vmul.f32 %v2248, 0.6931472
        %v2250 = vadd.f32 %v2242, %v2249
        %v2251 = vsub.f32 %v2240, %v2250
        %v2252 = vmul.f32 %v2251, 2.0
        %vm2253 = vcmask 48128
        %v2254 = vsel %vm2253, %v2252, 0.0
        %2255 = vadd.xlane.f32.xlu0 %v2254
        %v2256 = vpop.xlane.xlu0 %2255
        %v2257 = vsub.f32 %v2238, %v2256
        %2259 = vrot.lane.b32.xlu0 %v2257, 64
        %v2260 = vpop.permute.xlu0 %2259
        %v2262 = vsel %vm597, %v2239, %v2260
        %vm2263 = vcmask 531456
        %v2264 = vsel %vm2263, %v2262, 0.0
        %2265 = vst [vmem:[%s285] sm:$0xff] %v2264
        %s2266 = sand.u32 %s166, 1
        %s2267 = scalar_lea.sflag [#allocation4], %s2266
        %s2268 = sand.u32 %s166, 1
        %s2269 = smul.addr %s2268, 8
        %s2270 = scalar_lea.vmem [#allocation7], %s2269
        // Predicated region
        $region53: #{tpu_custom_call.1} parent=43 // pred_check
          %p2271 = pneg %p176
        $region54: #{tpu_custom_call.1} parent=43 // pred_check_branch
          %2273 = sbr.rel (%p2271) target = $region56
        $region55: #{tpu_custom_call.1} parent=43 // pred_region
          %s2275 = ssub.s32 128, 128
          %2276 = vsyncadd %s2267, %s2275
          %s2277 = smul.addr %s22, 128
          %s2278 = scalar_lea.hbm %s6, %s2277
          %s2280 = sshll.u32 %s2270, 4
          %s2281 = int_to_ptr.vmem [resolvable:$true] %s2280
          %2283 = dma.vmem_to_hbm [thread:$0]  %s2281, 128, %s2278, %s2267
        $region56: #{tpu_custom_call.1} parent=43 // pred_fallthru
          _
      $region44: #{tpu_custom_call.1} parent=5 // pred_fallthru
        _
      %p2284 = scmp.le.s32.totalorder 2, %s17
      // Predicated region
      $region57: #{tpu_custom_call.1} parent=5 // pred_check
        %p2285 = pneg %p2284
      $region58: #{tpu_custom_call.1} parent=5 // pred_check_branch
        %2287 = sbr.rel (%p2285) target = $region60
      $region59: #{tpu_custom_call.1} parent=5 // pred_region
        %s2288 = ssub.s32 %s17, 2
        // Predicated region
        $region61: #{tpu_custom_call.1} parent=59 // pred_check
          %p2289 = pneg %p182
        $region62: #{tpu_custom_call.1} parent=59 // pred_check_branch
          %2291 = sbr.rel (%p2289) target = $region64
        $region63: #{tpu_custom_call.1} parent=59 // pred_region
          %s2292 = sand.u32 %s167, 1
          %s2293 = scalar_lea.sflag [#allocation4], %s2292
          %s2294 = sand.u32 %s167, 1
          %s2295 = smul.addr %s2294, 8
          %s2296 = scalar_lea.vmem [#allocation7], %s2295
          %2297 = dma.done %s2293, 128
        $region64: #{tpu_custom_call.1} parent=59 // pred_fallthru
          _
      $region60: #{tpu_custom_call.1} parent=5 // pred_fallthru
        _
    $region6: #{tpu_custom_call.1} parent=1 // loop_footer
      %s21 = sadd.s32 1, %s17
    $region7: #{tpu_custom_call.1} parent=1 // loop_footer_branch
      %16 = sbr.rel target = $region3
    $region8: #{tpu_custom_call.1} parent=1 // loop_exit
      _
    %2298 = vsyncpa [#allocation3], 1
    %s2299 = scalar_lea.sflag [#allocation3], 1
    %2300 = vsyncpa %s2299, 1
    %2301 = vsyncpa [#allocation6], 1
    %2302 = vsyncpa [#allocation4], 1
    %s2303 = scalar_lea.sflag [#allocation4], 1
    %2304 = vsyncpa %s2303, 1

</llo_original>
